<compile_context>
chip_gen: v7x
topology: tpu7x:2x2x1
jax: 0.10.0
libtpu: 0.0.40
codegen_flags: <defaults>
</compile_context>

<pallas_src>
import jax
import jax.numpy as jnp
from jax.experimental import pallas as pl
from jax.experimental.pallas import tpu as pltpu

HIDDEN = 1024     # BERT-large pooled-output width (fc1 input)
FC1_DIM = 128
VOCAB = 64
POOL_CHUNK = 256  # pooler output-column chunk width for the fused pooler->fc1


def _rup(x, m):
    return ((x + m - 1) // m) * m


# ----------------------------- Pallas kernel ------------------------------ #
def gator_head_kernel(pooled_ref, pw_ref, pb_ref, w1_ref, b1_ref, w2_ref,
                      b2_ref, out_ref):
    pooled = pooled_ref[...]                                # (tb, 1024) bf16
    tb = pooled.shape[0]

    # Fused BERT pooler (dense 1024x1024 + tanh) -> fc1 (1024 -> 128),
    # chunked over the pooler's output columns.  tanh is elementwise per
    # pooler column, so chunking is mathematically exact; fc1 accumulates
    # partial products in an f32 register/scratch tile.
    h = jnp.zeros((tb, FC1_DIM), jnp.float32)
    for c in range(HIDDEN // POOL_CHUNK):
        lo = c * POOL_CHUNK
        hi = lo + POOL_CHUNK
        xc = jnp.dot(pooled, pw_ref[:, lo:hi],
                     preferred_element_type=jnp.float32)    # (tb, 256) f32
        xc = jnp.tanh(xc + pb_ref[:, lo:hi])                # pooler bias+tanh
        h = h + jnp.dot(xc.astype(jnp.bfloat16), w1_ref[lo:hi, :],
                        preferred_element_type=jnp.float32)  # fc1 partial

    # fc1 bias + ReLU (f32 epilogue).  Dropout(0.1): identity in eval mode.
    h = jnp.maximum(h + b1_ref[...], 0.0)

    # fc2 (128 -> 1): lane-dense multiply + lane reduce; keep OFF the MXU.
    y = jnp.sum(h * w2_ref[...], axis=-1, keepdims=True) + b2_ref[0, 0]

    # Exact sigmoid: y is only (tb, 1), so the full-precision path is free.
    out_ref[...] = 1.0 / (1.0 + jnp.exp(-y))


def gator_head(pooled, pool_w, pool_b, w1, b1, w2, b2, *, tb=1024):
    """pooled: (B, 1024). Returns (B, 1) f32 sigmoid outputs."""
    B, H = pooled.shape
    assert H == HIDDEN

    # Batch tile: multiple of 16 (bf16 packs 16 rows per sublane tile).
    b16 = _rup(B, 16)
    tb = min(_rup(tb, 16), b16)
    # v7x megacore: keep >=2 grid steps when the batch is big enough to split.
    if b16 >= 512 and tb >= b16:
        tb = _rup((b16 + 1) // 2, 16)
    Bp = _rup(b16, tb)
    if Bp != B:
        pooled = jnp.pad(pooled, ((0, Bp - B), (0, 0)))

    # bf16 operands for HBM traffic / native MXU rate; f32 accumulation inside.
    # Weights are already stored bf16 at init time -> these casts are no-ops.
    pooled_bf = pooled.astype(jnp.bfloat16)
    pw_bf = pool_w if pool_w.dtype == jnp.bfloat16 else pool_w.astype(jnp.bfloat16)
    w1_bf = w1 if w1.dtype == jnp.bfloat16 else w1.astype(jnp.bfloat16)
    pb_row = pool_b.reshape(1, H).astype(jnp.float32)
    b1_row = b1.reshape(1, FC1_DIM).astype(jnp.float32)
    w2_row = w2.reshape(1, FC1_DIM).astype(jnp.float32)
    b2_s = b2.reshape(1, 1).astype(jnp.float32)

    # Grid-constant operands: single-buffer (frees ~2.3 MiB VMEM vs default 2).
    resident = dict(pipeline_mode=pl.Buffered(1))

    cost = pl.CostEstimate(
        flops=2 * Bp * H * H + 2 * Bp * H * FC1_DIM + 2 * Bp * FC1_DIM,
        transcendentals=Bp * (H + 1),                 # tanh per column + sigmoid
        bytes_accessed=(Bp * H * 2 + H * H * 2 + H * 4
                        + H * FC1_DIM * 2 + 2 * FC1_DIM * 4 + 4 + Bp * 4),
    )

    out = pl.pallas_call(
        gator_head_kernel,
        out_shape=jax.ShapeDtypeStruct((Bp, 1), jnp.float32),
        grid_spec=pltpu.PrefetchScalarGridSpec(
            num_scalar_prefetch=0,
            grid=(Bp // tb,),
            in_specs=[
                pl.BlockSpec((tb, H), lambda i: (i, 0)),                   # pooled tile
                pl.BlockSpec((H, H), lambda i: (0, 0), **resident),        # pool_w
                pl.BlockSpec((1, H), lambda i: (0, 0), **resident),        # pool_b
                pl.BlockSpec((H, FC1_DIM), lambda i: (0, 0), **resident),  # w1
                pl.BlockSpec((1, FC1_DIM), lambda i: (0, 0), **resident),  # b1
                pl.BlockSpec((1, FC1_DIM), lambda i: (0, 0), **resident),  # w2 row
                pl.BlockSpec(memory_space=pltpu.MemorySpace.SMEM),         # b2 scalar
            ],
            out_specs=pl.BlockSpec((tb, 1), lambda i: (i, 0)),
        ),
        compiler_params=pltpu.CompilerParams(
            dimension_semantics=("parallel",),
            vmem_limit_bytes=64 << 20),
        cost_estimate=cost,
    )(pooled_bf, pw_bf, pb_row, w1_bf, b1_row, w2_row, b2_s)

    return out[:B, :]


# ------------------------- plain-JAX BERT stub (glue) ---------------------- #
def bert_encoder_stub(params, sent_id, mask):
    """Deterministic stand-in for the external BERT encoder: masked mean-pooled
    embeddings, shape (B, 1024).  The pooler dense+tanh is fused into the
    Pallas kernel."""
    emb = params["emb"][sent_id]                       # (B, S, H)
    m = mask.astype(jnp.float32)[..., None]            # (B, S, 1)
    return (emb * m).sum(axis=1) / jnp.maximum(m.sum(axis=1), 1.0)  # (B, H)


def init_params(key):
    k = jax.random.split(key, 6)
    return {
        "emb": 0.02 * jax.random.normal(k[0], (VOCAB, HIDDEN), jnp.float32),
        # Store the big matmul weights in bf16 ONCE so the wrapper never pays a
        # per-call cast fusion (HBM read/write) before the pallas_call.
        "pool_w": ((1.0 / jnp.sqrt(HIDDEN)) *
                   jax.random.normal(k[1], (HIDDEN, HIDDEN), jnp.float32)
                   ).astype(jnp.bfloat16),
        "pool_b": jnp.zeros((HIDDEN,), jnp.float32),
        # fc1: Linear(1024, 128) -> stored transposed (in, out)
        "w1": ((1.0 / jnp.sqrt(HIDDEN)) *
               jax.random.normal(k[2], (HIDDEN, FC1_DIM), jnp.float32)
               ).astype(jnp.bfloat16),
        "b1": 0.01 * jax.random.normal(k[3], (1, FC1_DIM), jnp.float32),
        # fc2: Linear(128, 1)
        "w2": (1.0 / jnp.sqrt(FC1_DIM)) *
              jax.random.normal(k[4], (FC1_DIM, 1), jnp.float32),
        "b2": 0.01 * jax.random.normal(k[5], (1, 1), jnp.float32),
    }


@jax.jit
def lm_gator_forward(params, sent_id, mask):
    pooled = bert_encoder_stub(params, sent_id, mask)       # glue (plain JAX)
    return gator_head(pooled, params["pool_w"], params["pool_b"],
                      params["w1"], params["b1"],
                      params["w2"], params["b2"])            # Pallas hot path


# ---------------------------------- main ----------------------------------- #
if __name__ == "__main__":
    key = jax.random.PRNGKey(0)
    kp, ki = jax.random.split(key, 2)

    params = init_params(kp)

    B, S = 2, 8
    sent_id = jax.random.randint(ki, (B, S), 0, VOCAB, dtype=jnp.int32)
    mask = jnp.concatenate(
        [jnp.ones((B, S - 2), jnp.int32), jnp.zeros((B, 2), jnp.int32)], axis=1)

    out = lm_gator_forward(params, sent_id, mask)
    out = jax.block_until_ready(out)

    # pure-JAX f32 reference of pooler + head (same bf16-stored weights
    # re-expanded to f32; the kernel also quantizes the pooled activations to
    # bf16 for the K=1024 contraction, so tolerance is loosened accordingly).
    pooled = bert_encoder_stub(params, sent_id, mask)
    pw = params["pool_w"].astype(jnp.float32)
    w1 = params["w1"].astype(jnp.float32)
    cls_hs = jnp.tanh(pooled @ pw + params["pool_b"])
    ref = jax.nn.sigmoid(
        jnp.maximum(cls_hs @ w1 + params["b1"], 0.0) @ params["w2"]
        + params["b2"])

    assert out.shape == (B, 1), out.shape
    assert jnp.allclose(out, ref, atol=2e-2), (out, ref)

    print("KERNEL_OK")
</pallas_src>

<mosaic_0001>
module attributes {stable_mosaic.version = 11 : i64} {
  func.func @gator_head_kernel(%arg0: i32, %arg1: memref<16x1024xbf16, #tpu.memory_space<vmem>>, %arg2: memref<1024x1024xbf16, #tpu.memory_space<vmem>>, %arg3: memref<1x1024xf32, #tpu.memory_space<vmem>>, %arg4: memref<1024x128xbf16, #tpu.memory_space<vmem>>, %arg5: memref<1x128xf32, #tpu.memory_space<vmem>>, %arg6: memref<1x128xf32, #tpu.memory_space<vmem>>, %arg7: memref<1x1xf32, #tpu.memory_space<smem>>, %arg8: memref<16x1xf32, #tpu.memory_space<vmem>>) attributes {dimension_semantics = [#tpu.dimension_semantics<parallel>], iteration_bounds = array<i64: 1>, scalar_prefetch = 0 : i64, scratch_operands = 0 : i64, tpu.core_type = #tpu.core_type<tc>, window_params = [{transform_indices = @transform_0, window_bounds = array<i64: 16, 1024>}, {pipeline_mode = #tpu.pipeline_mode<synchronous>, transform_indices = @transform_1, window_bounds = array<i64: 1024, 1024>}, {pipeline_mode = #tpu.pipeline_mode<synchronous>, transform_indices = @transform_2, window_bounds = array<i64: 1, 1024>}, {pipeline_mode = #tpu.pipeline_mode<synchronous>, transform_indices = @transform_3, window_bounds = array<i64: 1024, 128>}, {pipeline_mode = #tpu.pipeline_mode<synchronous>, transform_indices = @transform_4, window_bounds = array<i64: 1, 128>}, {pipeline_mode = #tpu.pipeline_mode<synchronous>, transform_indices = @transform_5, window_bounds = array<i64: 1, 128>}, {transform_indices = @transform_6, window_bounds = array<i64: 1, 1>}, {transform_indices = @transform_7, window_bounds = array<i64: 16, 1>}]} {
    %c0 = arith.constant 0 : index
    %c0_0 = arith.constant 0 : index
    %0 = vector.load %arg1[%c0, %c0_0] : memref<16x1024xbf16, #tpu.memory_space<vmem>>, vector<16x1024xbf16>
    %cst = arith.constant 0.000000e+00 : f32
    %1 = vector.broadcast %cst : f32 to vector<16x128xf32>
    %c0_1 = arith.constant 0 : index
    %c0_2 = arith.constant 0 : index
    %2 = vector.load %arg2[%c0_1, %c0_2] : memref<1024x1024xbf16, #tpu.memory_space<vmem>>, vector<1024x256xbf16>
    %cst_3 = arith.constant dense<0.000000e+00> : vector<16x256xf32>
    %3 = tpu.matmul %0, %2, %cst_3 {dimension_numbers = #tpu.dot_dimension_numbers<[1], [0], [0], [1], [0, 0, 1, 1], [], []>} : vector<16x1024xbf16>, vector<1024x256xbf16>, vector<16x256xf32> -> vector<16x256xf32>
    %c0_4 = arith.constant 0 : index
    %c0_5 = arith.constant 0 : index
    %4 = vector.load %arg3[%c0_4, %c0_5] : memref<1x1024xf32, #tpu.memory_space<vmem>>, vector<1x256xf32>
    %5 = vector.broadcast %4 : vector<1x256xf32> to vector<16x256xf32>
    %6 = arith.addf %3, %5 : vector<16x256xf32>
    %7 = math.tanh %6 : vector<16x256xf32>
    %8 = arith.truncf %7 : vector<16x256xf32> to vector<16x256xbf16>
    %c0_6 = arith.constant 0 : index
    %c0_7 = arith.constant 0 : index
    %9 = vector.load %arg4[%c0_6, %c0_7] : memref<1024x128xbf16, #tpu.memory_space<vmem>>, vector<256x128xbf16>
    %cst_8 = arith.constant dense<0.000000e+00> : vector<16x128xf32>
    %10 = tpu.matmul %8, %9, %cst_8 {dimension_numbers = #tpu.dot_dimension_numbers<[1], [0], [0], [1], [0, 0, 1, 1], [], []>} : vector<16x256xbf16>, vector<256x128xbf16>, vector<16x128xf32> -> vector<16x128xf32>
    %11 = arith.addf %1, %10 : vector<16x128xf32>
    %c0_9 = arith.constant 0 : index
    %c256 = arith.constant 256 : index
    %12 = vector.load %arg2[%c0_9, %c256] : memref<1024x1024xbf16, #tpu.memory_space<vmem>>, vector<1024x256xbf16>
    %cst_10 = arith.constant dense<0.000000e+00> : vector<16x256xf32>
    %13 = tpu.matmul %0, %12, %cst_10 {dimension_numbers = #tpu.dot_dimension_numbers<[1], [0], [0], [1], [0, 0, 1, 1], [], []>} : vector<16x1024xbf16>, vector<1024x256xbf16>, vector<16x256xf32> -> vector<16x256xf32>
    %c0_11 = arith.constant 0 : index
    %c256_12 = arith.constant 256 : index
    %14 = vector.load %arg3[%c0_11, %c256_12] : memref<1x1024xf32, #tpu.memory_space<vmem>>, vector<1x256xf32>
    %15 = vector.broadcast %14 : vector<1x256xf32> to vector<16x256xf32>
    %16 = arith.addf %13, %15 : vector<16x256xf32>
    %17 = math.tanh %16 : vector<16x256xf32>
    %18 = arith.truncf %17 : vector<16x256xf32> to vector<16x256xbf16>
    %c256_13 = arith.constant 256 : index
    %c0_14 = arith.constant 0 : index
    %19 = vector.load %arg4[%c256_13, %c0_14] : memref<1024x128xbf16, #tpu.memory_space<vmem>>, vector<256x128xbf16>
    %cst_15 = arith.constant dense<0.000000e+00> : vector<16x128xf32>
    %20 = tpu.matmul %18, %19, %cst_15 {dimension_numbers = #tpu.dot_dimension_numbers<[1], [0], [0], [1], [0, 0, 1, 1], [], []>} : vector<16x256xbf16>, vector<256x128xbf16>, vector<16x128xf32> -> vector<16x128xf32>
    %21 = arith.addf %11, %20 : vector<16x128xf32>
    %c0_16 = arith.constant 0 : index
    %c512 = arith.constant 512 : index
    %22 = vector.load %arg2[%c0_16, %c512] : memref<1024x1024xbf16, #tpu.memory_space<vmem>>, vector<1024x256xbf16>
    %cst_17 = arith.constant dense<0.000000e+00> : vector<16x256xf32>
    %23 = tpu.matmul %0, %22, %cst_17 {dimension_numbers = #tpu.dot_dimension_numbers<[1], [0], [0], [1], [0, 0, 1, 1], [], []>} : vector<16x1024xbf16>, vector<1024x256xbf16>, vector<16x256xf32> -> vector<16x256xf32>
    %c0_18 = arith.constant 0 : index
    %c512_19 = arith.constant 512 : index
    %24 = vector.load %arg3[%c0_18, %c512_19] : memref<1x1024xf32, #tpu.memory_space<vmem>>, vector<1x256xf32>
    %25 = vector.broadcast %24 : vector<1x256xf32> to vector<16x256xf32>
    %26 = arith.addf %23, %25 : vector<16x256xf32>
    %27 = math.tanh %26 : vector<16x256xf32>
    %28 = arith.truncf %27 : vector<16x256xf32> to vector<16x256xbf16>
    %c512_20 = arith.constant 512 : index
    %c0_21 = arith.constant 0 : index
    %29 = vector.load %arg4[%c512_20, %c0_21] : memref<1024x128xbf16, #tpu.memory_space<vmem>>, vector<256x128xbf16>
    %cst_22 = arith.constant dense<0.000000e+00> : vector<16x128xf32>
    %30 = tpu.matmul %28, %29, %cst_22 {dimension_numbers = #tpu.dot_dimension_numbers<[1], [0], [0], [1], [0, 0, 1, 1], [], []>} : vector<16x256xbf16>, vector<256x128xbf16>, vector<16x128xf32> -> vector<16x128xf32>
    %31 = arith.addf %21, %30 : vector<16x128xf32>
    %c0_23 = arith.constant 0 : index
    %c768 = arith.constant 768 : index
    %32 = vector.load %arg2[%c0_23, %c768] : memref<1024x1024xbf16, #tpu.memory_space<vmem>>, vector<1024x256xbf16>
    %cst_24 = arith.constant dense<0.000000e+00> : vector<16x256xf32>
    %33 = tpu.matmul %0, %32, %cst_24 {dimension_numbers = #tpu.dot_dimension_numbers<[1], [0], [0], [1], [0, 0, 1, 1], [], []>} : vector<16x1024xbf16>, vector<1024x256xbf16>, vector<16x256xf32> -> vector<16x256xf32>
    %c0_25 = arith.constant 0 : index
    %c768_26 = arith.constant 768 : index
    %34 = vector.load %arg3[%c0_25, %c768_26] : memref<1x1024xf32, #tpu.memory_space<vmem>>, vector<1x256xf32>
    %35 = vector.broadcast %34 : vector<1x256xf32> to vector<16x256xf32>
    %36 = arith.addf %33, %35 : vector<16x256xf32>
    %37 = math.tanh %36 : vector<16x256xf32>
    %38 = arith.truncf %37 : vector<16x256xf32> to vector<16x256xbf16>
    %c768_27 = arith.constant 768 : index
    %c0_28 = arith.constant 0 : index
    %39 = vector.load %arg4[%c768_27, %c0_28] : memref<1024x128xbf16, #tpu.memory_space<vmem>>, vector<256x128xbf16>
    %cst_29 = arith.constant dense<0.000000e+00> : vector<16x128xf32>
    %40 = tpu.matmul %38, %39, %cst_29 {dimension_numbers = #tpu.dot_dimension_numbers<[1], [0], [0], [1], [0, 0, 1, 1], [], []>} : vector<16x256xbf16>, vector<256x128xbf16>, vector<16x128xf32> -> vector<16x128xf32>
    %41 = arith.addf %31, %40 : vector<16x128xf32>
    %c0_30 = arith.constant 0 : index
    %c0_31 = arith.constant 0 : index
    %42 = vector.load %arg5[%c0_30, %c0_31] : memref<1x128xf32, #tpu.memory_space<vmem>>, vector<1x128xf32>
    %43 = vector.broadcast %42 : vector<1x128xf32> to vector<16x128xf32>
    %44 = arith.addf %41, %43 : vector<16x128xf32>
    %cst_32 = arith.constant 0.000000e+00 : f32
    %45 = vector.broadcast %cst_32 : f32 to vector<16x128xf32>
    %46 = arith.maximumf %44, %45 : vector<16x128xf32>
    %c0_33 = arith.constant 0 : index
    %c0_34 = arith.constant 0 : index
    %47 = vector.load %arg6[%c0_33, %c0_34] : memref<1x128xf32, #tpu.memory_space<vmem>>, vector<1x128xf32>
    %48 = vector.broadcast %47 : vector<1x128xf32> to vector<16x128xf32>
    %49 = arith.mulf %46, %48 : vector<16x128xf32>
    %cst_35 = arith.constant dense<0.000000e+00> : vector<16xf32>
    %50 = vector.multi_reduction <add>, %49, %cst_35 [1] : vector<16x128xf32> to vector<16xf32>
    %51 = vector.shape_cast %50 : vector<16xf32> to vector<16x1xf32>
    %c0_36 = arith.constant 0 : index
    %c0_37 = arith.constant 0 : index
    %52 = memref.load %arg7[%c0_36, %c0_37] : memref<1x1xf32, #tpu.memory_space<smem>>
    %53 = vector.broadcast %52 : f32 to vector<16x1xf32>
    %54 = arith.addf %51, %53 : vector<16x1xf32>
    %cst_38 = arith.constant 0.000000e+00 : f32
    %55 = vector.broadcast %cst_38 : f32 to vector<16x1xf32>
    %56 = arith.subf %55, %54 : vector<16x1xf32>
    %57 = math.exp %56 : vector<16x1xf32>
    %cst_39 = arith.constant 1.000000e+00 : f32
    %58 = vector.broadcast %cst_39 : f32 to vector<16x1xf32>
    %59 = arith.addf %58, %57 : vector<16x1xf32>
    %cst_40 = arith.constant 1.000000e+00 : f32
    %60 = vector.broadcast %cst_40 : f32 to vector<16x1xf32>
    %61 = arith.divf %60, %59 : vector<16x1xf32>
    %c0_41 = arith.constant 0 : index
    %c0_42 = arith.constant 0 : index
    %62 = vector.load %arg8[%c0_41, %c0_42] : memref<16x1xf32, #tpu.memory_space<vmem>>, vector<16x1xf32>
    tpu.vector_store %arg8[%c0_41, %c0_42], %61 {strides = array<i32>} : memref<16x1xf32, #tpu.memory_space<vmem>>, vector<16x1xf32>,
    return
  }
  func.func @transform_0(%arg0: i32) -> (i32, i32) {
    %c0_i32 = arith.constant 0 : i32
    %c0_i32_0 = arith.constant 0 : i32
    return %arg0, %c0_i32 : i32, i32
  }
  func.func @transform_1(%arg0: i32) -> (i32, i32) {
    %c0_i32 = arith.constant 0 : i32
    %c0_i32_0 = arith.constant 0 : i32
    %c0_i32_1 = arith.constant 0 : i32
    return %c0_i32, %c0_i32_0 : i32, i32
  }
  func.func @transform_2(%arg0: i32) -> (i32, i32) {
    %c0_i32 = arith.constant 0 : i32
    %c0_i32_0 = arith.constant 0 : i32
    %c0_i32_1 = arith.constant 0 : i32
    return %c0_i32, %c0_i32_0 : i32, i32
  }
  func.func @transform_3(%arg0: i32) -> (i32, i32) {
    %c0_i32 = arith.constant 0 : i32
    %c0_i32_0 = arith.constant 0 : i32
    %c0_i32_1 = arith.constant 0 : i32
    return %c0_i32, %c0_i32_0 : i32, i32
  }
  func.func @transform_4(%arg0: i32) -> (i32, i32) {
    %c0_i32 = arith.constant 0 : i32
    %c0_i32_0 = arith.constant 0 : i32
    %c0_i32_1 = arith.constant 0 : i32
    return %c0_i32, %c0_i32_0 : i32, i32
  }
  func.func @transform_5(%arg0: i32) -> (i32, i32) {
    %c0_i32 = arith.constant 0 : i32
    %c0_i32_0 = arith.constant 0 : i32
    %c0_i32_1 = arith.constant 0 : i32
    return %c0_i32, %c0_i32_0 : i32, i32
  }
  func.func @transform_6(%arg0: i32) -> (i32, i32) {
    %c0_i32 = arith.constant 0 : i32
    %c0_i32_0 = arith.constant 0 : i32
    %c0_i32_1 = arith.constant 0 : i32
    return %c0_i32, %c0_i32_0 : i32, i32
  }
  func.func @transform_7(%arg0: i32) -> (i32, i32) {
    %c0_i32 = arith.constant 0 : i32
    %c0_i32_0 = arith.constant 0 : i32
    return %arg0, %c0_i32 : i32, i32
  }
}

</mosaic_0001>

<llo_original>
// kernel: lm_gator_forward.1
$region0: #{lm_gator_forward.1}
  #allocation0 [shape = 'u32[]', space=smem, size = 0x4, offset = 0x4, fixed_abs, tag = 'smem constant byte address 0x4 - core index']
  #allocation1 [shape = 'u32[144,128]{1,0:T(1,128)}', space=vmem, size = 0x12000, scoped, tag = 'internal scratch']
  #allocation2 [shape = 'f32[1,1]{1,0:T(1,128)S(6)}', space=smem, size = 0x200, scoped, tag = 'scoped memory for lm_gator_forward.1']
  %s0 = inlined_call_operand.hbm [shape: bf16[16,1024], index: 0, kind: input, shape index: {}]
  %s1 = inlined_call_operand.hbm [shape: bf16[1024,1024], index: 1, kind: input, shape index: {}]
  %s2 = inlined_call_operand.hbm [shape: f32[1,1024], index: 2, kind: input, shape index: {}]
  %s3 = inlined_call_operand.hbm [shape: bf16[1024,128], index: 3, kind: input, shape index: {}]
  %s4 = inlined_call_operand.hbm [shape: f32[1,128], index: 4, kind: input, shape index: {}]
  %s5 = inlined_call_operand.hbm [shape: f32[1,128], index: 5, kind: input, shape index: {}]
  %s6 = inlined_call_operand.<no memory space> [shape: f32[1,1], index: 6, kind: input, shape index: {}]
  %s7 = inlined_call_operand.hbm [shape: f32[16,1], index: 7, kind: output, shape index: {}]
  %s8 = sld [smem:[#allocation0]]
  $region62: #{lm_gator_forward.1} parent=0
    _
  %s10 = ssub.s32 1, %s8
  %s11 = scalar_select 0, %s10, %s8
  %12 = sst [smem:[#allocation2]] %s6
  $region1: #{lm_gator_forward.1} parent=0
    #allocation3 [shape = 'u8[32768]{0}', space=vmem, size = 0x8000, scoped, tag = 'input window, operand 0, single buffered']
    #allocation4 [shape = 's32[1]{0}', space=sflag, size = 0x4, scoped, tag = 'scoped memory for lm_gator_forward.1']
    #allocation5 [shape = 's32[1]{0}', space=sflag, size = 0x4, scoped, tag = 'scoped memory for lm_gator_forward.1']
    #allocation6 [shape = 'u8[2097152]{0}', space=vmem, size = 0x200000, scoped, tag = 'input window, operand 1, single buffered']
    #allocation7 [shape = 's32[1]{0}', space=sflag, size = 0x4, scoped, tag = 'scoped memory for lm_gator_forward.1']
    #allocation8 [shape = 'u8[4096]{0}', space=vmem, size = 0x1000, scoped, tag = 'input window, operand 2, single buffered']
    #allocation9 [shape = 'u8[262144]{0}', space=vmem, size = 0x40000, scoped, tag = 'input window, operand 3, single buffered']
    #allocation10 [shape = 's32[1]{0}', space=sflag, size = 0x4, scoped, tag = 'scoped memory for lm_gator_forward.1']
    #allocation11 [shape = 'u8[512]{0}', space=vmem, size = 0x400, scoped, tag = 'input window, operand 4, single buffered']
    #allocation12 [shape = 'u8[512]{0}', space=vmem, size = 0x400, scoped, tag = 'input window, operand 5, single buffered']
    #allocation13 [shape = 's32[1]{0}', space=sflag, size = 0x4, scoped, tag = 'scoped memory for lm_gator_forward.1']
    #allocation14 [shape = 'u8[8192]{0}', space=vmem, size = 0x2000, scoped, tag = 'output window, operand 0, single buffered']
    %13 = vsyncpa [#allocation4], 0
    %14 = vsyncpa [#allocation7], 0
    %15 = vsyncpa [#allocation10], 0
    %16 = vsyncpa [#allocation13], 0
    %17 = vsyncpa [#allocation5], 0
    // Predicated region
    $region2: #{lm_gator_forward.1} parent=1 // pred_check
      _
    $region3: #{lm_gator_forward.1} parent=1 // pred_check_branch
      %19 = sbr.rel (0) target = $region5
    $region4: #{lm_gator_forward.1} parent=1 // pred_region
      %s21 = ssub.s32 1024, 1024
      %22 = vsyncadd [#allocation4], %s21
      %s23 = sshll.u32 [#allocation3], 4
      %s24 = int_to_ptr.vmem [resolvable:$true] %s23
      %29 = dma.hbm_to_vmem [thread:$0]  %s0, 1024, %s24, [#allocation4], 512, 512, 32
    $region5: #{lm_gator_forward.1} parent=1 // pred_fallthru
      _
    // Predicated region
    $region6: #{lm_gator_forward.1} parent=1 // pred_check
      _
    $region7: #{lm_gator_forward.1} parent=1 // pred_check_branch
      %31 = sbr.rel (0) target = $region9
    $region8: #{lm_gator_forward.1} parent=1 // pred_region
      %s33 = ssub.s32 65536, 65536
      %34 = vsyncadd [#allocation7], %s33
      %s35 = sshll.u32 [#allocation6], 4
      %s36 = int_to_ptr.vmem [resolvable:$true] %s35
      %41 = dma.hbm_to_vmem [thread:$0]  %s1, 65536, %s36, [#allocation7], 512, 512, 32
    $region9: #{lm_gator_forward.1} parent=1 // pred_fallthru
      _
    // Predicated region
    $region10: #{lm_gator_forward.1} parent=1 // pred_check
      _
    $region11: #{lm_gator_forward.1} parent=1 // pred_check_branch
      %43 = sbr.rel (0) target = $region13
    $region12: #{lm_gator_forward.1} parent=1 // pred_region
      %s45 = ssub.s32 128, 128
      %46 = vsyncadd [#allocation7], %s45
      %s48 = sshll.u32 [#allocation8], 4
      %s49 = int_to_ptr.vmem [resolvable:$true] %s48
      %51 = dma.hbm_to_vmem [thread:$0]  %s2, 128, %s49, [#allocation7]
    $region13: #{lm_gator_forward.1} parent=1 // pred_fallthru
      _
    // Predicated region
    $region14: #{lm_gator_forward.1} parent=1 // pred_check
      _
    $region15: #{lm_gator_forward.1} parent=1 // pred_check_branch
      %53 = sbr.rel (0) target = $region17
    $region16: #{lm_gator_forward.1} parent=1 // pred_region
      %s55 = ssub.s32 8192, 8192
      %56 = vsyncadd [#allocation10], %s55
      %s57 = sshll.u32 [#allocation9], 4
      %s58 = int_to_ptr.vmem [resolvable:$true] %s57
      %63 = dma.hbm_to_vmem [thread:$0]  %s3, 8192, %s58, [#allocation10], 64, 64, 4
    $region17: #{lm_gator_forward.1} parent=1 // pred_fallthru
      _
    // Predicated region
    $region18: #{lm_gator_forward.1} parent=1 // pred_check
      _
    $region19: #{lm_gator_forward.1} parent=1 // pred_check_branch
      %65 = sbr.rel (0) target = $region21
    $region20: #{lm_gator_forward.1} parent=1 // pred_region
      %s67 = ssub.s32 16, 16
      %68 = vsyncadd [#allocation10], %s67
      %s70 = sshll.u32 [#allocation11], 4
      %s71 = int_to_ptr.vmem [resolvable:$true] %s70
      %73 = dma.hbm_to_vmem [thread:$0]  %s4, 16, %s71, [#allocation10]
    $region21: #{lm_gator_forward.1} parent=1 // pred_fallthru
      _
    // Predicated region
    $region22: #{lm_gator_forward.1} parent=1 // pred_check
      _
    $region23: #{lm_gator_forward.1} parent=1 // pred_check_branch
      %75 = sbr.rel (0) target = $region25
    $region24: #{lm_gator_forward.1} parent=1 // pred_region
      %s77 = ssub.s32 16, 16
      %78 = vsyncadd [#allocation13], %s77
      %s80 = sshll.u32 [#allocation12], 4
      %s81 = int_to_ptr.vmem [resolvable:$true] %s80
      %83 = dma.hbm_to_vmem [thread:$0]  %s5, 16, %s81, [#allocation13]
    $region25: #{lm_gator_forward.1} parent=1 // pred_fallthru
      _
    // Predicated region
    $region26: #{lm_gator_forward.1} parent=1 // pred_check
      _
    $region27: #{lm_gator_forward.1} parent=1 // pred_check_branch
      %85 = sbr.rel (0) target = $region29
    $region28: #{lm_gator_forward.1} parent=1 // pred_region
      _
    $region29: #{lm_gator_forward.1} parent=1 // pred_fallthru
      _
    // Predicated region
    $region30: #{lm_gator_forward.1} parent=1 // pred_check
      _
    $region31: #{lm_gator_forward.1} parent=1 // pred_check_branch
      %87 = sbr.rel (0) target = $region33
    $region32: #{lm_gator_forward.1} parent=1 // pred_region
      %88 = dma.done [#allocation4], 1024
    $region33: #{lm_gator_forward.1} parent=1 // pred_fallthru
      _
    // Predicated region
    $region34: #{lm_gator_forward.1} parent=1 // pred_check
      _
    $region35: #{lm_gator_forward.1} parent=1 // pred_check_branch
      %90 = sbr.rel (0) target = $region37
    $region36: #{lm_gator_forward.1} parent=1 // pred_region
      %91 = dma.done [#allocation7], 65536
    $region37: #{lm_gator_forward.1} parent=1 // pred_fallthru
      _
    // Predicated region
    $region38: #{lm_gator_forward.1} parent=1 // pred_check
      _
    $region39: #{lm_gator_forward.1} parent=1 // pred_check_branch
      %93 = sbr.rel (0) target = $region41
    $region40: #{lm_gator_forward.1} parent=1 // pred_region
      %94 = dma.done [#allocation7], 128
    $region41: #{lm_gator_forward.1} parent=1 // pred_fallthru
      _
    // Predicated region
    $region42: #{lm_gator_forward.1} parent=1 // pred_check
      _
    $region43: #{lm_gator_forward.1} parent=1 // pred_check_branch
      %96 = sbr.rel (0) target = $region45
    $region44: #{lm_gator_forward.1} parent=1 // pred_region
      %97 = dma.done [#allocation10], 8192
    $region45: #{lm_gator_forward.1} parent=1 // pred_fallthru
      _
    // Predicated region
    $region46: #{lm_gator_forward.1} parent=1 // pred_check
      _
    $region47: #{lm_gator_forward.1} parent=1 // pred_check_branch
      %99 = sbr.rel (0) target = $region49
    $region48: #{lm_gator_forward.1} parent=1 // pred_region
      %100 = dma.done [#allocation10], 16
    $region49: #{lm_gator_forward.1} parent=1 // pred_fallthru
      _
    // Predicated region
    $region50: #{lm_gator_forward.1} parent=1 // pred_check
      _
    $region51: #{lm_gator_forward.1} parent=1 // pred_check_branch
      %102 = sbr.rel (0) target = $region53
    $region52: #{lm_gator_forward.1} parent=1 // pred_region
      %103 = dma.done [#allocation13], 16
    $region53: #{lm_gator_forward.1} parent=1 // pred_fallthru
      _
    %v105 = vld [vmem:[#allocation3] sm:$0xff]
    %v106 = vld [vmem:[#allocation3 + $0x8] sm:$0xff]
    %v107 = vld [vmem:[#allocation3 + $0x10] sm:$0xff]
    %v108 = vld [vmem:[#allocation3 + $0x18] sm:$0xff]
    %v109 = vld [vmem:[#allocation3 + $0x20] sm:$0xff]
    %v110 = vld [vmem:[#allocation3 + $0x28] sm:$0xff]
    %v111 = vld [vmem:[#allocation3 + $0x30] sm:$0xff]
    %v112 = vld [vmem:[#allocation3 + $0x38] sm:$0xff]
    %v113 = vld [vmem:[#allocation6] sm:$0xff]
    %v114 = vld [vmem:[#allocation6 + $0x20] sm:$0xff]
    %v115 = vld [vmem:[#allocation6 + $0x40] sm:$0xff]
    %v116 = vld [vmem:[#allocation6 + $0x60] sm:$0xff]
    %v117 = vld [vmem:[#allocation6 + $0x80] sm:$0xff]
    %v118 = vld [vmem:[#allocation6 + $0xa0] sm:$0xff]
    %v119 = vld [vmem:[#allocation6 + $0xc0] sm:$0xff]
    %v120 = vld [vmem:[#allocation6 + $0xe0] sm:$0xff]
    %v121 = vld [vmem:[#allocation6 + $0x100] sm:$0xff]
    %v122 = vld [vmem:[#allocation6 + $0x120] sm:$0xff]
    %v123 = vld [vmem:[#allocation6 + $0x140] sm:$0xff]
    %v124 = vld [vmem:[#allocation6 + $0x160] sm:$0xff]
    %v125 = vld [vmem:[#allocation6 + $0x180] sm:$0xff]
    %v126 = vld [vmem:[#allocation6 + $0x1a0] sm:$0xff]
    %v127 = vld [vmem:[#allocation6 + $0x1c0] sm:$0xff]
    %v128 = vld [vmem:[#allocation6 + $0x1e0] sm:$0xff]
    %v129 = vld [vmem:[#allocation6 + $0x200] sm:$0xff]
    %v130 = vld [vmem:[#allocation6 + $0x220] sm:$0xff]
    %v131 = vld [vmem:[#allocation6 + $0x240] sm:$0xff]
    %v132 = vld [vmem:[#allocation6 + $0x260] sm:$0xff]
    %v133 = vld [vmem:[#allocation6 + $0x280] sm:$0xff]
    %v134 = vld [vmem:[#allocation6 + $0x2a0] sm:$0xff]
    %v135 = vld [vmem:[#allocation6 + $0x2c0] sm:$0xff]
    %v136 = vld [vmem:[#allocation6 + $0x2e0] sm:$0xff]
    %v137 = vld [vmem:[#allocation6 + $0x300] sm:$0xff]
    %v138 = vld [vmem:[#allocation6 + $0x320] sm:$0xff]
    %v139 = vld [vmem:[#allocation6 + $0x340] sm:$0xff]
    %v140 = vld [vmem:[#allocation6 + $0x360] sm:$0xff]
    %v141 = vld [vmem:[#allocation6 + $0x380] sm:$0xff]
    %v142 = vld [vmem:[#allocation6 + $0x3a0] sm:$0xff]
    %v143 = vld [vmem:[#allocation6 + $0x3c0] sm:$0xff]
    %v144 = vld [vmem:[#allocation6 + $0x3e0] sm:$0xff]
    %v145 = vld [vmem:[#allocation6 + $0x400] sm:$0xff]
    %v146 = vld [vmem:[#allocation6 + $0x420] sm:$0xff]
    %v147 = vld [vmem:[#allocation6 + $0x440] sm:$0xff]
    %v148 = vld [vmem:[#allocation6 + $0x460] sm:$0xff]
    %v149 = vld [vmem:[#allocation6 + $0x480] sm:$0xff]
    %v150 = vld [vmem:[#allocation6 + $0x4a0] sm:$0xff]
    %v151 = vld [vmem:[#allocation6 + $0x4c0] sm:$0xff]
    %v152 = vld [vmem:[#allocation6 + $0x4e0] sm:$0xff]
    %v153 = vld [vmem:[#allocation6 + $0x500] sm:$0xff]
    %v154 = vld [vmem:[#allocation6 + $0x520] sm:$0xff]
    %v155 = vld [vmem:[#allocation6 + $0x540] sm:$0xff]
    %v156 = vld [vmem:[#allocation6 + $0x560] sm:$0xff]
    %v157 = vld [vmem:[#allocation6 + $0x580] sm:$0xff]
    %v158 = vld [vmem:[#allocation6 + $0x5a0] sm:$0xff]
    %v159 = vld [vmem:[#allocation6 + $0x5c0] sm:$0xff]
    %v160 = vld [vmem:[#allocation6 + $0x5e0] sm:$0xff]
    %v161 = vld [vmem:[#allocation6 + $0x600] sm:$0xff]
    %v162 = vld [vmem:[#allocation6 + $0x620] sm:$0xff]
    %v163 = vld [vmem:[#allocation6 + $0x640] sm:$0xff]
    %v164 = vld [vmem:[#allocation6 + $0x660] sm:$0xff]
    %v165 = vld [vmem:[#allocation6 + $0x680] sm:$0xff]
    %v166 = vld [vmem:[#allocation6 + $0x6a0] sm:$0xff]
    %v167 = vld [vmem:[#allocation6 + $0x6c0] sm:$0xff]
    %v168 = vld [vmem:[#allocation6 + $0x6e0] sm:$0xff]
    %v169 = vld [vmem:[#allocation6 + $0x700] sm:$0xff]
    %v170 = vld [vmem:[#allocation6 + $0x720] sm:$0xff]
    %v171 = vld [vmem:[#allocation6 + $0x740] sm:$0xff]
    %v172 = vld [vmem:[#allocation6 + $0x760] sm:$0xff]
    %v173 = vld [vmem:[#allocation6 + $0x780] sm:$0xff]
    %v174 = vld [vmem:[#allocation6 + $0x7a0] sm:$0xff]
    %v175 = vld [vmem:[#allocation6 + $0x7c0] sm:$0xff]
    %v176 = vld [vmem:[#allocation6 + $0x7e0] sm:$0xff]
    %v177 = vld [vmem:[#allocation6 + $0x800] sm:$0xff]
    %v178 = vld [vmem:[#allocation6 + $0x820] sm:$0xff]
    %v179 = vld [vmem:[#allocation6 + $0x840] sm:$0xff]
    %v180 = vld [vmem:[#allocation6 + $0x860] sm:$0xff]
    %v181 = vld [vmem:[#allocation6 + $0x880] sm:$0xff]
    %v182 = vld [vmem:[#allocation6 + $0x8a0] sm:$0xff]
    %v183 = vld [vmem:[#allocation6 + $0x8c0] sm:$0xff]
    %v184 = vld [vmem:[#allocation6 + $0x8e0] sm:$0xff]
    %v185 = vld [vmem:[#allocation6 + $0x900] sm:$0xff]
    %v186 = vld [vmem:[#allocation6 + $0x920] sm:$0xff]
    %v187 = vld [vmem:[#allocation6 + $0x940] sm:$0xff]
    %v188 = vld [vmem:[#allocation6 + $0x960] sm:$0xff]
    %v189 = vld [vmem:[#allocation6 + $0x980] sm:$0xff]
    %v190 = vld [vmem:[#allocation6 + $0x9a0] sm:$0xff]
    %v191 = vld [vmem:[#allocation6 + $0x9c0] sm:$0xff]
    %v192 = vld [vmem:[#allocation6 + $0x9e0] sm:$0xff]
    %v193 = vld [vmem:[#allocation6 + $0xa00] sm:$0xff]
    %v194 = vld [vmem:[#allocation6 + $0xa20] sm:$0xff]
    %v195 = vld [vmem:[#allocation6 + $0xa40] sm:$0xff]
    %v196 = vld [vmem:[#allocation6 + $0xa60] sm:$0xff]
    %v197 = vld [vmem:[#allocation6 + $0xa80] sm:$0xff]
    %v198 = vld [vmem:[#allocation6 + $0xaa0] sm:$0xff]
    %v199 = vld [vmem:[#allocation6 + $0xac0] sm:$0xff]
    %v200 = vld [vmem:[#allocation6 + $0xae0] sm:$0xff]
    %v201 = vld [vmem:[#allocation6 + $0xb00] sm:$0xff]
    %v202 = vld [vmem:[#allocation6 + $0xb20] sm:$0xff]
    %v203 = vld [vmem:[#allocation6 + $0xb40] sm:$0xff]
    %v204 = vld [vmem:[#allocation6 + $0xb60] sm:$0xff]
    %v205 = vld [vmem:[#allocation6 + $0xb80] sm:$0xff]
    %v206 = vld [vmem:[#allocation6 + $0xba0] sm:$0xff]
    %v207 = vld [vmem:[#allocation6 + $0xbc0] sm:$0xff]
    %v208 = vld [vmem:[#allocation6 + $0xbe0] sm:$0xff]
    %v209 = vld [vmem:[#allocation6 + $0xc00] sm:$0xff]
    %v210 = vld [vmem:[#allocation6 + $0xc20] sm:$0xff]
    %v211 = vld [vmem:[#allocation6 + $0xc40] sm:$0xff]
    %v212 = vld [vmem:[#allocation6 + $0xc60] sm:$0xff]
    %v213 = vld [vmem:[#allocation6 + $0xc80] sm:$0xff]
    %v214 = vld [vmem:[#allocation6 + $0xca0] sm:$0xff]
    %v215 = vld [vmem:[#allocation6 + $0xcc0] sm:$0xff]
    %v216 = vld [vmem:[#allocation6 + $0xce0] sm:$0xff]
    %v217 = vld [vmem:[#allocation6 + $0xd00] sm:$0xff]
    %v218 = vld [vmem:[#allocation6 + $0xd20] sm:$0xff]
    %v219 = vld [vmem:[#allocation6 + $0xd40] sm:$0xff]
    %v220 = vld [vmem:[#allocation6 + $0xd60] sm:$0xff]
    %v221 = vld [vmem:[#allocation6 + $0xd80] sm:$0xff]
    %v222 = vld [vmem:[#allocation6 + $0xda0] sm:$0xff]
    %v223 = vld [vmem:[#allocation6 + $0xdc0] sm:$0xff]
    %v224 = vld [vmem:[#allocation6 + $0xde0] sm:$0xff]
    %v225 = vld [vmem:[#allocation6 + $0xe00] sm:$0xff]
    %v226 = vld [vmem:[#allocation6 + $0xe20] sm:$0xff]
    %v227 = vld [vmem:[#allocation6 + $0xe40] sm:$0xff]
    %v228 = vld [vmem:[#allocation6 + $0xe60] sm:$0xff]
    %v229 = vld [vmem:[#allocation6 + $0xe80] sm:$0xff]
    %v230 = vld [vmem:[#allocation6 + $0xea0] sm:$0xff]
    %v231 = vld [vmem:[#allocation6 + $0xec0] sm:$0xff]
    %v232 = vld [vmem:[#allocation6 + $0xee0] sm:$0xff]
    %v233 = vld [vmem:[#allocation6 + $0xf00] sm:$0xff]
    %v234 = vld [vmem:[#allocation6 + $0xf20] sm:$0xff]
    %v235 = vld [vmem:[#allocation6 + $0xf40] sm:$0xff]
    %v236 = vld [vmem:[#allocation6 + $0xf60] sm:$0xff]
    %v237 = vld [vmem:[#allocation6 + $0xf80] sm:$0xff]
    %v238 = vld [vmem:[#allocation6 + $0xfa0] sm:$0xff]
    %v239 = vld [vmem:[#allocation6 + $0xfc0] sm:$0xff]
    %v240 = vld [vmem:[#allocation6 + $0xfe0] sm:$0xff]
    %v241 = vld [vmem:[#allocation8] sm:$0x3]
    %v243 = vlaneseq
    %v244 = vshrl.u32 %v243, 7
    %v245 = vsub.s32 0, %v244
    %v246 = vrot.slane %v241, %v245
    %v247 = vlaneseq
    %v248 = vshrl.u32 %v247, 7
    %v249 = vsub.s32 1, %v248
    %v250 = vrot.slane %v241, %v249
    %v261 = vunpack.c.l.b16 %v105
    %v262 = vunpack.c.h.b16 %v105
    %v263 = vunpack.c.l.b16 %v106
    %v264 = vunpack.c.h.b16 %v106
    %v265 = vunpack.c.l.b16 %v107
    %v266 = vunpack.c.h.b16 %v107
    %v267 = vunpack.c.l.b16 %v108
    %v268 = vunpack.c.h.b16 %v108
    %v269 = vunpack.c.l.b16 %v109
    %v270 = vunpack.c.h.b16 %v109
    %v271 = vunpack.c.l.b16 %v110
    %v272 = vunpack.c.h.b16 %v110
    %v273 = vunpack.c.l.b16 %v111
    %v274 = vunpack.c.h.b16 %v111
    %v275 = vunpack.c.l.b16 %v112
    %v276 = vunpack.c.h.b16 %v112
    %v277 = vpack.c.b16 %v269, %v261
    %v278 = vpack.c.b16 %v270, %v262
    %v279 = vpack.c.b16 %v271, %v263
    %v280 = vpack.c.b16 %v272, %v264
    %v281 = vpack.c.b16 %v273, %v265
    %v282 = vpack.c.b16 %v274, %v266
    %v283 = vpack.c.b16 %v275, %v267
    %v284 = vpack.c.b16 %v276, %v268
    %v421 = vunpack.c.l.b16 %v113
    %v422 = vunpack.c.h.b16 %v113
    %v423 = vunpack.c.l.b16 %v114
    %v424 = vunpack.c.h.b16 %v114
    %v425 = vunpack.c.l.b16 %v115
    %v426 = vunpack.c.h.b16 %v115
    %v427 = vunpack.c.l.b16 %v116
    %v428 = vunpack.c.h.b16 %v116
    %v429 = vunpack.c.l.b16 %v117
    %v430 = vunpack.c.h.b16 %v117
    %v431 = vunpack.c.l.b16 %v118
    %v432 = vunpack.c.h.b16 %v118
    %v433 = vunpack.c.l.b16 %v119
    %v434 = vunpack.c.h.b16 %v119
    %v435 = vunpack.c.l.b16 %v120
    %v436 = vunpack.c.h.b16 %v120
    %v437 = vunpack.c.l.b16 %v121
    %v438 = vunpack.c.h.b16 %v121
    %v439 = vunpack.c.l.b16 %v122
    %v440 = vunpack.c.h.b16 %v122
    %v441 = vunpack.c.l.b16 %v123
    %v442 = vunpack.c.h.b16 %v123
    %v443 = vunpack.c.l.b16 %v124
    %v444 = vunpack.c.h.b16 %v124
    %v445 = vunpack.c.l.b16 %v125
    %v446 = vunpack.c.h.b16 %v125
    %v447 = vunpack.c.l.b16 %v126
    %v448 = vunpack.c.h.b16 %v126
    %v449 = vunpack.c.l.b16 %v127
    %v450 = vunpack.c.h.b16 %v127
    %v451 = vunpack.c.l.b16 %v128
    %v452 = vunpack.c.h.b16 %v128
    %v453 = vunpack.c.l.b16 %v129
    %v454 = vunpack.c.h.b16 %v129
    %v455 = vunpack.c.l.b16 %v130
    %v456 = vunpack.c.h.b16 %v130
    %v457 = vunpack.c.l.b16 %v131
    %v458 = vunpack.c.h.b16 %v131
    %v459 = vunpack.c.l.b16 %v132
    %v460 = vunpack.c.h.b16 %v132
    %v461 = vunpack.c.l.b16 %v133
    %v462 = vunpack.c.h.b16 %v133
    %v463 = vunpack.c.l.b16 %v134
    %v464 = vunpack.c.h.b16 %v134
    %v465 = vunpack.c.l.b16 %v135
    %v466 = vunpack.c.h.b16 %v135
    %v467 = vunpack.c.l.b16 %v136
    %v468 = vunpack.c.h.b16 %v136
    %v469 = vunpack.c.l.b16 %v137
    %v470 = vunpack.c.h.b16 %v137
    %v471 = vunpack.c.l.b16 %v138
    %v472 = vunpack.c.h.b16 %v138
    %v473 = vunpack.c.l.b16 %v139
    %v474 = vunpack.c.h.b16 %v139
    %v475 = vunpack.c.l.b16 %v140
    %v476 = vunpack.c.h.b16 %v140
    %v477 = vunpack.c.l.b16 %v141
    %v478 = vunpack.c.h.b16 %v141
    %v479 = vunpack.c.l.b16 %v142
    %v480 = vunpack.c.h.b16 %v142
    %v481 = vunpack.c.l.b16 %v143
    %v482 = vunpack.c.h.b16 %v143
    %v483 = vunpack.c.l.b16 %v144
    %v484 = vunpack.c.h.b16 %v144
    %v485 = vunpack.c.l.b16 %v145
    %v486 = vunpack.c.h.b16 %v145
    %v487 = vunpack.c.l.b16 %v146
    %v488 = vunpack.c.h.b16 %v146
    %v489 = vunpack.c.l.b16 %v147
    %v490 = vunpack.c.h.b16 %v147
    %v491 = vunpack.c.l.b16 %v148
    %v492 = vunpack.c.h.b16 %v148
    %v493 = vunpack.c.l.b16 %v149
    %v494 = vunpack.c.h.b16 %v149
    %v495 = vunpack.c.l.b16 %v150
    %v496 = vunpack.c.h.b16 %v150
    %v497 = vunpack.c.l.b16 %v151
    %v498 = vunpack.c.h.b16 %v151
    %v499 = vunpack.c.l.b16 %v152
    %v500 = vunpack.c.h.b16 %v152
    %v501 = vunpack.c.l.b16 %v153
    %v502 = vunpack.c.h.b16 %v153
    %v503 = vunpack.c.l.b16 %v154
    %v504 = vunpack.c.h.b16 %v154
    %v505 = vunpack.c.l.b16 %v155
    %v506 = vunpack.c.h.b16 %v155
    %v507 = vunpack.c.l.b16 %v156
    %v508 = vunpack.c.h.b16 %v156
    %v509 = vunpack.c.l.b16 %v157
    %v510 = vunpack.c.h.b16 %v157
    %v511 = vunpack.c.l.b16 %v158
    %v512 = vunpack.c.h.b16 %v158
    %v513 = vunpack.c.l.b16 %v159
    %v514 = vunpack.c.h.b16 %v159
    %v515 = vunpack.c.l.b16 %v160
    %v516 = vunpack.c.h.b16 %v160
    %v517 = vunpack.c.l.b16 %v161
    %v518 = vunpack.c.h.b16 %v161
    %v519 = vunpack.c.l.b16 %v162
    %v520 = vunpack.c.h.b16 %v162
    %v521 = vunpack.c.l.b16 %v163
    %v522 = vunpack.c.h.b16 %v163
    %v523 = vunpack.c.l.b16 %v164
    %v524 = vunpack.c.h.b16 %v164
    %v525 = vunpack.c.l.b16 %v165
    %v526 = vunpack.c.h.b16 %v165
    %v527 = vunpack.c.l.b16 %v166
    %v528 = vunpack.c.h.b16 %v166
    %v529 = vunpack.c.l.b16 %v167
    %v530 = vunpack.c.h.b16 %v167
    %v531 = vunpack.c.l.b16 %v168
    %v532 = vunpack.c.h.b16 %v168
    %v533 = vunpack.c.l.b16 %v169
    %v534 = vunpack.c.h.b16 %v169
    %v535 = vunpack.c.l.b16 %v170
    %v536 = vunpack.c.h.b16 %v170
    %v537 = vunpack.c.l.b16 %v171
    %v538 = vunpack.c.h.b16 %v171
    %v539 = vunpack.c.l.b16 %v172
    %v540 = vunpack.c.h.b16 %v172
    %v541 = vunpack.c.l.b16 %v173
    %v542 = vunpack.c.h.b16 %v173
    %v543 = vunpack.c.l.b16 %v174
    %v544 = vunpack.c.h.b16 %v174
    %v545 = vunpack.c.l.b16 %v175
    %v546 = vunpack.c.h.b16 %v175
    %v547 = vunpack.c.l.b16 %v176
    %v548 = vunpack.c.h.b16 %v176
    %v549 = vunpack.c.l.b16 %v177
    %v550 = vunpack.c.h.b16 %v177
    %v551 = vunpack.c.l.b16 %v178
    %v552 = vunpack.c.h.b16 %v178
    %v553 = vunpack.c.l.b16 %v179
    %v554 = vunpack.c.h.b16 %v179
    %v555 = vunpack.c.l.b16 %v180
    %v556 = vunpack.c.h.b16 %v180
    %v557 = vunpack.c.l.b16 %v181
    %v558 = vunpack.c.h.b16 %v181
    %v559 = vunpack.c.l.b16 %v182
    %v560 = vunpack.c.h.b16 %v182
    %v561 = vunpack.c.l.b16 %v183
    %v562 = vunpack.c.h.b16 %v183
    %v563 = vunpack.c.l.b16 %v184
    %v564 = vunpack.c.h.b16 %v184
    %v565 = vunpack.c.l.b16 %v185
    %v566 = vunpack.c.h.b16 %v185
    %v567 = vunpack.c.l.b16 %v186
    %v568 = vunpack.c.h.b16 %v186
    %v569 = vunpack.c.l.b16 %v187
    %v570 = vunpack.c.h.b16 %v187
    %v571 = vunpack.c.l.b16 %v188
    %v572 = vunpack.c.h.b16 %v188
    %v573 = vunpack.c.l.b16 %v189
    %v574 = vunpack.c.h.b16 %v189
    %v575 = vunpack.c.l.b16 %v190
    %v576 = vunpack.c.h.b16 %v190
    %v577 = vunpack.c.l.b16 %v191
    %v578 = vunpack.c.h.b16 %v191
    %v579 = vunpack.c.l.b16 %v192
    %v580 = vunpack.c.h.b16 %v192
    %v581 = vunpack.c.l.b16 %v193
    %v582 = vunpack.c.h.b16 %v193
    %v583 = vunpack.c.l.b16 %v194
    %v584 = vunpack.c.h.b16 %v194
    %v585 = vunpack.c.l.b16 %v195
    %v586 = vunpack.c.h.b16 %v195
    %v587 = vunpack.c.l.b16 %v196
    %v588 = vunpack.c.h.b16 %v196
    %v589 = vunpack.c.l.b16 %v197
    %v590 = vunpack.c.h.b16 %v197
    %v591 = vunpack.c.l.b16 %v198
    %v592 = vunpack.c.h.b16 %v198
    %v593 = vunpack.c.l.b16 %v199
    %v594 = vunpack.c.h.b16 %v199
    %v595 = vunpack.c.l.b16 %v200
    %v596 = vunpack.c.h.b16 %v200
    %v597 = vunpack.c.l.b16 %v201
    %v598 = vunpack.c.h.b16 %v201
    %v599 = vunpack.c.l.b16 %v202
    %v600 = vunpack.c.h.b16 %v202
    %v601 = vunpack.c.l.b16 %v203
    %v602 = vunpack.c.h.b16 %v203
    %v603 = vunpack.c.l.b16 %v204
    %v604 = vunpack.c.h.b16 %v204
    %v605 = vunpack.c.l.b16 %v205
    %v606 = vunpack.c.h.b16 %v205
    %v607 = vunpack.c.l.b16 %v206
    %v608 = vunpack.c.h.b16 %v206
    %v609 = vunpack.c.l.b16 %v207
    %v610 = vunpack.c.h.b16 %v207
    %v611 = vunpack.c.l.b16 %v208
    %v612 = vunpack.c.h.b16 %v208
    %v613 = vunpack.c.l.b16 %v209
    %v614 = vunpack.c.h.b16 %v209
    %v615 = vunpack.c.l.b16 %v210
    %v616 = vunpack.c.h.b16 %v210
    %v617 = vunpack.c.l.b16 %v211
    %v618 = vunpack.c.h.b16 %v211
    %v619 = vunpack.c.l.b16 %v212
    %v620 = vunpack.c.h.b16 %v212
    %v621 = vunpack.c.l.b16 %v213
    %v622 = vunpack.c.h.b16 %v213
    %v623 = vunpack.c.l.b16 %v214
    %v624 = vunpack.c.h.b16 %v214
    %v625 = vunpack.c.l.b16 %v215
    %v626 = vunpack.c.h.b16 %v215
    %v627 = vunpack.c.l.b16 %v216
    %v628 = vunpack.c.h.b16 %v216
    %v629 = vunpack.c.l.b16 %v217
    %v630 = vunpack.c.h.b16 %v217
    %v631 = vunpack.c.l.b16 %v218
    %v632 = vunpack.c.h.b16 %v218
    %v633 = vunpack.c.l.b16 %v219
    %v634 = vunpack.c.h.b16 %v219
    %v635 = vunpack.c.l.b16 %v220
    %v636 = vunpack.c.h.b16 %v220
    %v637 = vunpack.c.l.b16 %v221
    %v638 = vunpack.c.h.b16 %v221
    %v639 = vunpack.c.l.b16 %v222
    %v640 = vunpack.c.h.b16 %v222
    %v641 = vunpack.c.l.b16 %v223
    %v642 = vunpack.c.h.b16 %v223
    %v643 = vunpack.c.l.b16 %v224
    %v644 = vunpack.c.h.b16 %v224
    %v645 = vunpack.c.l.b16 %v225
    %v646 = vunpack.c.h.b16 %v225
    %v647 = vunpack.c.l.b16 %v226
    %v648 = vunpack.c.h.b16 %v226
    %v649 = vunpack.c.l.b16 %v227
    %v650 = vunpack.c.h.b16 %v227
    %v651 = vunpack.c.l.b16 %v228
    %v652 = vunpack.c.h.b16 %v228
    %v653 = vunpack.c.l.b16 %v229
    %v654 = vunpack.c.h.b16 %v229
    %v655 = vunpack.c.l.b16 %v230
    %v656 = vunpack.c.h.b16 %v230
    %v657 = vunpack.c.l.b16 %v231
    %v658 = vunpack.c.h.b16 %v231
    %v659 = vunpack.c.l.b16 %v232
    %v660 = vunpack.c.h.b16 %v232
    %v661 = vunpack.c.l.b16 %v233
    %v662 = vunpack.c.h.b16 %v233
    %v663 = vunpack.c.l.b16 %v234
    %v664 = vunpack.c.h.b16 %v234
    %v665 = vunpack.c.l.b16 %v235
    %v666 = vunpack.c.h.b16 %v235
    %v667 = vunpack.c.l.b16 %v236
    %v668 = vunpack.c.h.b16 %v236
    %v669 = vunpack.c.l.b16 %v237
    %v670 = vunpack.c.h.b16 %v237
    %v671 = vunpack.c.l.b16 %v238
    %v672 = vunpack.c.h.b16 %v238
    %v673 = vunpack.c.l.b16 %v239
    %v674 = vunpack.c.h.b16 %v239
    %v675 = vunpack.c.l.b16 %v240
    %v676 = vunpack.c.h.b16 %v240
    %v677 = vpack.c.b16 %v423, %v421
    %v678 = vpack.c.b16 %v424, %v422
    %v679 = vpack.c.b16 %v427, %v425
    %v680 = vpack.c.b16 %v428, %v426
    %v681 = vpack.c.b16 %v431, %v429
    %v682 = vpack.c.b16 %v432, %v430
    %v683 = vpack.c.b16 %v435, %v433
    %v684 = vpack.c.b16 %v436, %v434
    %v685 = vpack.c.b16 %v439, %v437
    %v686 = vpack.c.b16 %v440, %v438
    %v687 = vpack.c.b16 %v443, %v441
    %v688 = vpack.c.b16 %v444, %v442
    %v689 = vpack.c.b16 %v447, %v445
    %v690 = vpack.c.b16 %v448, %v446
    %v691 = vpack.c.b16 %v451, %v449
    %v692 = vpack.c.b16 %v452, %v450
    %v693 = vpack.c.b16 %v455, %v453
    %v694 = vpack.c.b16 %v456, %v454
    %v695 = vpack.c.b16 %v459, %v457
    %v696 = vpack.c.b16 %v460, %v458
    %v697 = vpack.c.b16 %v463, %v461
    %v698 = vpack.c.b16 %v464, %v462
    %v699 = vpack.c.b16 %v467, %v465
    %v700 = vpack.c.b16 %v468, %v466
    %v701 = vpack.c.b16 %v471, %v469
    %v702 = vpack.c.b16 %v472, %v470
    %v703 = vpack.c.b16 %v475, %v473
    %v704 = vpack.c.b16 %v476, %v474
    %v705 = vpack.c.b16 %v479, %v477
    %v706 = vpack.c.b16 %v480, %v478
    %v707 = vpack.c.b16 %v483, %v481
    %v708 = vpack.c.b16 %v484, %v482
    %v709 = vpack.c.b16 %v487, %v485
    %v710 = vpack.c.b16 %v488, %v486
    %v711 = vpack.c.b16 %v491, %v489
    %v712 = vpack.c.b16 %v492, %v490
    %v713 = vpack.c.b16 %v495, %v493
    %v714 = vpack.c.b16 %v496, %v494
    %v715 = vpack.c.b16 %v499, %v497
    %v716 = vpack.c.b16 %v500, %v498
    %v717 = vpack.c.b16 %v503, %v501
    %v718 = vpack.c.b16 %v504, %v502
    %v719 = vpack.c.b16 %v507, %v505
    %v720 = vpack.c.b16 %v508, %v506
    %v721 = vpack.c.b16 %v511, %v509
    %v722 = vpack.c.b16 %v512, %v510
    %v723 = vpack.c.b16 %v515, %v513
    %v724 = vpack.c.b16 %v516, %v514
    %v725 = vpack.c.b16 %v519, %v517
    %v726 = vpack.c.b16 %v520, %v518
    %v727 = vpack.c.b16 %v523, %v521
    %v728 = vpack.c.b16 %v524, %v522
    %v729 = vpack.c.b16 %v527, %v525
    %v730 = vpack.c.b16 %v528, %v526
    %v731 = vpack.c.b16 %v531, %v529
    %v732 = vpack.c.b16 %v532, %v530
    %v733 = vpack.c.b16 %v535, %v533
    %v734 = vpack.c.b16 %v536, %v534
    %v735 = vpack.c.b16 %v539, %v537
    %v736 = vpack.c.b16 %v540, %v538
    %v737 = vpack.c.b16 %v543, %v541
    %v738 = vpack.c.b16 %v544, %v542
    %v739 = vpack.c.b16 %v547, %v545
    %v740 = vpack.c.b16 %v548, %v546
    %v741 = vpack.c.b16 %v551, %v549
    %v742 = vpack.c.b16 %v552, %v550
    %v743 = vpack.c.b16 %v555, %v553
    %v744 = vpack.c.b16 %v556, %v554
    %v745 = vpack.c.b16 %v559, %v557
    %v746 = vpack.c.b16 %v560, %v558
    %v747 = vpack.c.b16 %v563, %v561
    %v748 = vpack.c.b16 %v564, %v562
    %v749 = vpack.c.b16 %v567, %v565
    %v750 = vpack.c.b16 %v568, %v566
    %v751 = vpack.c.b16 %v571, %v569
    %v752 = vpack.c.b16 %v572, %v570
    %v753 = vpack.c.b16 %v575, %v573
    %v754 = vpack.c.b16 %v576, %v574
    %v755 = vpack.c.b16 %v579, %v577
    %v756 = vpack.c.b16 %v580, %v578
    %v757 = vpack.c.b16 %v583, %v581
    %v758 = vpack.c.b16 %v584, %v582
    %v759 = vpack.c.b16 %v587, %v585
    %v760 = vpack.c.b16 %v588, %v586
    %v761 = vpack.c.b16 %v591, %v589
    %v762 = vpack.c.b16 %v592, %v590
    %v763 = vpack.c.b16 %v595, %v593
    %v764 = vpack.c.b16 %v596, %v594
    %v765 = vpack.c.b16 %v599, %v597
    %v766 = vpack.c.b16 %v600, %v598
    %v767 = vpack.c.b16 %v603, %v601
    %v768 = vpack.c.b16 %v604, %v602
    %v769 = vpack.c.b16 %v607, %v605
    %v770 = vpack.c.b16 %v608, %v606
    %v771 = vpack.c.b16 %v611, %v609
    %v772 = vpack.c.b16 %v612, %v610
    %v773 = vpack.c.b16 %v615, %v613
    %v774 = vpack.c.b16 %v616, %v614
    %v775 = vpack.c.b16 %v619, %v617
    %v776 = vpack.c.b16 %v620, %v618
    %v777 = vpack.c.b16 %v623, %v621
    %v778 = vpack.c.b16 %v624, %v622
    %v779 = vpack.c.b16 %v627, %v625
    %v780 = vpack.c.b16 %v628, %v626
    %v781 = vpack.c.b16 %v631, %v629
    %v782 = vpack.c.b16 %v632, %v630
    %v783 = vpack.c.b16 %v635, %v633
    %v784 = vpack.c.b16 %v636, %v634
    %v785 = vpack.c.b16 %v639, %v637
    %v786 = vpack.c.b16 %v640, %v638
    %v787 = vpack.c.b16 %v643, %v641
    %v788 = vpack.c.b16 %v644, %v642
    %v789 = vpack.c.b16 %v647, %v645
    %v790 = vpack.c.b16 %v648, %v646
    %v791 = vpack.c.b16 %v651, %v649
    %v792 = vpack.c.b16 %v652, %v650
    %v793 = vpack.c.b16 %v655, %v653
    %v794 = vpack.c.b16 %v656, %v654
    %v795 = vpack.c.b16 %v659, %v657
    %v796 = vpack.c.b16 %v660, %v658
    %v797 = vpack.c.b16 %v663, %v661
    %v798 = vpack.c.b16 %v664, %v662
    %v799 = vpack.c.b16 %v667, %v665
    %v800 = vpack.c.b16 %v668, %v666
    %v801 = vpack.c.b16 %v671, %v669
    %v802 = vpack.c.b16 %v672, %v670
    %v803 = vpack.c.b16 %v675, %v673
    %v804 = vpack.c.b16 %v676, %v674
    %933 = vmatprep.subr.bf16.mxu0 %v678
    %934 = vmatpush1.bf16.msra.mxu0 %v677
    %935 = vmatprep.subr.bf16.mxu0 %v680
    %936 = vmatpush1.bf16.msra.mxu0 %v679
    %937 = vmatprep.subr.bf16.mxu0 %v682
    %938 = vmatpush1.bf16.msra.mxu0 %v681
    %939 = vmatprep.subr.bf16.mxu0 %v684
    %940 = vmatpush1.bf16.msra.mxu0 %v683
    %941 = vmatprep.subr.bf16.mxu0 %v686
    %942 = vmatpush1.bf16.msra.mxu0 %v685
    %943 = vmatprep.subr.bf16.mxu0 %v688
    %944 = vmatpush1.bf16.msra.mxu0 %v687
    %945 = vmatprep.subr.bf16.mxu0 %v690
    %946 = vmatpush1.bf16.msra.mxu0 %v689
    %947 = vmatprep.subr.bf16.mxu0 %v692
    %948 = vmatpush1.bf16.msra.mxu0 %v691
    %949 = vmatprep.subr.bf16.mxu0 %v694
    %950 = vmatpush1.bf16.msra.mxu0 %v693
    %951 = vmatprep.subr.bf16.mxu0 %v696
    %952 = vmatpush1.bf16.msra.mxu0 %v695
    %953 = vmatprep.subr.bf16.mxu0 %v698
    %954 = vmatpush1.bf16.msra.mxu0 %v697
    %955 = vmatprep.subr.bf16.mxu0 %v700
    %956 = vmatpush1.bf16.msra.mxu0 %v699
    %957 = vmatprep.subr.bf16.mxu0 %v702
    %958 = vmatpush1.bf16.msra.mxu0 %v701
    %959 = vmatprep.subr.bf16.mxu0 %v704
    %960 = vmatpush1.bf16.msra.mxu0 %v703
    %961 = vmatprep.subr.bf16.mxu0 %v706
    %962 = vmatpush1.bf16.msra.mxu0 %v705
    %963 = vmatprep.subr.bf16.mxu0 %v708
    %964 = vmatpush1.bf16.msra.mxu0 %v707
    %965 = vmatprep.mubr.bf16.mxu0 %v278
    %966 = vmatmul.mubr.bf16.gmra.mrb[0].mxu0 %v277
    %v967 = vpop.f32.mrb[0].mxu0
    %v968 = vadd.f32 %v246, %v967
    %v969 = vpop.f32.mrb[0].mxu0
    %v970 = vadd.f32 %v250, %v969
    %v971 = vpop.f32.mrb[0].mxu0
    %v972 = vadd.f32 %v246, %v971
    %v973 = vpop.f32.mrb[0].mxu0
    %v974 = vadd.f32 %v250, %v973
    %975 = vdwg.mxu0
    %976 = vmatprep.subr.bf16.mxu0 %v710
    %977 = vmatpush1.bf16.msra.mxu0 %v709
    %978 = vmatprep.subr.bf16.mxu0 %v712
    %979 = vmatpush1.bf16.msra.mxu0 %v711
    %980 = vmatprep.subr.bf16.mxu0 %v714
    %981 = vmatpush1.bf16.msra.mxu0 %v713
    %982 = vmatprep.subr.bf16.mxu0 %v716
    %983 = vmatpush1.bf16.msra.mxu0 %v715
    %984 = vmatprep.subr.bf16.mxu0 %v718
    %985 = vmatpush1.bf16.msra.mxu0 %v717
    %986 = vmatprep.subr.bf16.mxu0 %v720
    %987 = vmatpush1.bf16.msra.mxu0 %v719
    %988 = vmatprep.subr.bf16.mxu0 %v722
    %989 = vmatpush1.bf16.msra.mxu0 %v721
    %990 = vmatprep.subr.bf16.mxu0 %v724
    %991 = vmatpush1.bf16.msra.mxu0 %v723
    %992 = vmatprep.subr.bf16.mxu0 %v726
    %993 = vmatpush1.bf16.msra.mxu0 %v725
    %994 = vmatprep.subr.bf16.mxu0 %v728
    %995 = vmatpush1.bf16.msra.mxu0 %v727
    %996 = vmatprep.subr.bf16.mxu0 %v730
    %997 = vmatpush1.bf16.msra.mxu0 %v729
    %998 = vmatprep.subr.bf16.mxu0 %v732
    %999 = vmatpush1.bf16.msra.mxu0 %v731
    %1000 = vmatprep.subr.bf16.mxu0 %v734
    %1001 = vmatpush1.bf16.msra.mxu0 %v733
    %1002 = vmatprep.subr.bf16.mxu0 %v736
    %1003 = vmatpush1.bf16.msra.mxu0 %v735
    %1004 = vmatprep.subr.bf16.mxu0 %v738
    %1005 = vmatpush1.bf16.msra.mxu0 %v737
    %1006 = vmatprep.subr.bf16.mxu0 %v740
    %1007 = vmatpush1.bf16.msra.mxu0 %v739
    %1008 = vmatprep.mubr.bf16.mxu0 %v280
    %1009 = vmatmul.mubr.bf16.gmra.mrb[0].mxu0 %v279
    %v1010 = vpop.f32.mrb[0].mxu0
    %v1011 = vadd.f32 %v968, %v1010
    %v1012 = vpop.f32.mrb[0].mxu0
    %v1013 = vadd.f32 %v970, %v1012
    %v1014 = vpop.f32.mrb[0].mxu0
    %v1015 = vadd.f32 %v972, %v1014
    %v1016 = vpop.f32.mrb[0].mxu0
    %v1017 = vadd.f32 %v974, %v1016
    %1018 = vdwg.mxu0
    %1019 = vmatprep.subr.bf16.mxu0 %v742
    %1020 = vmatpush1.bf16.msra.mxu0 %v741
    %1021 = vmatprep.subr.bf16.mxu0 %v744
    %1022 = vmatpush1.bf16.msra.mxu0 %v743
    %1023 = vmatprep.subr.bf16.mxu0 %v746
    %1024 = vmatpush1.bf16.msra.mxu0 %v745
    %1025 = vmatprep.subr.bf16.mxu0 %v748
    %1026 = vmatpush1.bf16.msra.mxu0 %v747
    %1027 = vmatprep.subr.bf16.mxu0 %v750
    %1028 = vmatpush1.bf16.msra.mxu0 %v749
    %1029 = vmatprep.subr.bf16.mxu0 %v752
    %1030 = vmatpush1.bf16.msra.mxu0 %v751
    %1031 = vmatprep.subr.bf16.mxu0 %v754
    %1032 = vmatpush1.bf16.msra.mxu0 %v753
    %1033 = vmatprep.subr.bf16.mxu0 %v756
    %1034 = vmatpush1.bf16.msra.mxu0 %v755
    %1035 = vmatprep.subr.bf16.mxu0 %v758
    %1036 = vmatpush1.bf16.msra.mxu0 %v757
    %1037 = vmatprep.subr.bf16.mxu0 %v760
    %1038 = vmatpush1.bf16.msra.mxu0 %v759
    %1039 = vmatprep.subr.bf16.mxu0 %v762
    %1040 = vmatpush1.bf16.msra.mxu0 %v761
    %1041 = vmatprep.subr.bf16.mxu0 %v764
    %1042 = vmatpush1.bf16.msra.mxu0 %v763
    %1043 = vmatprep.subr.bf16.mxu0 %v766
    %1044 = vmatpush1.bf16.msra.mxu0 %v765
    %1045 = vmatprep.subr.bf16.mxu0 %v768
    %1046 = vmatpush1.bf16.msra.mxu0 %v767
    %1047 = vmatprep.subr.bf16.mxu0 %v770
    %1048 = vmatpush1.bf16.msra.mxu0 %v769
    %1049 = vmatprep.subr.bf16.mxu0 %v772
    %1050 = vmatpush1.bf16.msra.mxu0 %v771
    %1051 = vmatprep.mubr.bf16.mxu0 %v282
    %1052 = vmatmul.mubr.bf16.gmra.mrb[0].mxu0 %v281
    %v1053 = vpop.f32.mrb[0].mxu0
    %v1054 = vadd.f32 %v1011, %v1053
    %v1055 = vpop.f32.mrb[0].mxu0
    %v1056 = vadd.f32 %v1013, %v1055
    %v1057 = vpop.f32.mrb[0].mxu0
    %v1058 = vadd.f32 %v1015, %v1057
    %v1059 = vpop.f32.mrb[0].mxu0
    %v1060 = vadd.f32 %v1017, %v1059
    %1061 = vdwg.mxu0
    %1062 = vmatprep.subr.bf16.mxu0 %v774
    %1063 = vmatpush1.bf16.msra.mxu0 %v773
    %1064 = vmatprep.subr.bf16.mxu0 %v776
    %1065 = vmatpush1.bf16.msra.mxu0 %v775
    %1066 = vmatprep.subr.bf16.mxu0 %v778
    %1067 = vmatpush1.bf16.msra.mxu0 %v777
    %1068 = vmatprep.subr.bf16.mxu0 %v780
    %1069 = vmatpush1.bf16.msra.mxu0 %v779
    %1070 = vmatprep.subr.bf16.mxu0 %v782
    %1071 = vmatpush1.bf16.msra.mxu0 %v781
    %1072 = vmatprep.subr.bf16.mxu0 %v784
    %1073 = vmatpush1.bf16.msra.mxu0 %v783
    %1074 = vmatprep.subr.bf16.mxu0 %v786
    %1075 = vmatpush1.bf16.msra.mxu0 %v785
    %1076 = vmatprep.subr.bf16.mxu0 %v788
    %1077 = vmatpush1.bf16.msra.mxu0 %v787
    %1078 = vmatprep.subr.bf16.mxu0 %v790
    %1079 = vmatpush1.bf16.msra.mxu0 %v789
    %1080 = vmatprep.subr.bf16.mxu0 %v792
    %1081 = vmatpush1.bf16.msra.mxu0 %v791
    %1082 = vmatprep.subr.bf16.mxu0 %v794
    %1083 = vmatpush1.bf16.msra.mxu0 %v793
    %1084 = vmatprep.subr.bf16.mxu0 %v796
    %1085 = vmatpush1.bf16.msra.mxu0 %v795
    %1086 = vmatprep.subr.bf16.mxu0 %v798
    %1087 = vmatpush1.bf16.msra.mxu0 %v797
    %1088 = vmatprep.subr.bf16.mxu0 %v800
    %1089 = vmatpush1.bf16.msra.mxu0 %v799
    %1090 = vmatprep.subr.bf16.mxu0 %v802
    %1091 = vmatpush1.bf16.msra.mxu0 %v801
    %1092 = vmatprep.subr.bf16.mxu0 %v804
    %1093 = vmatpush1.bf16.msra.mxu0 %v803
    %1094 = vmatprep.mubr.bf16.mxu0 %v284
    %1095 = vmatmul.mubr.bf16.gmra.mrb[0].mxu0 %v283
    %v1096 = vpop.f32.mrb[0].mxu0
    %v1097 = vadd.f32 %v1054, %v1096
    %v1098 = vpop.f32.mrb[0].mxu0
    %v1099 = vadd.f32 %v1056, %v1098
    %v1100 = vpop.f32.mrb[0].mxu0
    %v1101 = vadd.f32 %v1058, %v1100
    %v1102 = vpop.f32.mrb[0].mxu0
    %v1103 = vadd.f32 %v1060, %v1102
    %1104 = vdwg.mxu0
    %v1105 = vtanh.pop %v1097
    %v1106 = vtanh.pop %v1099
    %v1107 = vtanh.pop %v1101
    %v1108 = vtanh.pop %v1103
    %v1109 = vpack.c.bf16 %v1107, %v1105
    %v1110 = vpack.c.bf16 %v1108, %v1106
    %v1111 = vld [vmem:[#allocation9] sm:$0xf]
    %v1112 = vld [vmem:[#allocation9 + $0x4] sm:$0xf]
    %v1113 = vld [vmem:[#allocation9 + $0x8] sm:$0xf]
    %v1114 = vld [vmem:[#allocation9 + $0xc] sm:$0xf]
    %v1115 = vld [vmem:[#allocation9 + $0x10] sm:$0xf]
    %v1116 = vld [vmem:[#allocation9 + $0x14] sm:$0xf]
    %v1117 = vld [vmem:[#allocation9 + $0x18] sm:$0xf]
    %v1118 = vld [vmem:[#allocation9 + $0x1c] sm:$0xf]
    %v1119 = vld [vmem:[#allocation9 + $0x20] sm:$0xf]
    %v1120 = vld [vmem:[#allocation9 + $0x24] sm:$0xf]
    %v1121 = vld [vmem:[#allocation9 + $0x28] sm:$0xf]
    %v1122 = vld [vmem:[#allocation9 + $0x2c] sm:$0xf]
    %v1123 = vld [vmem:[#allocation9 + $0x30] sm:$0xf]
    %v1124 = vld [vmem:[#allocation9 + $0x34] sm:$0xf]
    %v1125 = vld [vmem:[#allocation9 + $0x38] sm:$0xf]
    %v1126 = vld [vmem:[#allocation9 + $0x3c] sm:$0xf]
    %v1127 = vld [vmem:[#allocation9 + $0x40] sm:$0xf]
    %v1128 = vld [vmem:[#allocation9 + $0x44] sm:$0xf]
    %v1129 = vld [vmem:[#allocation9 + $0x48] sm:$0xf]
    %v1130 = vld [vmem:[#allocation9 + $0x4c] sm:$0xf]
    %v1131 = vld [vmem:[#allocation9 + $0x50] sm:$0xf]
    %v1132 = vld [vmem:[#allocation9 + $0x54] sm:$0xf]
    %v1133 = vld [vmem:[#allocation9 + $0x58] sm:$0xf]
    %v1134 = vld [vmem:[#allocation9 + $0x5c] sm:$0xf]
    %v1135 = vld [vmem:[#allocation9 + $0x60] sm:$0xf]
    %v1136 = vld [vmem:[#allocation9 + $0x64] sm:$0xf]
    %v1137 = vld [vmem:[#allocation9 + $0x68] sm:$0xf]
    %v1138 = vld [vmem:[#allocation9 + $0x6c] sm:$0xf]
    %v1139 = vld [vmem:[#allocation9 + $0x70] sm:$0xf]
    %v1140 = vld [vmem:[#allocation9 + $0x74] sm:$0xf]
    %v1141 = vld [vmem:[#allocation9 + $0x78] sm:$0xf]
    %v1142 = vld [vmem:[#allocation9 + $0x7c] sm:$0xf]
    %v1143 = vld [vmem:[#allocation6 + $0x8] sm:$0xff]
    %v1144 = vld [vmem:[#allocation6 + $0x28] sm:$0xff]
    %v1145 = vld [vmem:[#allocation6 + $0x48] sm:$0xff]
    %v1146 = vld [vmem:[#allocation6 + $0x68] sm:$0xff]
    %v1147 = vld [vmem:[#allocation6 + $0x88] sm:$0xff]
    %v1148 = vld [vmem:[#allocation6 + $0xa8] sm:$0xff]
    %v1149 = vld [vmem:[#allocation6 + $0xc8] sm:$0xff]
    %v1150 = vld [vmem:[#allocation6 + $0xe8] sm:$0xff]
    %v1151 = vld [vmem:[#allocation6 + $0x108] sm:$0xff]
    %v1152 = vld [vmem:[#allocation6 + $0x128] sm:$0xff]
    %v1153 = vld [vmem:[#allocation6 + $0x148] sm:$0xff]
    %v1154 = vld [vmem:[#allocation6 + $0x168] sm:$0xff]
    %v1155 = vld [vmem:[#allocation6 + $0x188] sm:$0xff]
    %v1156 = vld [vmem:[#allocation6 + $0x1a8] sm:$0xff]
    %v1157 = vld [vmem:[#allocation6 + $0x1c8] sm:$0xff]
    %v1158 = vld [vmem:[#allocation6 + $0x1e8] sm:$0xff]
    %v1159 = vld [vmem:[#allocation6 + $0x208] sm:$0xff]
    %v1160 = vld [vmem:[#allocation6 + $0x228] sm:$0xff]
    %v1161 = vld [vmem:[#allocation6 + $0x248] sm:$0xff]
    %v1162 = vld [vmem:[#allocation6 + $0x268] sm:$0xff]
    %v1163 = vld [vmem:[#allocation6 + $0x288] sm:$0xff]
    %v1164 = vld [vmem:[#allocation6 + $0x2a8] sm:$0xff]
    %v1165 = vld [vmem:[#allocation6 + $0x2c8] sm:$0xff]
    %v1166 = vld [vmem:[#allocation6 + $0x2e8] sm:$0xff]
    %v1167 = vld [vmem:[#allocation6 + $0x308] sm:$0xff]
    %v1168 = vld [vmem:[#allocation6 + $0x328] sm:$0xff]
    %v1169 = vld [vmem:[#allocation6 + $0x348] sm:$0xff]
    %v1170 = vld [vmem:[#allocation6 + $0x368] sm:$0xff]
    %v1171 = vld [vmem:[#allocation6 + $0x388] sm:$0xff]
    %v1172 = vld [vmem:[#allocation6 + $0x3a8] sm:$0xff]
    %v1173 = vld [vmem:[#allocation6 + $0x3c8] sm:$0xff]
    %v1174 = vld [vmem:[#allocation6 + $0x3e8] sm:$0xff]
    %v1175 = vld [vmem:[#allocation6 + $0x408] sm:$0xff]
    %v1176 = vld [vmem:[#allocation6 + $0x428] sm:$0xff]
    %v1177 = vld [vmem:[#allocation6 + $0x448] sm:$0xff]
    %v1178 = vld [vmem:[#allocation6 + $0x468] sm:$0xff]
    %v1179 = vld [vmem:[#allocation6 + $0x488] sm:$0xff]
    %v1180 = vld [vmem:[#allocation6 + $0x4a8] sm:$0xff]
    %v1181 = vld [vmem:[#allocation6 + $0x4c8] sm:$0xff]
    %v1182 = vld [vmem:[#allocation6 + $0x4e8] sm:$0xff]
    %v1183 = vld [vmem:[#allocation6 + $0x508] sm:$0xff]
    %v1184 = vld [vmem:[#allocation6 + $0x528] sm:$0xff]
    %v1185 = vld [vmem:[#allocation6 + $0x548] sm:$0xff]
    %v1186 = vld [vmem:[#allocation6 + $0x568] sm:$0xff]
    %v1187 = vld [vmem:[#allocation6 + $0x588] sm:$0xff]
    %v1188 = vld [vmem:[#allocation6 + $0x5a8] sm:$0xff]
    %v1189 = vld [vmem:[#allocation6 + $0x5c8] sm:$0xff]
    %v1190 = vld [vmem:[#allocation6 + $0x5e8] sm:$0xff]
    %v1191 = vld [vmem:[#allocation6 + $0x608] sm:$0xff]
    %v1192 = vld [vmem:[#allocation6 + $0x628] sm:$0xff]
    %v1193 = vld [vmem:[#allocation6 + $0x648] sm:$0xff]
    %v1194 = vld [vmem:[#allocation6 + $0x668] sm:$0xff]
    %v1195 = vld [vmem:[#allocation6 + $0x688] sm:$0xff]
    %v1196 = vld [vmem:[#allocation6 + $0x6a8] sm:$0xff]
    %v1197 = vld [vmem:[#allocation6 + $0x6c8] sm:$0xff]
    %v1198 = vld [vmem:[#allocation6 + $0x6e8] sm:$0xff]
    %v1199 = vld [vmem:[#allocation6 + $0x708] sm:$0xff]
    %v1200 = vld [vmem:[#allocation6 + $0x728] sm:$0xff]
    %v1201 = vld [vmem:[#allocation6 + $0x748] sm:$0xff]
    %v1202 = vld [vmem:[#allocation6 + $0x768] sm:$0xff]
    %v1203 = vld [vmem:[#allocation6 + $0x788] sm:$0xff]
    %v1204 = vld [vmem:[#allocation6 + $0x7a8] sm:$0xff]
    %v1205 = vld [vmem:[#allocation6 + $0x7c8] sm:$0xff]
    %v1206 = vld [vmem:[#allocation6 + $0x7e8] sm:$0xff]
    %v1207 = vld [vmem:[#allocation6 + $0x808] sm:$0xff]
    %v1208 = vld [vmem:[#allocation6 + $0x828] sm:$0xff]
    %v1209 = vld [vmem:[#allocation6 + $0x848] sm:$0xff]
    %v1210 = vld [vmem:[#allocation6 + $0x868] sm:$0xff]
    %v1211 = vld [vmem:[#allocation6 + $0x888] sm:$0xff]
    %v1212 = vld [vmem:[#allocation6 + $0x8a8] sm:$0xff]
    %v1213 = vld [vmem:[#allocation6 + $0x8c8] sm:$0xff]
    %v1214 = vld [vmem:[#allocation6 + $0x8e8] sm:$0xff]
    %v1215 = vld [vmem:[#allocation6 + $0x908] sm:$0xff]
    %v1216 = vld [vmem:[#allocation6 + $0x928] sm:$0xff]
    %v1217 = vld [vmem:[#allocation6 + $0x948] sm:$0xff]
    %v1218 = vld [vmem:[#allocation6 + $0x968] sm:$0xff]
    %v1219 = vld [vmem:[#allocation6 + $0x988] sm:$0xff]
    %v1220 = vld [vmem:[#allocation6 + $0x9a8] sm:$0xff]
    %v1221 = vld [vmem:[#allocation6 + $0x9c8] sm:$0xff]
    %v1222 = vld [vmem:[#allocation6 + $0x9e8] sm:$0xff]
    %v1223 = vld [vmem:[#allocation6 + $0xa08] sm:$0xff]
    %v1224 = vld [vmem:[#allocation6 + $0xa28] sm:$0xff]
    %v1225 = vld [vmem:[#allocation6 + $0xa48] sm:$0xff]
    %v1226 = vld [vmem:[#allocation6 + $0xa68] sm:$0xff]
    %v1227 = vld [vmem:[#allocation6 + $0xa88] sm:$0xff]
    %v1228 = vld [vmem:[#allocation6 + $0xaa8] sm:$0xff]
    %v1229 = vld [vmem:[#allocation6 + $0xac8] sm:$0xff]
    %v1230 = vld [vmem:[#allocation6 + $0xae8] sm:$0xff]
    %v1231 = vld [vmem:[#allocation6 + $0xb08] sm:$0xff]
    %v1232 = vld [vmem:[#allocation6 + $0xb28] sm:$0xff]
    %v1233 = vld [vmem:[#allocation6 + $0xb48] sm:$0xff]
    %v1234 = vld [vmem:[#allocation6 + $0xb68] sm:$0xff]
    %v1235 = vld [vmem:[#allocation6 + $0xb88] sm:$0xff]
    %v1236 = vld [vmem:[#allocation6 + $0xba8] sm:$0xff]
    %v1237 = vld [vmem:[#allocation6 + $0xbc8] sm:$0xff]
    %v1238 = vld [vmem:[#allocation6 + $0xbe8] sm:$0xff]
    %v1239 = vld [vmem:[#allocation6 + $0xc08] sm:$0xff]
    %v1240 = vld [vmem:[#allocation6 + $0xc28] sm:$0xff]
    %v1241 = vld [vmem:[#allocation6 + $0xc48] sm:$0xff]
    %v1242 = vld [vmem:[#allocation6 + $0xc68] sm:$0xff]
    %v1243 = vld [vmem:[#allocation6 + $0xc88] sm:$0xff]
    %v1244 = vld [vmem:[#allocation6 + $0xca8] sm:$0xff]
    %v1245 = vld [vmem:[#allocation6 + $0xcc8] sm:$0xff]
    %v1246 = vld [vmem:[#allocation6 + $0xce8] sm:$0xff]
    %v1247 = vld [vmem:[#allocation6 + $0xd08] sm:$0xff]
    %v1248 = vld [vmem:[#allocation6 + $0xd28] sm:$0xff]
    %v1249 = vld [vmem:[#allocation6 + $0xd48] sm:$0xff]
    %v1250 = vld [vmem:[#allocation6 + $0xd68] sm:$0xff]
    %v1251 = vld [vmem:[#allocation6 + $0xd88] sm:$0xff]
    %v1252 = vld [vmem:[#allocation6 + $0xda8] sm:$0xff]
    %v1253 = vld [vmem:[#allocation6 + $0xdc8] sm:$0xff]
    %v1254 = vld [vmem:[#allocation6 + $0xde8] sm:$0xff]
    %v1255 = vld [vmem:[#allocation6 + $0xe08] sm:$0xff]
    %v1256 = vld [vmem:[#allocation6 + $0xe28] sm:$0xff]
    %v1257 = vld [vmem:[#allocation6 + $0xe48] sm:$0xff]
    %v1258 = vld [vmem:[#allocation6 + $0xe68] sm:$0xff]
    %v1259 = vld [vmem:[#allocation6 + $0xe88] sm:$0xff]
    %v1260 = vld [vmem:[#allocation6 + $0xea8] sm:$0xff]
    %v1261 = vld [vmem:[#allocation6 + $0xec8] sm:$0xff]
    %v1262 = vld [vmem:[#allocation6 + $0xee8] sm:$0xff]
    %v1263 = vld [vmem:[#allocation6 + $0xf08] sm:$0xff]
    %v1264 = vld [vmem:[#allocation6 + $0xf28] sm:$0xff]
    %v1265 = vld [vmem:[#allocation6 + $0xf48] sm:$0xff]
    %v1266 = vld [vmem:[#allocation6 + $0xf68] sm:$0xff]
    %v1267 = vld [vmem:[#allocation6 + $0xf88] sm:$0xff]
    %v1268 = vld [vmem:[#allocation6 + $0xfa8] sm:$0xff]
    %v1269 = vld [vmem:[#allocation6 + $0xfc8] sm:$0xff]
    %v1270 = vld [vmem:[#allocation6 + $0xfe8] sm:$0xff]
    %v1271 = vld [vmem:[#allocation8 + $0x2] sm:$0x3]
    %v1273 = vlaneseq
    %v1274 = vshrl.u32 %v1273, 7
    %v1275 = vsub.s32 0, %v1274
    %v1276 = vrot.slane %v1271, %v1275
    %v1277 = vlaneseq
    %v1278 = vshrl.u32 %v1277, 7
    %v1279 = vsub.s32 1, %v1278
    %v1280 = vrot.slane %v1271, %v1279
    %v1411 = vunpack.c.l.b16 %v1143
    %v1412 = vunpack.c.h.b16 %v1143
    %v1413 = vunpack.c.l.b16 %v1144
    %v1414 = vunpack.c.h.b16 %v1144
    %v1415 = vunpack.c.l.b16 %v1145
    %v1416 = vunpack.c.h.b16 %v1145
    %v1417 = vunpack.c.l.b16 %v1146
    %v1418 = vunpack.c.h.b16 %v1146
    %v1419 = vunpack.c.l.b16 %v1147
    %v1420 = vunpack.c.h.b16 %v1147
    %v1421 = vunpack.c.l.b16 %v1148
    %v1422 = vunpack.c.h.b16 %v1148
    %v1423 = vunpack.c.l.b16 %v1149
    %v1424 = vunpack.c.h.b16 %v1149
    %v1425 = vunpack.c.l.b16 %v1150
    %v1426 = vunpack.c.h.b16 %v1150
    %v1427 = vunpack.c.l.b16 %v1151
    %v1428 = vunpack.c.h.b16 %v1151
    %v1429 = vunpack.c.l.b16 %v1152
    %v1430 = vunpack.c.h.b16 %v1152
    %v1431 = vunpack.c.l.b16 %v1153
    %v1432 = vunpack.c.h.b16 %v1153
    %v1433 = vunpack.c.l.b16 %v1154
    %v1434 = vunpack.c.h.b16 %v1154
    %v1435 = vunpack.c.l.b16 %v1155
    %v1436 = vunpack.c.h.b16 %v1155
    %v1437 = vunpack.c.l.b16 %v1156
    %v1438 = vunpack.c.h.b16 %v1156
    %v1439 = vunpack.c.l.b16 %v1157
    %v1440 = vunpack.c.h.b16 %v1157
    %v1441 = vunpack.c.l.b16 %v1158
    %v1442 = vunpack.c.h.b16 %v1158
    %v1443 = vunpack.c.l.b16 %v1159
    %v1444 = vunpack.c.h.b16 %v1159
    %v1445 = vunpack.c.l.b16 %v1160
    %v1446 = vunpack.c.h.b16 %v1160
    %v1447 = vunpack.c.l.b16 %v1161
    %v1448 = vunpack.c.h.b16 %v1161
    %v1449 = vunpack.c.l.b16 %v1162
    %v1450 = vunpack.c.h.b16 %v1162
    %v1451 = vunpack.c.l.b16 %v1163
    %v1452 = vunpack.c.h.b16 %v1163
    %v1453 = vunpack.c.l.b16 %v1164
    %v1454 = vunpack.c.h.b16 %v1164
    %v1455 = vunpack.c.l.b16 %v1165
    %v1456 = vunpack.c.h.b16 %v1165
    %v1457 = vunpack.c.l.b16 %v1166
    %v1458 = vunpack.c.h.b16 %v1166
    %v1459 = vunpack.c.l.b16 %v1167
    %v1460 = vunpack.c.h.b16 %v1167
    %v1461 = vunpack.c.l.b16 %v1168
    %v1462 = vunpack.c.h.b16 %v1168
    %v1463 = vunpack.c.l.b16 %v1169
    %v1464 = vunpack.c.h.b16 %v1169
    %v1465 = vunpack.c.l.b16 %v1170
    %v1466 = vunpack.c.h.b16 %v1170
    %v1467 = vunpack.c.l.b16 %v1171
    %v1468 = vunpack.c.h.b16 %v1171
    %v1469 = vunpack.c.l.b16 %v1172
    %v1470 = vunpack.c.h.b16 %v1172
    %v1471 = vunpack.c.l.b16 %v1173
    %v1472 = vunpack.c.h.b16 %v1173
    %v1473 = vunpack.c.l.b16 %v1174
    %v1474 = vunpack.c.h.b16 %v1174
    %v1475 = vunpack.c.l.b16 %v1175
    %v1476 = vunpack.c.h.b16 %v1175
    %v1477 = vunpack.c.l.b16 %v1176
    %v1478 = vunpack.c.h.b16 %v1176
    %v1479 = vunpack.c.l.b16 %v1177
    %v1480 = vunpack.c.h.b16 %v1177
    %v1481 = vunpack.c.l.b16 %v1178
    %v1482 = vunpack.c.h.b16 %v1178
    %v1483 = vunpack.c.l.b16 %v1179
    %v1484 = vunpack.c.h.b16 %v1179
    %v1485 = vunpack.c.l.b16 %v1180
    %v1486 = vunpack.c.h.b16 %v1180
    %v1487 = vunpack.c.l.b16 %v1181
    %v1488 = vunpack.c.h.b16 %v1181
    %v1489 = vunpack.c.l.b16 %v1182
    %v1490 = vunpack.c.h.b16 %v1182
    %v1491 = vunpack.c.l.b16 %v1183
    %v1492 = vunpack.c.h.b16 %v1183
    %v1493 = vunpack.c.l.b16 %v1184
    %v1494 = vunpack.c.h.b16 %v1184
    %v1495 = vunpack.c.l.b16 %v1185
    %v1496 = vunpack.c.h.b16 %v1185
    %v1497 = vunpack.c.l.b16 %v1186
    %v1498 = vunpack.c.h.b16 %v1186
    %v1499 = vunpack.c.l.b16 %v1187
    %v1500 = vunpack.c.h.b16 %v1187
    %v1501 = vunpack.c.l.b16 %v1188
    %v1502 = vunpack.c.h.b16 %v1188
    %v1503 = vunpack.c.l.b16 %v1189
    %v1504 = vunpack.c.h.b16 %v1189
    %v1505 = vunpack.c.l.b16 %v1190
    %v1506 = vunpack.c.h.b16 %v1190
    %v1507 = vunpack.c.l.b16 %v1191
    %v1508 = vunpack.c.h.b16 %v1191
    %v1509 = vunpack.c.l.b16 %v1192
    %v1510 = vunpack.c.h.b16 %v1192
    %v1511 = vunpack.c.l.b16 %v1193
    %v1512 = vunpack.c.h.b16 %v1193
    %v1513 = vunpack.c.l.b16 %v1194
    %v1514 = vunpack.c.h.b16 %v1194
    %v1515 = vunpack.c.l.b16 %v1195
    %v1516 = vunpack.c.h.b16 %v1195
    %v1517 = vunpack.c.l.b16 %v1196
    %v1518 = vunpack.c.h.b16 %v1196
    %v1519 = vunpack.c.l.b16 %v1197
    %v1520 = vunpack.c.h.b16 %v1197
    %v1521 = vunpack.c.l.b16 %v1198
    %v1522 = vunpack.c.h.b16 %v1198
    %v1523 = vunpack.c.l.b16 %v1199
    %v1524 = vunpack.c.h.b16 %v1199
    %v1525 = vunpack.c.l.b16 %v1200
    %v1526 = vunpack.c.h.b16 %v1200
    %v1527 = vunpack.c.l.b16 %v1201
    %v1528 = vunpack.c.h.b16 %v1201
    %v1529 = vunpack.c.l.b16 %v1202
    %v1530 = vunpack.c.h.b16 %v1202
    %v1531 = vunpack.c.l.b16 %v1203
    %v1532 = vunpack.c.h.b16 %v1203
    %v1533 = vunpack.c.l.b16 %v1204
    %v1534 = vunpack.c.h.b16 %v1204
    %v1535 = vunpack.c.l.b16 %v1205
    %v1536 = vunpack.c.h.b16 %v1205
    %v1537 = vunpack.c.l.b16 %v1206
    %v1538 = vunpack.c.h.b16 %v1206
    %v1539 = vunpack.c.l.b16 %v1207
    %v1540 = vunpack.c.h.b16 %v1207
    %v1541 = vunpack.c.l.b16 %v1208
    %v1542 = vunpack.c.h.b16 %v1208
    %v1543 = vunpack.c.l.b16 %v1209
    %v1544 = vunpack.c.h.b16 %v1209
    %v1545 = vunpack.c.l.b16 %v1210
    %v1546 = vunpack.c.h.b16 %v1210
    %v1547 = vunpack.c.l.b16 %v1211
    %v1548 = vunpack.c.h.b16 %v1211
    %v1549 = vunpack.c.l.b16 %v1212
    %v1550 = vunpack.c.h.b16 %v1212
    %v1551 = vunpack.c.l.b16 %v1213
    %v1552 = vunpack.c.h.b16 %v1213
    %v1553 = vunpack.c.l.b16 %v1214
    %v1554 = vunpack.c.h.b16 %v1214
    %v1555 = vunpack.c.l.b16 %v1215
    %v1556 = vunpack.c.h.b16 %v1215
    %v1557 = vunpack.c.l.b16 %v1216
    %v1558 = vunpack.c.h.b16 %v1216
    %v1559 = vunpack.c.l.b16 %v1217
    %v1560 = vunpack.c.h.b16 %v1217
    %v1561 = vunpack.c.l.b16 %v1218
    %v1562 = vunpack.c.h.b16 %v1218
    %v1563 = vunpack.c.l.b16 %v1219
    %v1564 = vunpack.c.h.b16 %v1219
    %v1565 = vunpack.c.l.b16 %v1220
    %v1566 = vunpack.c.h.b16 %v1220
    %v1567 = vunpack.c.l.b16 %v1221
    %v1568 = vunpack.c.h.b16 %v1221
    %v1569 = vunpack.c.l.b16 %v1222
    %v1570 = vunpack.c.h.b16 %v1222
    %v1571 = vunpack.c.l.b16 %v1223
    %v1572 = vunpack.c.h.b16 %v1223
    %v1573 = vunpack.c.l.b16 %v1224
    %v1574 = vunpack.c.h.b16 %v1224
    %v1575 = vunpack.c.l.b16 %v1225
    %v1576 = vunpack.c.h.b16 %v1225
    %v1577 = vunpack.c.l.b16 %v1226
    %v1578 = vunpack.c.h.b16 %v1226
    %v1579 = vunpack.c.l.b16 %v1227
    %v1580 = vunpack.c.h.b16 %v1227
    %v1581 = vunpack.c.l.b16 %v1228
    %v1582 = vunpack.c.h.b16 %v1228
    %v1583 = vunpack.c.l.b16 %v1229
    %v1584 = vunpack.c.h.b16 %v1229
    %v1585 = vunpack.c.l.b16 %v1230
    %v1586 = vunpack.c.h.b16 %v1230
    %v1587 = vunpack.c.l.b16 %v1231
    %v1588 = vunpack.c.h.b16 %v1231
    %v1589 = vunpack.c.l.b16 %v1232
    %v1590 = vunpack.c.h.b16 %v1232
    %v1591 = vunpack.c.l.b16 %v1233
    %v1592 = vunpack.c.h.b16 %v1233
    %v1593 = vunpack.c.l.b16 %v1234
    %v1594 = vunpack.c.h.b16 %v1234
    %v1595 = vunpack.c.l.b16 %v1235
    %v1596 = vunpack.c.h.b16 %v1235
    %v1597 = vunpack.c.l.b16 %v1236
    %v1598 = vunpack.c.h.b16 %v1236
    %v1599 = vunpack.c.l.b16 %v1237
    %v1600 = vunpack.c.h.b16 %v1237
    %v1601 = vunpack.c.l.b16 %v1238
    %v1602 = vunpack.c.h.b16 %v1238
    %v1603 = vunpack.c.l.b16 %v1239
    %v1604 = vunpack.c.h.b16 %v1239
    %v1605 = vunpack.c.l.b16 %v1240
    %v1606 = vunpack.c.h.b16 %v1240
    %v1607 = vunpack.c.l.b16 %v1241
    %v1608 = vunpack.c.h.b16 %v1241
    %v1609 = vunpack.c.l.b16 %v1242
    %v1610 = vunpack.c.h.b16 %v1242
    %v1611 = vunpack.c.l.b16 %v1243
    %v1612 = vunpack.c.h.b16 %v1243
    %v1613 = vunpack.c.l.b16 %v1244
    %v1614 = vunpack.c.h.b16 %v1244
    %v1615 = vunpack.c.l.b16 %v1245
    %v1616 = vunpack.c.h.b16 %v1245
    %v1617 = vunpack.c.l.b16 %v1246
    %v1618 = vunpack.c.h.b16 %v1246
    %v1619 = vunpack.c.l.b16 %v1247
    %v1620 = vunpack.c.h.b16 %v1247
    %v1621 = vunpack.c.l.b16 %v1248
    %v1622 = vunpack.c.h.b16 %v1248
    %v1623 = vunpack.c.l.b16 %v1249
    %v1624 = vunpack.c.h.b16 %v1249
    %v1625 = vunpack.c.l.b16 %v1250
    %v1626 = vunpack.c.h.b16 %v1250
    %v1627 = vunpack.c.l.b16 %v1251
    %v1628 = vunpack.c.h.b16 %v1251
    %v1629 = vunpack.c.l.b16 %v1252
    %v1630 = vunpack.c.h.b16 %v1252
    %v1631 = vunpack.c.l.b16 %v1253
    %v1632 = vunpack.c.h.b16 %v1253
    %v1633 = vunpack.c.l.b16 %v1254
    %v1634 = vunpack.c.h.b16 %v1254
    %v1635 = vunpack.c.l.b16 %v1255
    %v1636 = vunpack.c.h.b16 %v1255
    %v1637 = vunpack.c.l.b16 %v1256
    %v1638 = vunpack.c.h.b16 %v1256
    %v1639 = vunpack.c.l.b16 %v1257
    %v1640 = vunpack.c.h.b16 %v1257
    %v1641 = vunpack.c.l.b16 %v1258
    %v1642 = vunpack.c.h.b16 %v1258
    %v1643 = vunpack.c.l.b16 %v1259
    %v1644 = vunpack.c.h.b16 %v1259
    %v1645 = vunpack.c.l.b16 %v1260
    %v1646 = vunpack.c.h.b16 %v1260
    %v1647 = vunpack.c.l.b16 %v1261
    %v1648 = vunpack.c.h.b16 %v1261
    %v1649 = vunpack.c.l.b16 %v1262
    %v1650 = vunpack.c.h.b16 %v1262
    %v1651 = vunpack.c.l.b16 %v1263
    %v1652 = vunpack.c.h.b16 %v1263
    %v1653 = vunpack.c.l.b16 %v1264
    %v1654 = vunpack.c.h.b16 %v1264
    %v1655 = vunpack.c.l.b16 %v1265
    %v1656 = vunpack.c.h.b16 %v1265
    %v1657 = vunpack.c.l.b16 %v1266
    %v1658 = vunpack.c.h.b16 %v1266
    %v1659 = vunpack.c.l.b16 %v1267
    %v1660 = vunpack.c.h.b16 %v1267
    %v1661 = vunpack.c.l.b16 %v1268
    %v1662 = vunpack.c.h.b16 %v1268
    %v1663 = vunpack.c.l.b16 %v1269
    %v1664 = vunpack.c.h.b16 %v1269
    %v1665 = vunpack.c.l.b16 %v1270
    %v1666 = vunpack.c.h.b16 %v1270
    %v1667 = vpack.c.b16 %v1413, %v1411
    %v1668 = vpack.c.b16 %v1414, %v1412
    %v1669 = vpack.c.b16 %v1417, %v1415
    %v1670 = vpack.c.b16 %v1418, %v1416
    %v1671 = vpack.c.b16 %v1421, %v1419
    %v1672 = vpack.c.b16 %v1422, %v1420
    %v1673 = vpack.c.b16 %v1425, %v1423
    %v1674 = vpack.c.b16 %v1426, %v1424
    %v1675 = vpack.c.b16 %v1429, %v1427
    %v1676 = vpack.c.b16 %v1430, %v1428
    %v1677 = vpack.c.b16 %v1433, %v1431
    %v1678 = vpack.c.b16 %v1434, %v1432
    %v1679 = vpack.c.b16 %v1437, %v1435
    %v1680 = vpack.c.b16 %v1438, %v1436
    %v1681 = vpack.c.b16 %v1441, %v1439
    %v1682 = vpack.c.b16 %v1442, %v1440
    %v1683 = vpack.c.b16 %v1445, %v1443
    %v1684 = vpack.c.b16 %v1446, %v1444
    %v1685 = vpack.c.b16 %v1449, %v1447
    %v1686 = vpack.c.b16 %v1450, %v1448
    %v1687 = vpack.c.b16 %v1453, %v1451
    %v1688 = vpack.c.b16 %v1454, %v1452
    %v1689 = vpack.c.b16 %v1457, %v1455
    %v1690 = vpack.c.b16 %v1458, %v1456
    %v1691 = vpack.c.b16 %v1461, %v1459
    %v1692 = vpack.c.b16 %v1462, %v1460
    %v1693 = vpack.c.b16 %v1465, %v1463
    %v1694 = vpack.c.b16 %v1466, %v1464
    %v1695 = vpack.c.b16 %v1469, %v1467
    %v1696 = vpack.c.b16 %v1470, %v1468
    %v1697 = vpack.c.b16 %v1473, %v1471
    %v1698 = vpack.c.b16 %v1474, %v1472
    %v1699 = vpack.c.b16 %v1477, %v1475
    %v1700 = vpack.c.b16 %v1478, %v1476
    %v1701 = vpack.c.b16 %v1481, %v1479
    %v1702 = vpack.c.b16 %v1482, %v1480
    %v1703 = vpack.c.b16 %v1485, %v1483
    %v1704 = vpack.c.b16 %v1486, %v1484
    %v1705 = vpack.c.b16 %v1489, %v1487
    %v1706 = vpack.c.b16 %v1490, %v1488
    %v1707 = vpack.c.b16 %v1493, %v1491
    %v1708 = vpack.c.b16 %v1494, %v1492
    %v1709 = vpack.c.b16 %v1497, %v1495
    %v1710 = vpack.c.b16 %v1498, %v1496
    %v1711 = vpack.c.b16 %v1501, %v1499
    %v1712 = vpack.c.b16 %v1502, %v1500
    %v1713 = vpack.c.b16 %v1505, %v1503
    %v1714 = vpack.c.b16 %v1506, %v1504
    %v1715 = vpack.c.b16 %v1509, %v1507
    %v1716 = vpack.c.b16 %v1510, %v1508
    %v1717 = vpack.c.b16 %v1513, %v1511
    %v1718 = vpack.c.b16 %v1514, %v1512
    %v1719 = vpack.c.b16 %v1517, %v1515
    %v1720 = vpack.c.b16 %v1518, %v1516
    %v1721 = vpack.c.b16 %v1521, %v1519
    %v1722 = vpack.c.b16 %v1522, %v1520
    %v1723 = vpack.c.b16 %v1525, %v1523
    %v1724 = vpack.c.b16 %v1526, %v1524
    %v1725 = vpack.c.b16 %v1529, %v1527
    %v1726 = vpack.c.b16 %v1530, %v1528
    %v1727 = vpack.c.b16 %v1533, %v1531
    %v1728 = vpack.c.b16 %v1534, %v1532
    %v1729 = vpack.c.b16 %v1537, %v1535
    %v1730 = vpack.c.b16 %v1538, %v1536
    %v1731 = vpack.c.b16 %v1541, %v1539
    %v1732 = vpack.c.b16 %v1542, %v1540
    %v1733 = vpack.c.b16 %v1545, %v1543
    %v1734 = vpack.c.b16 %v1546, %v1544
    %v1735 = vpack.c.b16 %v1549, %v1547
    %v1736 = vpack.c.b16 %v1550, %v1548
    %v1737 = vpack.c.b16 %v1553, %v1551
    %v1738 = vpack.c.b16 %v1554, %v1552
    %v1739 = vpack.c.b16 %v1557, %v1555
    %v1740 = vpack.c.b16 %v1558, %v1556
    %v1741 = vpack.c.b16 %v1561, %v1559
    %v1742 = vpack.c.b16 %v1562, %v1560
    %v1743 = vpack.c.b16 %v1565, %v1563
    %v1744 = vpack.c.b16 %v1566, %v1564
    %v1745 = vpack.c.b16 %v1569, %v1567
    %v1746 = vpack.c.b16 %v1570, %v1568
    %v1747 = vpack.c.b16 %v1573, %v1571
    %v1748 = vpack.c.b16 %v1574, %v1572
    %v1749 = vpack.c.b16 %v1577, %v1575
    %v1750 = vpack.c.b16 %v1578, %v1576
    %v1751 = vpack.c.b16 %v1581, %v1579
    %v1752 = vpack.c.b16 %v1582, %v1580
    %v1753 = vpack.c.b16 %v1585, %v1583
    %v1754 = vpack.c.b16 %v1586, %v1584
    %v1755 = vpack.c.b16 %v1589, %v1587
    %v1756 = vpack.c.b16 %v1590, %v1588
    %v1757 = vpack.c.b16 %v1593, %v1591
    %v1758 = vpack.c.b16 %v1594, %v1592
    %v1759 = vpack.c.b16 %v1597, %v1595
    %v1760 = vpack.c.b16 %v1598, %v1596
    %v1761 = vpack.c.b16 %v1601, %v1599
    %v1762 = vpack.c.b16 %v1602, %v1600
    %v1763 = vpack.c.b16 %v1605, %v1603
    %v1764 = vpack.c.b16 %v1606, %v1604
    %v1765 = vpack.c.b16 %v1609, %v1607
    %v1766 = vpack.c.b16 %v1610, %v1608
    %v1767 = vpack.c.b16 %v1613, %v1611
    %v1768 = vpack.c.b16 %v1614, %v1612
    %v1769 = vpack.c.b16 %v1617, %v1615
    %v1770 = vpack.c.b16 %v1618, %v1616
    %v1771 = vpack.c.b16 %v1621, %v1619
    %v1772 = vpack.c.b16 %v1622, %v1620
    %v1773 = vpack.c.b16 %v1625, %v1623
    %v1774 = vpack.c.b16 %v1626, %v1624
    %v1775 = vpack.c.b16 %v1629, %v1627
    %v1776 = vpack.c.b16 %v1630, %v1628
    %v1777 = vpack.c.b16 %v1633, %v1631
    %v1778 = vpack.c.b16 %v1634, %v1632
    %v1779 = vpack.c.b16 %v1637, %v1635
    %v1780 = vpack.c.b16 %v1638, %v1636
    %v1781 = vpack.c.b16 %v1641, %v1639
    %v1782 = vpack.c.b16 %v1642, %v1640
    %v1783 = vpack.c.b16 %v1645, %v1643
    %v1784 = vpack.c.b16 %v1646, %v1644
    %v1785 = vpack.c.b16 %v1649, %v1647
    %v1786 = vpack.c.b16 %v1650, %v1648
    %v1787 = vpack.c.b16 %v1653, %v1651
    %v1788 = vpack.c.b16 %v1654, %v1652
    %v1789 = vpack.c.b16 %v1657, %v1655
    %v1790 = vpack.c.b16 %v1658, %v1656
    %v1791 = vpack.c.b16 %v1661, %v1659
    %v1792 = vpack.c.b16 %v1662, %v1660
    %v1793 = vpack.c.b16 %v1665, %v1663
    %v1794 = vpack.c.b16 %v1666, %v1664
    %1923 = vmatprep.subr.bf16.mxu0 %v1668
    %1924 = vmatpush1.bf16.msra.mxu0 %v1667
    %1925 = vmatprep.subr.bf16.mxu0 %v1670
    %1926 = vmatpush1.bf16.msra.mxu0 %v1669
    %1927 = vmatprep.subr.bf16.mxu0 %v1672
    %1928 = vmatpush1.bf16.msra.mxu0 %v1671
    %1929 = vmatprep.subr.bf16.mxu0 %v1674
    %1930 = vmatpush1.bf16.msra.mxu0 %v1673
    %1931 = vmatprep.subr.bf16.mxu0 %v1676
    %1932 = vmatpush1.bf16.msra.mxu0 %v1675
    %1933 = vmatprep.subr.bf16.mxu0 %v1678
    %1934 = vmatpush1.bf16.msra.mxu0 %v1677
    %1935 = vmatprep.subr.bf16.mxu0 %v1680
    %1936 = vmatpush1.bf16.msra.mxu0 %v1679
    %1937 = vmatprep.subr.bf16.mxu0 %v1682
    %1938 = vmatpush1.bf16.msra.mxu0 %v1681
    %1939 = vmatprep.subr.bf16.mxu0 %v1684
    %1940 = vmatpush1.bf16.msra.mxu0 %v1683
    %1941 = vmatprep.subr.bf16.mxu0 %v1686
    %1942 = vmatpush1.bf16.msra.mxu0 %v1685
    %1943 = vmatprep.subr.bf16.mxu0 %v1688
    %1944 = vmatpush1.bf16.msra.mxu0 %v1687
    %1945 = vmatprep.subr.bf16.mxu0 %v1690
    %1946 = vmatpush1.bf16.msra.mxu0 %v1689
    %1947 = vmatprep.subr.bf16.mxu0 %v1692
    %1948 = vmatpush1.bf16.msra.mxu0 %v1691
    %1949 = vmatprep.subr.bf16.mxu0 %v1694
    %1950 = vmatpush1.bf16.msra.mxu0 %v1693
    %1951 = vmatprep.subr.bf16.mxu0 %v1696
    %1952 = vmatpush1.bf16.msra.mxu0 %v1695
    %1953 = vmatprep.subr.bf16.mxu0 %v1698
    %1954 = vmatpush1.bf16.msra.mxu0 %v1697
    %1955 = vmatprep.mubr.bf16.mxu0 %v278
    %1956 = vmatmul.mubr.bf16.gmra.mrb[0].mxu0 %v277
    %v1957 = vpop.f32.mrb[0].mxu0
    %v1958 = vadd.f32 %v1276, %v1957
    %v1959 = vpop.f32.mrb[0].mxu0
    %v1960 = vadd.f32 %v1280, %v1959
    %v1961 = vpop.f32.mrb[0].mxu0
    %v1962 = vadd.f32 %v1276, %v1961
    %v1963 = vpop.f32.mrb[0].mxu0
    %v1964 = vadd.f32 %v1280, %v1963
    %1965 = vdwg.mxu0
    %1966 = vmatprep.subr.bf16.mxu0 %v1700
    %1967 = vmatpush1.bf16.msra.mxu0 %v1699
    %1968 = vmatprep.subr.bf16.mxu0 %v1702
    %1969 = vmatpush1.bf16.msra.mxu0 %v1701
    %1970 = vmatprep.subr.bf16.mxu0 %v1704
    %1971 = vmatpush1.bf16.msra.mxu0 %v1703
    %1972 = vmatprep.subr.bf16.mxu0 %v1706
    %1973 = vmatpush1.bf16.msra.mxu0 %v1705
    %1974 = vmatprep.subr.bf16.mxu0 %v1708
    %1975 = vmatpush1.bf16.msra.mxu0 %v1707
    %1976 = vmatprep.subr.bf16.mxu0 %v1710
    %1977 = vmatpush1.bf16.msra.mxu0 %v1709
    %1978 = vmatprep.subr.bf16.mxu0 %v1712
    %1979 = vmatpush1.bf16.msra.mxu0 %v1711
    %1980 = vmatprep.subr.bf16.mxu0 %v1714
    %1981 = vmatpush1.bf16.msra.mxu0 %v1713
    %1982 = vmatprep.subr.bf16.mxu0 %v1716
    %1983 = vmatpush1.bf16.msra.mxu0 %v1715
    %1984 = vmatprep.subr.bf16.mxu0 %v1718
    %1985 = vmatpush1.bf16.msra.mxu0 %v1717
    %1986 = vmatprep.subr.bf16.mxu0 %v1720
    %1987 = vmatpush1.bf16.msra.mxu0 %v1719
    %1988 = vmatprep.subr.bf16.mxu0 %v1722
    %1989 = vmatpush1.bf16.msra.mxu0 %v1721
    %1990 = vmatprep.subr.bf16.mxu0 %v1724
    %1991 = vmatpush1.bf16.msra.mxu0 %v1723
    %1992 = vmatprep.subr.bf16.mxu0 %v1726
    %1993 = vmatpush1.bf16.msra.mxu0 %v1725
    %1994 = vmatprep.subr.bf16.mxu0 %v1728
    %1995 = vmatpush1.bf16.msra.mxu0 %v1727
    %1996 = vmatprep.subr.bf16.mxu0 %v1730
    %1997 = vmatpush1.bf16.msra.mxu0 %v1729
    %1998 = vmatprep.mubr.bf16.mxu0 %v280
    %1999 = vmatmul.mubr.bf16.gmra.mrb[0].mxu0 %v279
    %v2000 = vpop.f32.mrb[0].mxu0
    %v2001 = vadd.f32 %v1958, %v2000
    %v2002 = vpop.f32.mrb[0].mxu0
    %v2003 = vadd.f32 %v1960, %v2002
    %v2004 = vpop.f32.mrb[0].mxu0
    %v2005 = vadd.f32 %v1962, %v2004
    %v2006 = vpop.f32.mrb[0].mxu0
    %v2007 = vadd.f32 %v1964, %v2006
    %2008 = vdwg.mxu0
    %2009 = vmatprep.subr.bf16.mxu0 %v1732
    %2010 = vmatpush1.bf16.msra.mxu0 %v1731
    %2011 = vmatprep.subr.bf16.mxu0 %v1734
    %2012 = vmatpush1.bf16.msra.mxu0 %v1733
    %2013 = vmatprep.subr.bf16.mxu0 %v1736
    %2014 = vmatpush1.bf16.msra.mxu0 %v1735
    %2015 = vmatprep.subr.bf16.mxu0 %v1738
    %2016 = vmatpush1.bf16.msra.mxu0 %v1737
    %2017 = vmatprep.subr.bf16.mxu0 %v1740
    %2018 = vmatpush1.bf16.msra.mxu0 %v1739
    %2019 = vmatprep.subr.bf16.mxu0 %v1742
    %2020 = vmatpush1.bf16.msra.mxu0 %v1741
    %2021 = vmatprep.subr.bf16.mxu0 %v1744
    %2022 = vmatpush1.bf16.msra.mxu0 %v1743
    %2023 = vmatprep.subr.bf16.mxu0 %v1746
    %2024 = vmatpush1.bf16.msra.mxu0 %v1745
    %2025 = vmatprep.subr.bf16.mxu0 %v1748
    %2026 = vmatpush1.bf16.msra.mxu0 %v1747
    %2027 = vmatprep.subr.bf16.mxu0 %v1750
    %2028 = vmatpush1.bf16.msra.mxu0 %v1749
    %2029 = vmatprep.subr.bf16.mxu0 %v1752
    %2030 = vmatpush1.bf16.msra.mxu0 %v1751
    %2031 = vmatprep.subr.bf16.mxu0 %v1754
    %2032 = vmatpush1.bf16.msra.mxu0 %v1753
    %2033 = vmatprep.subr.bf16.mxu0 %v1756
    %2034 = vmatpush1.bf16.msra.mxu0 %v1755
    %2035 = vmatprep.subr.bf16.mxu0 %v1758
    %2036 = vmatpush1.bf16.msra.mxu0 %v1757
    %2037 = vmatprep.subr.bf16.mxu0 %v1760
    %2038 = vmatpush1.bf16.msra.mxu0 %v1759
    %2039 = vmatprep.subr.bf16.mxu0 %v1762
    %2040 = vmatpush1.bf16.msra.mxu0 %v1761
    %2041 = vmatprep.mubr.bf16.mxu0 %v282
    %2042 = vmatmul.mubr.bf16.gmra.mrb[0].mxu0 %v281
    %v2043 = vpop.f32.mrb[0].mxu0
    %v2044 = vadd.f32 %v2001, %v2043
    %v2045 = vpop.f32.mrb[0].mxu0
    %v2046 = vadd.f32 %v2003, %v2045
    %v2047 = vpop.f32.mrb[0].mxu0
    %v2048 = vadd.f32 %v2005, %v2047
    %v2049 = vpop.f32.mrb[0].mxu0
    %v2050 = vadd.f32 %v2007, %v2049
    %2051 = vdwg.mxu0
    %2052 = vmatprep.subr.bf16.mxu0 %v1764
    %2053 = vmatpush1.bf16.msra.mxu0 %v1763
    %2054 = vmatprep.subr.bf16.mxu0 %v1766
    %2055 = vmatpush1.bf16.msra.mxu0 %v1765
    %2056 = vmatprep.subr.bf16.mxu0 %v1768
    %2057 = vmatpush1.bf16.msra.mxu0 %v1767
    %2058 = vmatprep.subr.bf16.mxu0 %v1770
    %2059 = vmatpush1.bf16.msra.mxu0 %v1769
    %2060 = vmatprep.subr.bf16.mxu0 %v1772
    %2061 = vmatpush1.bf16.msra.mxu0 %v1771
    %2062 = vmatprep.subr.bf16.mxu0 %v1774
    %2063 = vmatpush1.bf16.msra.mxu0 %v1773
    %2064 = vmatprep.subr.bf16.mxu0 %v1776
    %2065 = vmatpush1.bf16.msra.mxu0 %v1775
    %2066 = vmatprep.subr.bf16.mxu0 %v1778
    %2067 = vmatpush1.bf16.msra.mxu0 %v1777
    %2068 = vmatprep.subr.bf16.mxu0 %v1780
    %2069 = vmatpush1.bf16.msra.mxu0 %v1779
    %2070 = vmatprep.subr.bf16.mxu0 %v1782
    %2071 = vmatpush1.bf16.msra.mxu0 %v1781
    %2072 = vmatprep.subr.bf16.mxu0 %v1784
    %2073 = vmatpush1.bf16.msra.mxu0 %v1783
    %2074 = vmatprep.subr.bf16.mxu0 %v1786
    %2075 = vmatpush1.bf16.msra.mxu0 %v1785
    %2076 = vmatprep.subr.bf16.mxu0 %v1788
    %2077 = vmatpush1.bf16.msra.mxu0 %v1787
    %2078 = vmatprep.subr.bf16.mxu0 %v1790
    %2079 = vmatpush1.bf16.msra.mxu0 %v1789
    %2080 = vmatprep.subr.bf16.mxu0 %v1792
    %2081 = vmatpush1.bf16.msra.mxu0 %v1791
    %2082 = vmatprep.subr.bf16.mxu0 %v1794
    %2083 = vmatpush1.bf16.msra.mxu0 %v1793
    %2084 = vmatprep.mubr.bf16.mxu0 %v284
    %2085 = vmatmul.mubr.bf16.gmra.mrb[0].mxu0 %v283
    %v2086 = vpop.f32.mrb[0].mxu0
    %v2087 = vadd.f32 %v2044, %v2086
    %v2088 = vpop.f32.mrb[0].mxu0
    %v2089 = vadd.f32 %v2046, %v2088
    %v2090 = vpop.f32.mrb[0].mxu0
    %v2091 = vadd.f32 %v2048, %v2090
    %v2092 = vpop.f32.mrb[0].mxu0
    %v2093 = vadd.f32 %v2050, %v2092
    %2094 = vdwg.mxu0
    %v2095 = vtanh.pop %v2087
    %v2096 = vtanh.pop %v2089
    %v2097 = vtanh.pop %v2091
    %v2098 = vtanh.pop %v2093
    %v2099 = vpack.c.bf16 %v2097, %v2095
    %v2100 = vpack.c.bf16 %v2098, %v2096
    %v2101 = vld [vmem:[#allocation9 + $0x80] sm:$0xf]
    %v2102 = vld [vmem:[#allocation9 + $0x84] sm:$0xf]
    %v2103 = vld [vmem:[#allocation9 + $0x88] sm:$0xf]
    %v2104 = vld [vmem:[#allocation9 + $0x8c] sm:$0xf]
    %v2105 = vld [vmem:[#allocation9 + $0x90] sm:$0xf]
    %v2106 = vld [vmem:[#allocation9 + $0x94] sm:$0xf]
    %v2107 = vld [vmem:[#allocation9 + $0x98] sm:$0xf]
    %v2108 = vld [vmem:[#allocation9 + $0x9c] sm:$0xf]
    %v2109 = vld [vmem:[#allocation9 + $0xa0] sm:$0xf]
    %v2110 = vld [vmem:[#allocation9 + $0xa4] sm:$0xf]
    %v2111 = vld [vmem:[#allocation9 + $0xa8] sm:$0xf]
    %v2112 = vld [vmem:[#allocation9 + $0xac] sm:$0xf]
    %v2113 = vld [vmem:[#allocation9 + $0xb0] sm:$0xf]
    %v2114 = vld [vmem:[#allocation9 + $0xb4] sm:$0xf]
    %v2115 = vld [vmem:[#allocation9 + $0xb8] sm:$0xf]
    %v2116 = vld [vmem:[#allocation9 + $0xbc] sm:$0xf]
    %v2117 = vld [vmem:[#allocation9 + $0xc0] sm:$0xf]
    %v2118 = vld [vmem:[#allocation9 + $0xc4] sm:$0xf]
    %v2119 = vld [vmem:[#allocation9 + $0xc8] sm:$0xf]
    %v2120 = vld [vmem:[#allocation9 + $0xcc] sm:$0xf]
    %v2121 = vld [vmem:[#allocation9 + $0xd0] sm:$0xf]
    %v2122 = vld [vmem:[#allocation9 + $0xd4] sm:$0xf]
    %v2123 = vld [vmem:[#allocation9 + $0xd8] sm:$0xf]
    %v2124 = vld [vmem:[#allocation9 + $0xdc] sm:$0xf]
    %v2125 = vld [vmem:[#allocation9 + $0xe0] sm:$0xf]
    %v2126 = vld [vmem:[#allocation9 + $0xe4] sm:$0xf]
    %v2127 = vld [vmem:[#allocation9 + $0xe8] sm:$0xf]
    %v2128 = vld [vmem:[#allocation9 + $0xec] sm:$0xf]
    %v2129 = vld [vmem:[#allocation9 + $0xf0] sm:$0xf]
    %v2130 = vld [vmem:[#allocation9 + $0xf4] sm:$0xf]
    %v2131 = vld [vmem:[#allocation9 + $0xf8] sm:$0xf]
    %v2132 = vld [vmem:[#allocation9 + $0xfc] sm:$0xf]
    %v2165 = vunpack.c.l.b16 %v2101
    %v2166 = vunpack.c.l.b16 %v2102
    %v2167 = vunpack.c.l.b16 %v2103
    %v2168 = vunpack.c.l.b16 %v2104
    %v2169 = vunpack.c.l.b16 %v2105
    %v2170 = vunpack.c.l.b16 %v2106
    %v2171 = vunpack.c.l.b16 %v2107
    %v2172 = vunpack.c.l.b16 %v2108
    %v2173 = vunpack.c.l.b16 %v2109
    %v2174 = vunpack.c.l.b16 %v2110
    %v2175 = vunpack.c.l.b16 %v2111
    %v2176 = vunpack.c.l.b16 %v2112
    %v2177 = vunpack.c.l.b16 %v2113
    %v2178 = vunpack.c.l.b16 %v2114
    %v2179 = vunpack.c.l.b16 %v2115
    %v2180 = vunpack.c.l.b16 %v2116
    %v2181 = vunpack.c.l.b16 %v2117
    %v2182 = vunpack.c.l.b16 %v2118
    %v2183 = vunpack.c.l.b16 %v2119
    %v2184 = vunpack.c.l.b16 %v2120
    %v2185 = vunpack.c.l.b16 %v2121
    %v2186 = vunpack.c.l.b16 %v2122
    %v2187 = vunpack.c.l.b16 %v2123
    %v2188 = vunpack.c.l.b16 %v2124
    %v2189 = vunpack.c.l.b16 %v2125
    %v2190 = vunpack.c.l.b16 %v2126
    %v2191 = vunpack.c.l.b16 %v2127
    %v2192 = vunpack.c.l.b16 %v2128
    %v2193 = vunpack.c.l.b16 %v2129
    %v2194 = vunpack.c.l.b16 %v2130
    %v2195 = vunpack.c.l.b16 %v2131
    %v2196 = vunpack.c.l.b16 %v2132
    %v2197 = vpack.c.b16 %v2166, %v2165
    %v2198 = vpack.c.b16 %v2168, %v2167
    %v2199 = vpack.c.b16 %v2170, %v2169
    %v2200 = vpack.c.b16 %v2172, %v2171
    %v2201 = vpack.c.b16 %v2174, %v2173
    %v2202 = vpack.c.b16 %v2176, %v2175
    %v2203 = vpack.c.b16 %v2178, %v2177
    %v2204 = vpack.c.b16 %v2180, %v2179
    %v2205 = vpack.c.b16 %v2182, %v2181
    %v2206 = vpack.c.b16 %v2184, %v2183
    %v2207 = vpack.c.b16 %v2186, %v2185
    %v2208 = vpack.c.b16 %v2188, %v2187
    %v2209 = vpack.c.b16 %v2190, %v2189
    %v2210 = vpack.c.b16 %v2192, %v2191
    %v2211 = vpack.c.b16 %v2194, %v2193
    %v2212 = vpack.c.b16 %v2196, %v2195
    %2229 = vmatprep.subr.bf16.mxu0 0
    %2230 = vmatpush1.bf16.msra.mxu0 %v2197
    %2231 = vmatprep.subr.bf16.mxu0 0
    %2232 = vmatpush1.bf16.msra.mxu0 %v2198
    %2233 = vmatprep.subr.bf16.mxu0 0
    %2234 = vmatpush1.bf16.msra.mxu0 %v2199
    %2235 = vmatprep.subr.bf16.mxu0 0
    %2236 = vmatpush1.bf16.msra.mxu0 %v2200
    %2237 = vmatprep.subr.bf16.mxu0 0
    %2238 = vmatpush1.bf16.msra.mxu0 %v2201
    %2239 = vmatprep.subr.bf16.mxu0 0
    %2240 = vmatpush1.bf16.msra.mxu0 %v2202
    %2241 = vmatprep.subr.bf16.mxu0 0
    %2242 = vmatpush1.bf16.msra.mxu0 %v2203
    %2243 = vmatprep.subr.bf16.mxu0 0
    %2244 = vmatpush1.bf16.msra.mxu0 %v2204
    %2245 = vmatprep.subr.bf16.mxu0 0
    %2246 = vmatpush1.bf16.msra.mxu0 %v2205
    %2247 = vmatprep.subr.bf16.mxu0 0
    %2248 = vmatpush1.bf16.msra.mxu0 %v2206
    %2249 = vmatprep.subr.bf16.mxu0 0
    %2250 = vmatpush1.bf16.msra.mxu0 %v2207
    %2251 = vmatprep.subr.bf16.mxu0 0
    %2252 = vmatpush1.bf16.msra.mxu0 %v2208
    %2253 = vmatprep.subr.bf16.mxu0 0
    %2254 = vmatpush1.bf16.msra.mxu0 %v2209
    %2255 = vmatprep.subr.bf16.mxu0 0
    %2256 = vmatpush1.bf16.msra.mxu0 %v2210
    %2257 = vmatprep.subr.bf16.mxu0 0
    %2258 = vmatpush1.bf16.msra.mxu0 %v2211
    %2259 = vmatprep.subr.bf16.mxu0 0
    %2260 = vmatpush1.bf16.msra.mxu0 %v2212
    %2261 = vmatprep.mubr.bf16.mxu0 %v2100
    %2262 = vmatmul.mubr.bf16.gmra.mrb[0].mxu0 %v2099
    %v2263 = vpop.f32.mrb[0].mxu0
    %v2264 = vadd.f32 0.0, %v2263
    %v2265 = vpop.f32.mrb[0].mxu0
    %v2266 = vpop.f32.mrb[0].mxu0
    %v2267 = vadd.f32 0.0, %v2266
    %v2268 = vpop.f32.mrb[0].mxu0
    %2269 = vdwg.mxu0
    %v2302 = vunpack.c.l.b16 %v1111
    %v2303 = vunpack.c.l.b16 %v1112
    %v2304 = vunpack.c.l.b16 %v1113
    %v2305 = vunpack.c.l.b16 %v1114
    %v2306 = vunpack.c.l.b16 %v1115
    %v2307 = vunpack.c.l.b16 %v1116
    %v2308 = vunpack.c.l.b16 %v1117
    %v2309 = vunpack.c.l.b16 %v1118
    %v2310 = vunpack.c.l.b16 %v1119
    %v2311 = vunpack.c.l.b16 %v1120
    %v2312 = vunpack.c.l.b16 %v1121
    %v2313 = vunpack.c.l.b16 %v1122
    %v2314 = vunpack.c.l.b16 %v1123
    %v2315 = vunpack.c.l.b16 %v1124
    %v2316 = vunpack.c.l.b16 %v1125
    %v2317 = vunpack.c.l.b16 %v1126
    %v2318 = vunpack.c.l.b16 %v1127
    %v2319 = vunpack.c.l.b16 %v1128
    %v2320 = vunpack.c.l.b16 %v1129
    %v2321 = vunpack.c.l.b16 %v1130
    %v2322 = vunpack.c.l.b16 %v1131
    %v2323 = vunpack.c.l.b16 %v1132
    %v2324 = vunpack.c.l.b16 %v1133
    %v2325 = vunpack.c.l.b16 %v1134
    %v2326 = vunpack.c.l.b16 %v1135
    %v2327 = vunpack.c.l.b16 %v1136
    %v2328 = vunpack.c.l.b16 %v1137
    %v2329 = vunpack.c.l.b16 %v1138
    %v2330 = vunpack.c.l.b16 %v1139
    %v2331 = vunpack.c.l.b16 %v1140
    %v2332 = vunpack.c.l.b16 %v1141
    %v2333 = vunpack.c.l.b16 %v1142
    %v2334 = vpack.c.b16 %v2303, %v2302
    %v2335 = vpack.c.b16 %v2305, %v2304
    %v2336 = vpack.c.b16 %v2307, %v2306
    %v2337 = vpack.c.b16 %v2309, %v2308
    %v2338 = vpack.c.b16 %v2311, %v2310
    %v2339 = vpack.c.b16 %v2313, %v2312
    %v2340 = vpack.c.b16 %v2315, %v2314
    %v2341 = vpack.c.b16 %v2317, %v2316
    %v2342 = vpack.c.b16 %v2319, %v2318
    %v2343 = vpack.c.b16 %v2321, %v2320
    %v2344 = vpack.c.b16 %v2323, %v2322
    %v2345 = vpack.c.b16 %v2325, %v2324
    %v2346 = vpack.c.b16 %v2327, %v2326
    %v2347 = vpack.c.b16 %v2329, %v2328
    %v2348 = vpack.c.b16 %v2331, %v2330
    %v2349 = vpack.c.b16 %v2333, %v2332
    %2366 = vmatprep.subr.bf16.mxu0 0
    %2367 = vmatpush1.bf16.msra.mxu0 %v2334
    %2368 = vmatprep.subr.bf16.mxu0 0
    %2369 = vmatpush1.bf16.msra.mxu0 %v2335
    %2370 = vmatprep.subr.bf16.mxu0 0
    %2371 = vmatpush1.bf16.msra.mxu0 %v2336
    %2372 = vmatprep.subr.bf16.mxu0 0
    %2373 = vmatpush1.bf16.msra.mxu0 %v2337
    %2374 = vmatprep.subr.bf16.mxu0 0
    %2375 = vmatpush1.bf16.msra.mxu0 %v2338
    %2376 = vmatprep.subr.bf16.mxu0 0
    %2377 = vmatpush1.bf16.msra.mxu0 %v2339
    %2378 = vmatprep.subr.bf16.mxu0 0
    %2379 = vmatpush1.bf16.msra.mxu0 %v2340
    %2380 = vmatprep.subr.bf16.mxu0 0
    %2381 = vmatpush1.bf16.msra.mxu0 %v2341
    %2382 = vmatprep.subr.bf16.mxu0 0
    %2383 = vmatpush1.bf16.msra.mxu0 %v2342
    %2384 = vmatprep.subr.bf16.mxu0 0
    %2385 = vmatpush1.bf16.msra.mxu0 %v2343
    %2386 = vmatprep.subr.bf16.mxu0 0
    %2387 = vmatpush1.bf16.msra.mxu0 %v2344
    %2388 = vmatprep.subr.bf16.mxu0 0
    %2389 = vmatpush1.bf16.msra.mxu0 %v2345
    %2390 = vmatprep.subr.bf16.mxu0 0
    %2391 = vmatpush1.bf16.msra.mxu0 %v2346
    %2392 = vmatprep.subr.bf16.mxu0 0
    %2393 = vmatpush1.bf16.msra.mxu0 %v2347
    %2394 = vmatprep.subr.bf16.mxu0 0
    %2395 = vmatpush1.bf16.msra.mxu0 %v2348
    %2396 = vmatprep.subr.bf16.mxu0 0
    %2397 = vmatpush1.bf16.msra.mxu0 %v2349
    %2398 = vmatprep.mubr.bf16.mxu0 %v1110
    %2399 = vmatmul.mubr.bf16.gmra.mrb[0].mxu0 %v1109
    %v2400 = vpop.f32.mrb[0].mxu0
    %v2401 = vadd.f32 %v2264, %v2400
    %v2402 = vpop.f32.mrb[0].mxu0
    %v2403 = vpop.f32.mrb[0].mxu0
    %v2404 = vadd.f32 %v2267, %v2403
    %v2405 = vpop.f32.mrb[0].mxu0
    %2406 = vdwg.mxu0
    %v2407 = vld [vmem:[#allocation6 + $0x10] sm:$0xff]
    %v2408 = vld [vmem:[#allocation6 + $0x30] sm:$0xff]
    %v2409 = vld [vmem:[#allocation6 + $0x50] sm:$0xff]
    %v2410 = vld [vmem:[#allocation6 + $0x70] sm:$0xff]
    %v2411 = vld [vmem:[#allocation6 + $0x90] sm:$0xff]
    %v2412 = vld [vmem:[#allocation6 + $0xb0] sm:$0xff]
    %v2413 = vld [vmem:[#allocation6 + $0xd0] sm:$0xff]
    %v2414 = vld [vmem:[#allocation6 + $0xf0] sm:$0xff]
    %v2415 = vld [vmem:[#allocation6 + $0x110] sm:$0xff]
    %v2416 = vld [vmem:[#allocation6 + $0x130] sm:$0xff]
    %v2417 = vld [vmem:[#allocation6 + $0x150] sm:$0xff]
    %v2418 = vld [vmem:[#allocation6 + $0x170] sm:$0xff]
    %v2419 = vld [vmem:[#allocation6 + $0x190] sm:$0xff]
    %v2420 = vld [vmem:[#allocation6 + $0x1b0] sm:$0xff]
    %v2421 = vld [vmem:[#allocation6 + $0x1d0] sm:$0xff]
    %v2422 = vld [vmem:[#allocation6 + $0x1f0] sm:$0xff]
    %v2423 = vld [vmem:[#allocation6 + $0x210] sm:$0xff]
    %v2424 = vld [vmem:[#allocation6 + $0x230] sm:$0xff]
    %v2425 = vld [vmem:[#allocation6 + $0x250] sm:$0xff]
    %v2426 = vld [vmem:[#allocation6 + $0x270] sm:$0xff]
    %v2427 = vld [vmem:[#allocation6 + $0x290] sm:$0xff]
    %v2428 = vld [vmem:[#allocation6 + $0x2b0] sm:$0xff]
    %v2429 = vld [vmem:[#allocation6 + $0x2d0] sm:$0xff]
    %v2430 = vld [vmem:[#allocation6 + $0x2f0] sm:$0xff]
    %v2431 = vld [vmem:[#allocation6 + $0x310] sm:$0xff]
    %v2432 = vld [vmem:[#allocation6 + $0x330] sm:$0xff]
    %v2433 = vld [vmem:[#allocation6 + $0x350] sm:$0xff]
    %v2434 = vld [vmem:[#allocation6 + $0x370] sm:$0xff]
    %v2435 = vld [vmem:[#allocation6 + $0x390] sm:$0xff]
    %v2436 = vld [vmem:[#allocation6 + $0x3b0] sm:$0xff]
    %v2437 = vld [vmem:[#allocation6 + $0x3d0] sm:$0xff]
    %v2438 = vld [vmem:[#allocation6 + $0x3f0] sm:$0xff]
    %v2439 = vld [vmem:[#allocation6 + $0x410] sm:$0xff]
    %v2440 = vld [vmem:[#allocation6 + $0x430] sm:$0xff]
    %v2441 = vld [vmem:[#allocation6 + $0x450] sm:$0xff]
    %v2442 = vld [vmem:[#allocation6 + $0x470] sm:$0xff]
    %v2443 = vld [vmem:[#allocation6 + $0x490] sm:$0xff]
    %v2444 = vld [vmem:[#allocation6 + $0x4b0] sm:$0xff]
    %v2445 = vld [vmem:[#allocation6 + $0x4d0] sm:$0xff]
    %v2446 = vld [vmem:[#allocation6 + $0x4f0] sm:$0xff]
    %v2447 = vld [vmem:[#allocation6 + $0x510] sm:$0xff]
    %v2448 = vld [vmem:[#allocation6 + $0x530] sm:$0xff]
    %v2449 = vld [vmem:[#allocation6 + $0x550] sm:$0xff]
    %v2450 = vld [vmem:[#allocation6 + $0x570] sm:$0xff]
    %v2451 = vld [vmem:[#allocation6 + $0x590] sm:$0xff]
    %v2452 = vld [vmem:[#allocation6 + $0x5b0] sm:$0xff]
    %v2453 = vld [vmem:[#allocation6 + $0x5d0] sm:$0xff]
    %v2454 = vld [vmem:[#allocation6 + $0x5f0] sm:$0xff]
    %v2455 = vld [vmem:[#allocation6 + $0x610] sm:$0xff]
    %v2456 = vld [vmem:[#allocation6 + $0x630] sm:$0xff]
    %v2457 = vld [vmem:[#allocation6 + $0x650] sm:$0xff]
    %v2458 = vld [vmem:[#allocation6 + $0x670] sm:$0xff]
    %v2459 = vld [vmem:[#allocation6 + $0x690] sm:$0xff]
    %v2460 = vld [vmem:[#allocation6 + $0x6b0] sm:$0xff]
    %v2461 = vld [vmem:[#allocation6 + $0x6d0] sm:$0xff]
    %v2462 = vld [vmem:[#allocation6 + $0x6f0] sm:$0xff]
    %v2463 = vld [vmem:[#allocation6 + $0x710] sm:$0xff]
    %v2464 = vld [vmem:[#allocation6 + $0x730] sm:$0xff]
    %v2465 = vld [vmem:[#allocation6 + $0x750] sm:$0xff]
    %v2466 = vld [vmem:[#allocation6 + $0x770] sm:$0xff]
    %v2467 = vld [vmem:[#allocation6 + $0x790] sm:$0xff]
    %v2468 = vld [vmem:[#allocation6 + $0x7b0] sm:$0xff]
    %v2469 = vld [vmem:[#allocation6 + $0x7d0] sm:$0xff]
    %v2470 = vld [vmem:[#allocation6 + $0x7f0] sm:$0xff]
    %v2471 = vld [vmem:[#allocation6 + $0x810] sm:$0xff]
    %v2472 = vld [vmem:[#allocation6 + $0x830] sm:$0xff]
    %v2473 = vld [vmem:[#allocation6 + $0x850] sm:$0xff]
    %v2474 = vld [vmem:[#allocation6 + $0x870] sm:$0xff]
    %v2475 = vld [vmem:[#allocation6 + $0x890] sm:$0xff]
    %v2476 = vld [vmem:[#allocation6 + $0x8b0] sm:$0xff]
    %v2477 = vld [vmem:[#allocation6 + $0x8d0] sm:$0xff]
    %v2478 = vld [vmem:[#allocation6 + $0x8f0] sm:$0xff]
    %v2479 = vld [vmem:[#allocation6 + $0x910] sm:$0xff]
    %v2480 = vld [vmem:[#allocation6 + $0x930] sm:$0xff]
    %v2481 = vld [vmem:[#allocation6 + $0x950] sm:$0xff]
    %v2482 = vld [vmem:[#allocation6 + $0x970] sm:$0xff]
    %v2483 = vld [vmem:[#allocation6 + $0x990] sm:$0xff]
    %v2484 = vld [vmem:[#allocation6 + $0x9b0] sm:$0xff]
    %v2485 = vld [vmem:[#allocation6 + $0x9d0] sm:$0xff]
    %v2486 = vld [vmem:[#allocation6 + $0x9f0] sm:$0xff]
    %v2487 = vld [vmem:[#allocation6 + $0xa10] sm:$0xff]
    %v2488 = vld [vmem:[#allocation6 + $0xa30] sm:$0xff]
    %v2489 = vld [vmem:[#allocation6 + $0xa50] sm:$0xff]
    %v2490 = vld [vmem:[#allocation6 + $0xa70] sm:$0xff]
    %v2491 = vld [vmem:[#allocation6 + $0xa90] sm:$0xff]
    %v2492 = vld [vmem:[#allocation6 + $0xab0] sm:$0xff]
    %v2493 = vld [vmem:[#allocation6 + $0xad0] sm:$0xff]
    %v2494 = vld [vmem:[#allocation6 + $0xaf0] sm:$0xff]
    %v2495 = vld [vmem:[#allocation6 + $0xb10] sm:$0xff]
    %v2496 = vld [vmem:[#allocation6 + $0xb30] sm:$0xff]
    %v2497 = vld [vmem:[#allocation6 + $0xb50] sm:$0xff]
    %v2498 = vld [vmem:[#allocation6 + $0xb70] sm:$0xff]
    %v2499 = vld [vmem:[#allocation6 + $0xb90] sm:$0xff]
    %v2500 = vld [vmem:[#allocation6 + $0xbb0] sm:$0xff]
    %v2501 = vld [vmem:[#allocation6 + $0xbd0] sm:$0xff]
    %v2502 = vld [vmem:[#allocation6 + $0xbf0] sm:$0xff]
    %v2503 = vld [vmem:[#allocation6 + $0xc10] sm:$0xff]
    %v2504 = vld [vmem:[#allocation6 + $0xc30] sm:$0xff]
    %v2505 = vld [vmem:[#allocation6 + $0xc50] sm:$0xff]
    %v2506 = vld [vmem:[#allocation6 + $0xc70] sm:$0xff]
    %v2507 = vld [vmem:[#allocation6 + $0xc90] sm:$0xff]
    %v2508 = vld [vmem:[#allocation6 + $0xcb0] sm:$0xff]
    %v2509 = vld [vmem:[#allocation6 + $0xcd0] sm:$0xff]
    %v2510 = vld [vmem:[#allocation6 + $0xcf0] sm:$0xff]
    %v2511 = vld [vmem:[#allocation6 + $0xd10] sm:$0xff]
    %v2512 = vld [vmem:[#allocation6 + $0xd30] sm:$0xff]
    %v2513 = vld [vmem:[#allocation6 + $0xd50] sm:$0xff]
    %v2514 = vld [vmem:[#allocation6 + $0xd70] sm:$0xff]
    %v2515 = vld [vmem:[#allocation6 + $0xd90] sm:$0xff]
    %v2516 = vld [vmem:[#allocation6 + $0xdb0] sm:$0xff]
    %v2517 = vld [vmem:[#allocation6 + $0xdd0] sm:$0xff]
    %v2518 = vld [vmem:[#allocation6 + $0xdf0] sm:$0xff]
    %v2519 = vld [vmem:[#allocation6 + $0xe10] sm:$0xff]
    %v2520 = vld [vmem:[#allocation6 + $0xe30] sm:$0xff]
    %v2521 = vld [vmem:[#allocation6 + $0xe50] sm:$0xff]
    %v2522 = vld [vmem:[#allocation6 + $0xe70] sm:$0xff]
    %v2523 = vld [vmem:[#allocation6 + $0xe90] sm:$0xff]
    %v2524 = vld [vmem:[#allocation6 + $0xeb0] sm:$0xff]
    %v2525 = vld [vmem:[#allocation6 + $0xed0] sm:$0xff]
    %v2526 = vld [vmem:[#allocation6 + $0xef0] sm:$0xff]
    %v2527 = vld [vmem:[#allocation6 + $0xf10] sm:$0xff]
    %v2528 = vld [vmem:[#allocation6 + $0xf30] sm:$0xff]
    %v2529 = vld [vmem:[#allocation6 + $0xf50] sm:$0xff]
    %v2530 = vld [vmem:[#allocation6 + $0xf70] sm:$0xff]
    %v2531 = vld [vmem:[#allocation6 + $0xf90] sm:$0xff]
    %v2532 = vld [vmem:[#allocation6 + $0xfb0] sm:$0xff]
    %v2533 = vld [vmem:[#allocation6 + $0xfd0] sm:$0xff]
    %v2534 = vld [vmem:[#allocation6 + $0xff0] sm:$0xff]
    %v2535 = vld [vmem:[#allocation8 + $0x4] sm:$0x3]
    %v2537 = vlaneseq
    %v2538 = vshrl.u32 %v2537, 7
    %v2539 = vsub.s32 0, %v2538
    %v2540 = vrot.slane %v2535, %v2539
    %v2541 = vlaneseq
    %v2542 = vshrl.u32 %v2541, 7
    %v2543 = vsub.s32 1, %v2542
    %v2544 = vrot.slane %v2535, %v2543
    %v2675 = vunpack.c.l.b16 %v2407
    %v2676 = vunpack.c.h.b16 %v2407
    %v2677 = vunpack.c.l.b16 %v2408
    %v2678 = vunpack.c.h.b16 %v2408
    %v2679 = vunpack.c.l.b16 %v2409
    %v2680 = vunpack.c.h.b16 %v2409
    %v2681 = vunpack.c.l.b16 %v2410
    %v2682 = vunpack.c.h.b16 %v2410
    %v2683 = vunpack.c.l.b16 %v2411
    %v2684 = vunpack.c.h.b16 %v2411
    %v2685 = vunpack.c.l.b16 %v2412
    %v2686 = vunpack.c.h.b16 %v2412
    %v2687 = vunpack.c.l.b16 %v2413
    %v2688 = vunpack.c.h.b16 %v2413
    %v2689 = vunpack.c.l.b16 %v2414
    %v2690 = vunpack.c.h.b16 %v2414
    %v2691 = vunpack.c.l.b16 %v2415
    %v2692 = vunpack.c.h.b16 %v2415
    %v2693 = vunpack.c.l.b16 %v2416
    %v2694 = vunpack.c.h.b16 %v2416
    %v2695 = vunpack.c.l.b16 %v2417
    %v2696 = vunpack.c.h.b16 %v2417
    %v2697 = vunpack.c.l.b16 %v2418
    %v2698 = vunpack.c.h.b16 %v2418
    %v2699 = vunpack.c.l.b16 %v2419
    %v2700 = vunpack.c.h.b16 %v2419
    %v2701 = vunpack.c.l.b16 %v2420
    %v2702 = vunpack.c.h.b16 %v2420
    %v2703 = vunpack.c.l.b16 %v2421
    %v2704 = vunpack.c.h.b16 %v2421
    %v2705 = vunpack.c.l.b16 %v2422
    %v2706 = vunpack.c.h.b16 %v2422
    %v2707 = vunpack.c.l.b16 %v2423
    %v2708 = vunpack.c.h.b16 %v2423
    %v2709 = vunpack.c.l.b16 %v2424
    %v2710 = vunpack.c.h.b16 %v2424
    %v2711 = vunpack.c.l.b16 %v2425
    %v2712 = vunpack.c.h.b16 %v2425
    %v2713 = vunpack.c.l.b16 %v2426
    %v2714 = vunpack.c.h.b16 %v2426
    %v2715 = vunpack.c.l.b16 %v2427
    %v2716 = vunpack.c.h.b16 %v2427
    %v2717 = vunpack.c.l.b16 %v2428
    %v2718 = vunpack.c.h.b16 %v2428
    %v2719 = vunpack.c.l.b16 %v2429
    %v2720 = vunpack.c.h.b16 %v2429
    %v2721 = vunpack.c.l.b16 %v2430
    %v2722 = vunpack.c.h.b16 %v2430
    %v2723 = vunpack.c.l.b16 %v2431
    %v2724 = vunpack.c.h.b16 %v2431
    %v2725 = vunpack.c.l.b16 %v2432
    %v2726 = vunpack.c.h.b16 %v2432
    %v2727 = vunpack.c.l.b16 %v2433
    %v2728 = vunpack.c.h.b16 %v2433
    %v2729 = vunpack.c.l.b16 %v2434
    %v2730 = vunpack.c.h.b16 %v2434
    %v2731 = vunpack.c.l.b16 %v2435
    %v2732 = vunpack.c.h.b16 %v2435
    %v2733 = vunpack.c.l.b16 %v2436
    %v2734 = vunpack.c.h.b16 %v2436
    %v2735 = vunpack.c.l.b16 %v2437
    %v2736 = vunpack.c.h.b16 %v2437
    %v2737 = vunpack.c.l.b16 %v2438
    %v2738 = vunpack.c.h.b16 %v2438
    %v2739 = vunpack.c.l.b16 %v2439
    %v2740 = vunpack.c.h.b16 %v2439
    %v2741 = vunpack.c.l.b16 %v2440
    %v2742 = vunpack.c.h.b16 %v2440
    %v2743 = vunpack.c.l.b16 %v2441
    %v2744 = vunpack.c.h.b16 %v2441
    %v2745 = vunpack.c.l.b16 %v2442
    %v2746 = vunpack.c.h.b16 %v2442
    %v2747 = vunpack.c.l.b16 %v2443
    %v2748 = vunpack.c.h.b16 %v2443
    %v2749 = vunpack.c.l.b16 %v2444
    %v2750 = vunpack.c.h.b16 %v2444
    %v2751 = vunpack.c.l.b16 %v2445
    %v2752 = vunpack.c.h.b16 %v2445
    %v2753 = vunpack.c.l.b16 %v2446
    %v2754 = vunpack.c.h.b16 %v2446
    %v2755 = vunpack.c.l.b16 %v2447
    %v2756 = vunpack.c.h.b16 %v2447
    %v2757 = vunpack.c.l.b16 %v2448
    %v2758 = vunpack.c.h.b16 %v2448
    %v2759 = vunpack.c.l.b16 %v2449
    %v2760 = vunpack.c.h.b16 %v2449
    %v2761 = vunpack.c.l.b16 %v2450
    %v2762 = vunpack.c.h.b16 %v2450
    %v2763 = vunpack.c.l.b16 %v2451
    %v2764 = vunpack.c.h.b16 %v2451
    %v2765 = vunpack.c.l.b16 %v2452
    %v2766 = vunpack.c.h.b16 %v2452
    %v2767 = vunpack.c.l.b16 %v2453
    %v2768 = vunpack.c.h.b16 %v2453
    %v2769 = vunpack.c.l.b16 %v2454
    %v2770 = vunpack.c.h.b16 %v2454
    %v2771 = vunpack.c.l.b16 %v2455
    %v2772 = vunpack.c.h.b16 %v2455
    %v2773 = vunpack.c.l.b16 %v2456
    %v2774 = vunpack.c.h.b16 %v2456
    %v2775 = vunpack.c.l.b16 %v2457
    %v2776 = vunpack.c.h.b16 %v2457
    %v2777 = vunpack.c.l.b16 %v2458
    %v2778 = vunpack.c.h.b16 %v2458
    %v2779 = vunpack.c.l.b16 %v2459
    %v2780 = vunpack.c.h.b16 %v2459
    %v2781 = vunpack.c.l.b16 %v2460
    %v2782 = vunpack.c.h.b16 %v2460
    %v2783 = vunpack.c.l.b16 %v2461
    %v2784 = vunpack.c.h.b16 %v2461
    %v2785 = vunpack.c.l.b16 %v2462
    %v2786 = vunpack.c.h.b16 %v2462
    %v2787 = vunpack.c.l.b16 %v2463
    %v2788 = vunpack.c.h.b16 %v2463
    %v2789 = vunpack.c.l.b16 %v2464
    %v2790 = vunpack.c.h.b16 %v2464
    %v2791 = vunpack.c.l.b16 %v2465
    %v2792 = vunpack.c.h.b16 %v2465
    %v2793 = vunpack.c.l.b16 %v2466
    %v2794 = vunpack.c.h.b16 %v2466
    %v2795 = vunpack.c.l.b16 %v2467
    %v2796 = vunpack.c.h.b16 %v2467
    %v2797 = vunpack.c.l.b16 %v2468
    %v2798 = vunpack.c.h.b16 %v2468
    %v2799 = vunpack.c.l.b16 %v2469
    %v2800 = vunpack.c.h.b16 %v2469
    %v2801 = vunpack.c.l.b16 %v2470
    %v2802 = vunpack.c.h.b16 %v2470
    %v2803 = vunpack.c.l.b16 %v2471
    %v2804 = vunpack.c.h.b16 %v2471
    %v2805 = vunpack.c.l.b16 %v2472
    %v2806 = vunpack.c.h.b16 %v2472
    %v2807 = vunpack.c.l.b16 %v2473
    %v2808 = vunpack.c.h.b16 %v2473
    %v2809 = vunpack.c.l.b16 %v2474
    %v2810 = vunpack.c.h.b16 %v2474
    %v2811 = vunpack.c.l.b16 %v2475
    %v2812 = vunpack.c.h.b16 %v2475
    %v2813 = vunpack.c.l.b16 %v2476
    %v2814 = vunpack.c.h.b16 %v2476
    %v2815 = vunpack.c.l.b16 %v2477
    %v2816 = vunpack.c.h.b16 %v2477
    %v2817 = vunpack.c.l.b16 %v2478
    %v2818 = vunpack.c.h.b16 %v2478
    %v2819 = vunpack.c.l.b16 %v2479
    %v2820 = vunpack.c.h.b16 %v2479
    %v2821 = vunpack.c.l.b16 %v2480
    %v2822 = vunpack.c.h.b16 %v2480
    %v2823 = vunpack.c.l.b16 %v2481
    %v2824 = vunpack.c.h.b16 %v2481
    %v2825 = vunpack.c.l.b16 %v2482
    %v2826 = vunpack.c.h.b16 %v2482
    %v2827 = vunpack.c.l.b16 %v2483
    %v2828 = vunpack.c.h.b16 %v2483
    %v2829 = vunpack.c.l.b16 %v2484
    %v2830 = vunpack.c.h.b16 %v2484
    %v2831 = vunpack.c.l.b16 %v2485
    %v2832 = vunpack.c.h.b16 %v2485
    %v2833 = vunpack.c.l.b16 %v2486
    %v2834 = vunpack.c.h.b16 %v2486
    %v2835 = vunpack.c.l.b16 %v2487
    %v2836 = vunpack.c.h.b16 %v2487
    %v2837 = vunpack.c.l.b16 %v2488
    %v2838 = vunpack.c.h.b16 %v2488
    %v2839 = vunpack.c.l.b16 %v2489
    %v2840 = vunpack.c.h.b16 %v2489
    %v2841 = vunpack.c.l.b16 %v2490
    %v2842 = vunpack.c.h.b16 %v2490
    %v2843 = vunpack.c.l.b16 %v2491
    %v2844 = vunpack.c.h.b16 %v2491
    %v2845 = vunpack.c.l.b16 %v2492
    %v2846 = vunpack.c.h.b16 %v2492
    %v2847 = vunpack.c.l.b16 %v2493
    %v2848 = vunpack.c.h.b16 %v2493
    %v2849 = vunpack.c.l.b16 %v2494
    %v2850 = vunpack.c.h.b16 %v2494
    %v2851 = vunpack.c.l.b16 %v2495
    %v2852 = vunpack.c.h.b16 %v2495
    %v2853 = vunpack.c.l.b16 %v2496
    %v2854 = vunpack.c.h.b16 %v2496
    %v2855 = vunpack.c.l.b16 %v2497
    %v2856 = vunpack.c.h.b16 %v2497
    %v2857 = vunpack.c.l.b16 %v2498
    %v2858 = vunpack.c.h.b16 %v2498
    %v2859 = vunpack.c.l.b16 %v2499
    %v2860 = vunpack.c.h.b16 %v2499
    %v2861 = vunpack.c.l.b16 %v2500
    %v2862 = vunpack.c.h.b16 %v2500
    %v2863 = vunpack.c.l.b16 %v2501
    %v2864 = vunpack.c.h.b16 %v2501
    %v2865 = vunpack.c.l.b16 %v2502
    %v2866 = vunpack.c.h.b16 %v2502
    %v2867 = vunpack.c.l.b16 %v2503
    %v2868 = vunpack.c.h.b16 %v2503
    %v2869 = vunpack.c.l.b16 %v2504
    %v2870 = vunpack.c.h.b16 %v2504
    %v2871 = vunpack.c.l.b16 %v2505
    %v2872 = vunpack.c.h.b16 %v2505
    %v2873 = vunpack.c.l.b16 %v2506
    %v2874 = vunpack.c.h.b16 %v2506
    %v2875 = vunpack.c.l.b16 %v2507
    %v2876 = vunpack.c.h.b16 %v2507
    %v2877 = vunpack.c.l.b16 %v2508
    %v2878 = vunpack.c.h.b16 %v2508
    %v2879 = vunpack.c.l.b16 %v2509
    %v2880 = vunpack.c.h.b16 %v2509
    %v2881 = vunpack.c.l.b16 %v2510
    %v2882 = vunpack.c.h.b16 %v2510
    %v2883 = vunpack.c.l.b16 %v2511
    %v2884 = vunpack.c.h.b16 %v2511
    %v2885 = vunpack.c.l.b16 %v2512
    %v2886 = vunpack.c.h.b16 %v2512
    %v2887 = vunpack.c.l.b16 %v2513
    %v2888 = vunpack.c.h.b16 %v2513
    %v2889 = vunpack.c.l.b16 %v2514
    %v2890 = vunpack.c.h.b16 %v2514
    %v2891 = vunpack.c.l.b16 %v2515
    %v2892 = vunpack.c.h.b16 %v2515
    %v2893 = vunpack.c.l.b16 %v2516
    %v2894 = vunpack.c.h.b16 %v2516
    %v2895 = vunpack.c.l.b16 %v2517
    %v2896 = vunpack.c.h.b16 %v2517
    %v2897 = vunpack.c.l.b16 %v2518
    %v2898 = vunpack.c.h.b16 %v2518
    %v2899 = vunpack.c.l.b16 %v2519
    %v2900 = vunpack.c.h.b16 %v2519
    %v2901 = vunpack.c.l.b16 %v2520
    %v2902 = vunpack.c.h.b16 %v2520
    %v2903 = vunpack.c.l.b16 %v2521
    %v2904 = vunpack.c.h.b16 %v2521
    %v2905 = vunpack.c.l.b16 %v2522
    %v2906 = vunpack.c.h.b16 %v2522
    %v2907 = vunpack.c.l.b16 %v2523
    %v2908 = vunpack.c.h.b16 %v2523
    %v2909 = vunpack.c.l.b16 %v2524
    %v2910 = vunpack.c.h.b16 %v2524
    %v2911 = vunpack.c.l.b16 %v2525
    %v2912 = vunpack.c.h.b16 %v2525
    %v2913 = vunpack.c.l.b16 %v2526
    %v2914 = vunpack.c.h.b16 %v2526
    %v2915 = vunpack.c.l.b16 %v2527
    %v2916 = vunpack.c.h.b16 %v2527
    %v2917 = vunpack.c.l.b16 %v2528
    %v2918 = vunpack.c.h.b16 %v2528
    %v2919 = vunpack.c.l.b16 %v2529
    %v2920 = vunpack.c.h.b16 %v2529
    %v2921 = vunpack.c.l.b16 %v2530
    %v2922 = vunpack.c.h.b16 %v2530
    %v2923 = vunpack.c.l.b16 %v2531
    %v2924 = vunpack.c.h.b16 %v2531
    %v2925 = vunpack.c.l.b16 %v2532
    %v2926 = vunpack.c.h.b16 %v2532
    %v2927 = vunpack.c.l.b16 %v2533
    %v2928 = vunpack.c.h.b16 %v2533
    %v2929 = vunpack.c.l.b16 %v2534
    %v2930 = vunpack.c.h.b16 %v2534
    %v2931 = vpack.c.b16 %v2677, %v2675
    %v2932 = vpack.c.b16 %v2678, %v2676
    %v2933 = vpack.c.b16 %v2681, %v2679
    %v2934 = vpack.c.b16 %v2682, %v2680
    %v2935 = vpack.c.b16 %v2685, %v2683
    %v2936 = vpack.c.b16 %v2686, %v2684
    %v2937 = vpack.c.b16 %v2689, %v2687
    %v2938 = vpack.c.b16 %v2690, %v2688
    %v2939 = vpack.c.b16 %v2693, %v2691
    %v2940 = vpack.c.b16 %v2694, %v2692
    %v2941 = vpack.c.b16 %v2697, %v2695
    %v2942 = vpack.c.b16 %v2698, %v2696
    %v2943 = vpack.c.b16 %v2701, %v2699
    %v2944 = vpack.c.b16 %v2702, %v2700
    %v2945 = vpack.c.b16 %v2705, %v2703
    %v2946 = vpack.c.b16 %v2706, %v2704
    %v2947 = vpack.c.b16 %v2709, %v2707
    %v2948 = vpack.c.b16 %v2710, %v2708
    %v2949 = vpack.c.b16 %v2713, %v2711
    %v2950 = vpack.c.b16 %v2714, %v2712
    %v2951 = vpack.c.b16 %v2717, %v2715
    %v2952 = vpack.c.b16 %v2718, %v2716
    %v2953 = vpack.c.b16 %v2721, %v2719
    %v2954 = vpack.c.b16 %v2722, %v2720
    %v2955 = vpack.c.b16 %v2725, %v2723
    %v2956 = vpack.c.b16 %v2726, %v2724
    %v2957 = vpack.c.b16 %v2729, %v2727
    %v2958 = vpack.c.b16 %v2730, %v2728
    %v2959 = vpack.c.b16 %v2733, %v2731
    %v2960 = vpack.c.b16 %v2734, %v2732
    %v2961 = vpack.c.b16 %v2737, %v2735
    %v2962 = vpack.c.b16 %v2738, %v2736
    %v2963 = vpack.c.b16 %v2741, %v2739
    %v2964 = vpack.c.b16 %v2742, %v2740
    %v2965 = vpack.c.b16 %v2745, %v2743
    %v2966 = vpack.c.b16 %v2746, %v2744
    %v2967 = vpack.c.b16 %v2749, %v2747
    %v2968 = vpack.c.b16 %v2750, %v2748
    %v2969 = vpack.c.b16 %v2753, %v2751
    %v2970 = vpack.c.b16 %v2754, %v2752
    %v2971 = vpack.c.b16 %v2757, %v2755
    %v2972 = vpack.c.b16 %v2758, %v2756
    %v2973 = vpack.c.b16 %v2761, %v2759
    %v2974 = vpack.c.b16 %v2762, %v2760
    %v2975 = vpack.c.b16 %v2765, %v2763
    %v2976 = vpack.c.b16 %v2766, %v2764
    %v2977 = vpack.c.b16 %v2769, %v2767
    %v2978 = vpack.c.b16 %v2770, %v2768
    %v2979 = vpack.c.b16 %v2773, %v2771
    %v2980 = vpack.c.b16 %v2774, %v2772
    %v2981 = vpack.c.b16 %v2777, %v2775
    %v2982 = vpack.c.b16 %v2778, %v2776
    %v2983 = vpack.c.b16 %v2781, %v2779
    %v2984 = vpack.c.b16 %v2782, %v2780
    %v2985 = vpack.c.b16 %v2785, %v2783
    %v2986 = vpack.c.b16 %v2786, %v2784
    %v2987 = vpack.c.b16 %v2789, %v2787
    %v2988 = vpack.c.b16 %v2790, %v2788
    %v2989 = vpack.c.b16 %v2793, %v2791
    %v2990 = vpack.c.b16 %v2794, %v2792
    %v2991 = vpack.c.b16 %v2797, %v2795
    %v2992 = vpack.c.b16 %v2798, %v2796
    %v2993 = vpack.c.b16 %v2801, %v2799
    %v2994 = vpack.c.b16 %v2802, %v2800
    %v2995 = vpack.c.b16 %v2805, %v2803
    %v2996 = vpack.c.b16 %v2806, %v2804
    %v2997 = vpack.c.b16 %v2809, %v2807
    %v2998 = vpack.c.b16 %v2810, %v2808
    %v2999 = vpack.c.b16 %v2813, %v2811
    %v3000 = vpack.c.b16 %v2814, %v2812
    %v3001 = vpack.c.b16 %v2817, %v2815
    %v3002 = vpack.c.b16 %v2818, %v2816
    %v3003 = vpack.c.b16 %v2821, %v2819
    %v3004 = vpack.c.b16 %v2822, %v2820
    %v3005 = vpack.c.b16 %v2825, %v2823
    %v3006 = vpack.c.b16 %v2826, %v2824
    %v3007 = vpack.c.b16 %v2829, %v2827
    %v3008 = vpack.c.b16 %v2830, %v2828
    %v3009 = vpack.c.b16 %v2833, %v2831
    %v3010 = vpack.c.b16 %v2834, %v2832
    %v3011 = vpack.c.b16 %v2837, %v2835
    %v3012 = vpack.c.b16 %v2838, %v2836
    %v3013 = vpack.c.b16 %v2841, %v2839
    %v3014 = vpack.c.b16 %v2842, %v2840
    %v3015 = vpack.c.b16 %v2845, %v2843
    %v3016 = vpack.c.b16 %v2846, %v2844
    %v3017 = vpack.c.b16 %v2849, %v2847
    %v3018 = vpack.c.b16 %v2850, %v2848
    %v3019 = vpack.c.b16 %v2853, %v2851
    %v3020 = vpack.c.b16 %v2854, %v2852
    %v3021 = vpack.c.b16 %v2857, %v2855
    %v3022 = vpack.c.b16 %v2858, %v2856
    %v3023 = vpack.c.b16 %v2861, %v2859
    %v3024 = vpack.c.b16 %v2862, %v2860
    %v3025 = vpack.c.b16 %v2865, %v2863
    %v3026 = vpack.c.b16 %v2866, %v2864
    %v3027 = vpack.c.b16 %v2869, %v2867
    %v3028 = vpack.c.b16 %v2870, %v2868
    %v3029 = vpack.c.b16 %v2873, %v2871
    %v3030 = vpack.c.b16 %v2874, %v2872
    %v3031 = vpack.c.b16 %v2877, %v2875
    %v3032 = vpack.c.b16 %v2878, %v2876
    %v3033 = vpack.c.b16 %v2881, %v2879
    %v3034 = vpack.c.b16 %v2882, %v2880
    %v3035 = vpack.c.b16 %v2885, %v2883
    %v3036 = vpack.c.b16 %v2886, %v2884
    %v3037 = vpack.c.b16 %v2889, %v2887
    %v3038 = vpack.c.b16 %v2890, %v2888
    %v3039 = vpack.c.b16 %v2893, %v2891
    %v3040 = vpack.c.b16 %v2894, %v2892
    %v3041 = vpack.c.b16 %v2897, %v2895
    %v3042 = vpack.c.b16 %v2898, %v2896
    %v3043 = vpack.c.b16 %v2901, %v2899
    %v3044 = vpack.c.b16 %v2902, %v2900
    %v3045 = vpack.c.b16 %v2905, %v2903
    %v3046 = vpack.c.b16 %v2906, %v2904
    %v3047 = vpack.c.b16 %v2909, %v2907
    %v3048 = vpack.c.b16 %v2910, %v2908
    %v3049 = vpack.c.b16 %v2913, %v2911
    %v3050 = vpack.c.b16 %v2914, %v2912
    %v3051 = vpack.c.b16 %v2917, %v2915
    %v3052 = vpack.c.b16 %v2918, %v2916
    %v3053 = vpack.c.b16 %v2921, %v2919
    %v3054 = vpack.c.b16 %v2922, %v2920
    %v3055 = vpack.c.b16 %v2925, %v2923
    %v3056 = vpack.c.b16 %v2926, %v2924
    %v3057 = vpack.c.b16 %v2929, %v2927
    %v3058 = vpack.c.b16 %v2930, %v2928
    %3187 = vmatprep.subr.bf16.mxu0 %v2932
    %3188 = vmatpush1.bf16.msra.mxu0 %v2931
    %3189 = vmatprep.subr.bf16.mxu0 %v2934
    %3190 = vmatpush1.bf16.msra.mxu0 %v2933
    %3191 = vmatprep.subr.bf16.mxu0 %v2936
    %3192 = vmatpush1.bf16.msra.mxu0 %v2935
    %3193 = vmatprep.subr.bf16.mxu0 %v2938
    %3194 = vmatpush1.bf16.msra.mxu0 %v2937
    %3195 = vmatprep.subr.bf16.mxu0 %v2940
    %3196 = vmatpush1.bf16.msra.mxu0 %v2939
    %3197 = vmatprep.subr.bf16.mxu0 %v2942
    %3198 = vmatpush1.bf16.msra.mxu0 %v2941
    %3199 = vmatprep.subr.bf16.mxu0 %v2944
    %3200 = vmatpush1.bf16.msra.mxu0 %v2943
    %3201 = vmatprep.subr.bf16.mxu0 %v2946
    %3202 = vmatpush1.bf16.msra.mxu0 %v2945
    %3203 = vmatprep.subr.bf16.mxu0 %v2948
    %3204 = vmatpush1.bf16.msra.mxu0 %v2947
    %3205 = vmatprep.subr.bf16.mxu0 %v2950
    %3206 = vmatpush1.bf16.msra.mxu0 %v2949
    %3207 = vmatprep.subr.bf16.mxu0 %v2952
    %3208 = vmatpush1.bf16.msra.mxu0 %v2951
    %3209 = vmatprep.subr.bf16.mxu0 %v2954
    %3210 = vmatpush1.bf16.msra.mxu0 %v2953
    %3211 = vmatprep.subr.bf16.mxu0 %v2956
    %3212 = vmatpush1.bf16.msra.mxu0 %v2955
    %3213 = vmatprep.subr.bf16.mxu0 %v2958
    %3214 = vmatpush1.bf16.msra.mxu0 %v2957
    %3215 = vmatprep.subr.bf16.mxu0 %v2960
    %3216 = vmatpush1.bf16.msra.mxu0 %v2959
    %3217 = vmatprep.subr.bf16.mxu0 %v2962
    %3218 = vmatpush1.bf16.msra.mxu0 %v2961
    %3219 = vmatprep.mubr.bf16.mxu0 %v278
    %3220 = vmatmul.mubr.bf16.gmra.mrb[0].mxu0 %v277
    %v3221 = vpop.f32.mrb[0].mxu0
    %v3222 = vadd.f32 %v2540, %v3221
    %v3223 = vpop.f32.mrb[0].mxu0
    %v3224 = vadd.f32 %v2544, %v3223
    %v3225 = vpop.f32.mrb[0].mxu0
    %v3226 = vadd.f32 %v2540, %v3225
    %v3227 = vpop.f32.mrb[0].mxu0
    %v3228 = vadd.f32 %v2544, %v3227
    %3229 = vdwg.mxu0
    %3230 = vmatprep.subr.bf16.mxu0 %v2964
    %3231 = vmatpush1.bf16.msra.mxu0 %v2963
    %3232 = vmatprep.subr.bf16.mxu0 %v2966
    %3233 = vmatpush1.bf16.msra.mxu0 %v2965
    %3234 = vmatprep.subr.bf16.mxu0 %v2968
    %3235 = vmatpush1.bf16.msra.mxu0 %v2967
    %3236 = vmatprep.subr.bf16.mxu0 %v2970
    %3237 = vmatpush1.bf16.msra.mxu0 %v2969
    %3238 = vmatprep.subr.bf16.mxu0 %v2972
    %3239 = vmatpush1.bf16.msra.mxu0 %v2971
    %3240 = vmatprep.subr.bf16.mxu0 %v2974
    %3241 = vmatpush1.bf16.msra.mxu0 %v2973
    %3242 = vmatprep.subr.bf16.mxu0 %v2976
    %3243 = vmatpush1.bf16.msra.mxu0 %v2975
    %3244 = vmatprep.subr.bf16.mxu0 %v2978
    %3245 = vmatpush1.bf16.msra.mxu0 %v2977
    %3246 = vmatprep.subr.bf16.mxu0 %v2980
    %3247 = vmatpush1.bf16.msra.mxu0 %v2979
    %3248 = vmatprep.subr.bf16.mxu0 %v2982
    %3249 = vmatpush1.bf16.msra.mxu0 %v2981
    %3250 = vmatprep.subr.bf16.mxu0 %v2984
    %3251 = vmatpush1.bf16.msra.mxu0 %v2983
    %3252 = vmatprep.subr.bf16.mxu0 %v2986
    %3253 = vmatpush1.bf16.msra.mxu0 %v2985
    %3254 = vmatprep.subr.bf16.mxu0 %v2988
    %3255 = vmatpush1.bf16.msra.mxu0 %v2987
    %3256 = vmatprep.subr.bf16.mxu0 %v2990
    %3257 = vmatpush1.bf16.msra.mxu0 %v2989
    %3258 = vmatprep.subr.bf16.mxu0 %v2992
    %3259 = vmatpush1.bf16.msra.mxu0 %v2991
    %3260 = vmatprep.subr.bf16.mxu0 %v2994
    %3261 = vmatpush1.bf16.msra.mxu0 %v2993
    %3262 = vmatprep.mubr.bf16.mxu0 %v280
    %3263 = vmatmul.mubr.bf16.gmra.mrb[0].mxu0 %v279
    %v3264 = vpop.f32.mrb[0].mxu0
    %v3265 = vadd.f32 %v3222, %v3264
    %v3266 = vpop.f32.mrb[0].mxu0
    %v3267 = vadd.f32 %v3224, %v3266
    %v3268 = vpop.f32.mrb[0].mxu0
    %v3269 = vadd.f32 %v3226, %v3268
    %v3270 = vpop.f32.mrb[0].mxu0
    %v3271 = vadd.f32 %v3228, %v3270
    %3272 = vdwg.mxu0
    %3273 = vmatprep.subr.bf16.mxu0 %v2996
    %3274 = vmatpush1.bf16.msra.mxu0 %v2995
    %3275 = vmatprep.subr.bf16.mxu0 %v2998
    %3276 = vmatpush1.bf16.msra.mxu0 %v2997
    %3277 = vmatprep.subr.bf16.mxu0 %v3000
    %3278 = vmatpush1.bf16.msra.mxu0 %v2999
    %3279 = vmatprep.subr.bf16.mxu0 %v3002
    %3280 = vmatpush1.bf16.msra.mxu0 %v3001
    %3281 = vmatprep.subr.bf16.mxu0 %v3004
    %3282 = vmatpush1.bf16.msra.mxu0 %v3003
    %3283 = vmatprep.subr.bf16.mxu0 %v3006
    %3284 = vmatpush1.bf16.msra.mxu0 %v3005
    %3285 = vmatprep.subr.bf16.mxu0 %v3008
    %3286 = vmatpush1.bf16.msra.mxu0 %v3007
    %3287 = vmatprep.subr.bf16.mxu0 %v3010
    %3288 = vmatpush1.bf16.msra.mxu0 %v3009
    %3289 = vmatprep.subr.bf16.mxu0 %v3012
    %3290 = vmatpush1.bf16.msra.mxu0 %v3011
    %3291 = vmatprep.subr.bf16.mxu0 %v3014
    %3292 = vmatpush1.bf16.msra.mxu0 %v3013
    %3293 = vmatprep.subr.bf16.mxu0 %v3016
    %3294 = vmatpush1.bf16.msra.mxu0 %v3015
    %3295 = vmatprep.subr.bf16.mxu0 %v3018
    %3296 = vmatpush1.bf16.msra.mxu0 %v3017
    %3297 = vmatprep.subr.bf16.mxu0 %v3020
    %3298 = vmatpush1.bf16.msra.mxu0 %v3019
    %3299 = vmatprep.subr.bf16.mxu0 %v3022
    %3300 = vmatpush1.bf16.msra.mxu0 %v3021
    %3301 = vmatprep.subr.bf16.mxu0 %v3024
    %3302 = vmatpush1.bf16.msra.mxu0 %v3023
    %3303 = vmatprep.subr.bf16.mxu0 %v3026
    %3304 = vmatpush1.bf16.msra.mxu0 %v3025
    %3305 = vmatprep.mubr.bf16.mxu0 %v282
    %3306 = vmatmul.mubr.bf16.gmra.mrb[0].mxu0 %v281
    %v3307 = vpop.f32.mrb[0].mxu0
    %v3308 = vadd.f32 %v3265, %v3307
    %v3309 = vpop.f32.mrb[0].mxu0
    %v3310 = vadd.f32 %v3267, %v3309
    %v3311 = vpop.f32.mrb[0].mxu0
    %v3312 = vadd.f32 %v3269, %v3311
    %v3313 = vpop.f32.mrb[0].mxu0
    %v3314 = vadd.f32 %v3271, %v3313
    %3315 = vdwg.mxu0
    %3316 = vmatprep.subr.bf16.mxu0 %v3028
    %3317 = vmatpush1.bf16.msra.mxu0 %v3027
    %3318 = vmatprep.subr.bf16.mxu0 %v3030
    %3319 = vmatpush1.bf16.msra.mxu0 %v3029
    %3320 = vmatprep.subr.bf16.mxu0 %v3032
    %3321 = vmatpush1.bf16.msra.mxu0 %v3031
    %3322 = vmatprep.subr.bf16.mxu0 %v3034
    %3323 = vmatpush1.bf16.msra.mxu0 %v3033
    %3324 = vmatprep.subr.bf16.mxu0 %v3036
    %3325 = vmatpush1.bf16.msra.mxu0 %v3035
    %3326 = vmatprep.subr.bf16.mxu0 %v3038
    %3327 = vmatpush1.bf16.msra.mxu0 %v3037
    %3328 = vmatprep.subr.bf16.mxu0 %v3040
    %3329 = vmatpush1.bf16.msra.mxu0 %v3039
    %3330 = vmatprep.subr.bf16.mxu0 %v3042
    %3331 = vmatpush1.bf16.msra.mxu0 %v3041
    %3332 = vmatprep.subr.bf16.mxu0 %v3044
    %3333 = vmatpush1.bf16.msra.mxu0 %v3043
    %3334 = vmatprep.subr.bf16.mxu0 %v3046
    %3335 = vmatpush1.bf16.msra.mxu0 %v3045
    %3336 = vmatprep.subr.bf16.mxu0 %v3048
    %3337 = vmatpush1.bf16.msra.mxu0 %v3047
    %3338 = vmatprep.subr.bf16.mxu0 %v3050
    %3339 = vmatpush1.bf16.msra.mxu0 %v3049
    %3340 = vmatprep.subr.bf16.mxu0 %v3052
    %3341 = vmatpush1.bf16.msra.mxu0 %v3051
    %3342 = vmatprep.subr.bf16.mxu0 %v3054
    %3343 = vmatpush1.bf16.msra.mxu0 %v3053
    %3344 = vmatprep.subr.bf16.mxu0 %v3056
    %3345 = vmatpush1.bf16.msra.mxu0 %v3055
    %3346 = vmatprep.subr.bf16.mxu0 %v3058
    %3347 = vmatpush1.bf16.msra.mxu0 %v3057
    %3348 = vmatprep.mubr.bf16.mxu0 %v284
    %3349 = vmatmul.mubr.bf16.gmra.mrb[0].mxu0 %v283
    %v3350 = vpop.f32.mrb[0].mxu0
    %v3351 = vadd.f32 %v3308, %v3350
    %v3352 = vpop.f32.mrb[0].mxu0
    %v3353 = vadd.f32 %v3310, %v3352
    %v3354 = vpop.f32.mrb[0].mxu0
    %v3355 = vadd.f32 %v3312, %v3354
    %v3356 = vpop.f32.mrb[0].mxu0
    %v3357 = vadd.f32 %v3314, %v3356
    %3358 = vdwg.mxu0
    %v3359 = vtanh.pop %v3351
    %v3360 = vtanh.pop %v3353
    %v3361 = vtanh.pop %v3355
    %v3362 = vtanh.pop %v3357
    %v3363 = vpack.c.bf16 %v3361, %v3359
    %v3364 = vpack.c.bf16 %v3362, %v3360
    %v3365 = vld [vmem:[#allocation9 + $0x100] sm:$0xf]
    %v3366 = vld [vmem:[#allocation9 + $0x104] sm:$0xf]
    %v3367 = vld [vmem:[#allocation9 + $0x108] sm:$0xf]
    %v3368 = vld [vmem:[#allocation9 + $0x10c] sm:$0xf]
    %v3369 = vld [vmem:[#allocation9 + $0x110] sm:$0xf]
    %v3370 = vld [vmem:[#allocation9 + $0x114] sm:$0xf]
    %v3371 = vld [vmem:[#allocation9 + $0x118] sm:$0xf]
    %v3372 = vld [vmem:[#allocation9 + $0x11c] sm:$0xf]
    %v3373 = vld [vmem:[#allocation9 + $0x120] sm:$0xf]
    %v3374 = vld [vmem:[#allocation9 + $0x124] sm:$0xf]
    %v3375 = vld [vmem:[#allocation9 + $0x128] sm:$0xf]
    %v3376 = vld [vmem:[#allocation9 + $0x12c] sm:$0xf]
    %v3377 = vld [vmem:[#allocation9 + $0x130] sm:$0xf]
    %v3378 = vld [vmem:[#allocation9 + $0x134] sm:$0xf]
    %v3379 = vld [vmem:[#allocation9 + $0x138] sm:$0xf]
    %v3380 = vld [vmem:[#allocation9 + $0x13c] sm:$0xf]
    %v3381 = vld [vmem:[#allocation9 + $0x140] sm:$0xf]
    %v3382 = vld [vmem:[#allocation9 + $0x144] sm:$0xf]
    %v3383 = vld [vmem:[#allocation9 + $0x148] sm:$0xf]
    %v3384 = vld [vmem:[#allocation9 + $0x14c] sm:$0xf]
    %v3385 = vld [vmem:[#allocation9 + $0x150] sm:$0xf]
    %v3386 = vld [vmem:[#allocation9 + $0x154] sm:$0xf]
    %v3387 = vld [vmem:[#allocation9 + $0x158] sm:$0xf]
    %v3388 = vld [vmem:[#allocation9 + $0x15c] sm:$0xf]
    %v3389 = vld [vmem:[#allocation9 + $0x160] sm:$0xf]
    %v3390 = vld [vmem:[#allocation9 + $0x164] sm:$0xf]
    %v3391 = vld [vmem:[#allocation9 + $0x168] sm:$0xf]
    %v3392 = vld [vmem:[#allocation9 + $0x16c] sm:$0xf]
    %v3393 = vld [vmem:[#allocation9 + $0x170] sm:$0xf]
    %v3394 = vld [vmem:[#allocation9 + $0x174] sm:$0xf]
    %v3395 = vld [vmem:[#allocation9 + $0x178] sm:$0xf]
    %v3396 = vld [vmem:[#allocation9 + $0x17c] sm:$0xf]
    %v3429 = vunpack.c.l.b16 %v3365
    %v3430 = vunpack.c.l.b16 %v3366
    %v3431 = vunpack.c.l.b16 %v3367
    %v3432 = vunpack.c.l.b16 %v3368
    %v3433 = vunpack.c.l.b16 %v3369
    %v3434 = vunpack.c.l.b16 %v3370
    %v3435 = vunpack.c.l.b16 %v3371
    %v3436 = vunpack.c.l.b16 %v3372
    %v3437 = vunpack.c.l.b16 %v3373
    %v3438 = vunpack.c.l.b16 %v3374
    %v3439 = vunpack.c.l.b16 %v3375
    %v3440 = vunpack.c.l.b16 %v3376
    %v3441 = vunpack.c.l.b16 %v3377
    %v3442 = vunpack.c.l.b16 %v3378
    %v3443 = vunpack.c.l.b16 %v3379
    %v3444 = vunpack.c.l.b16 %v3380
    %v3445 = vunpack.c.l.b16 %v3381
    %v3446 = vunpack.c.l.b16 %v3382
    %v3447 = vunpack.c.l.b16 %v3383
    %v3448 = vunpack.c.l.b16 %v3384
    %v3449 = vunpack.c.l.b16 %v3385
    %v3450 = vunpack.c.l.b16 %v3386
    %v3451 = vunpack.c.l.b16 %v3387
    %v3452 = vunpack.c.l.b16 %v3388
    %v3453 = vunpack.c.l.b16 %v3389
    %v3454 = vunpack.c.l.b16 %v3390
    %v3455 = vunpack.c.l.b16 %v3391
    %v3456 = vunpack.c.l.b16 %v3392
    %v3457 = vunpack.c.l.b16 %v3393
    %v3458 = vunpack.c.l.b16 %v3394
    %v3459 = vunpack.c.l.b16 %v3395
    %v3460 = vunpack.c.l.b16 %v3396
    %v3461 = vpack.c.b16 %v3430, %v3429
    %v3462 = vpack.c.b16 %v3432, %v3431
    %v3463 = vpack.c.b16 %v3434, %v3433
    %v3464 = vpack.c.b16 %v3436, %v3435
    %v3465 = vpack.c.b16 %v3438, %v3437
    %v3466 = vpack.c.b16 %v3440, %v3439
    %v3467 = vpack.c.b16 %v3442, %v3441
    %v3468 = vpack.c.b16 %v3444, %v3443
    %v3469 = vpack.c.b16 %v3446, %v3445
    %v3470 = vpack.c.b16 %v3448, %v3447
    %v3471 = vpack.c.b16 %v3450, %v3449
    %v3472 = vpack.c.b16 %v3452, %v3451
    %v3473 = vpack.c.b16 %v3454, %v3453
    %v3474 = vpack.c.b16 %v3456, %v3455
    %v3475 = vpack.c.b16 %v3458, %v3457
    %v3476 = vpack.c.b16 %v3460, %v3459
    %3493 = vmatprep.subr.bf16.mxu0 0
    %3494 = vmatpush1.bf16.msra.mxu0 %v3461
    %3495 = vmatprep.subr.bf16.mxu0 0
    %3496 = vmatpush1.bf16.msra.mxu0 %v3462
    %3497 = vmatprep.subr.bf16.mxu0 0
    %3498 = vmatpush1.bf16.msra.mxu0 %v3463
    %3499 = vmatprep.subr.bf16.mxu0 0
    %3500 = vmatpush1.bf16.msra.mxu0 %v3464
    %3501 = vmatprep.subr.bf16.mxu0 0
    %3502 = vmatpush1.bf16.msra.mxu0 %v3465
    %3503 = vmatprep.subr.bf16.mxu0 0
    %3504 = vmatpush1.bf16.msra.mxu0 %v3466
    %3505 = vmatprep.subr.bf16.mxu0 0
    %3506 = vmatpush1.bf16.msra.mxu0 %v3467
    %3507 = vmatprep.subr.bf16.mxu0 0
    %3508 = vmatpush1.bf16.msra.mxu0 %v3468
    %3509 = vmatprep.subr.bf16.mxu0 0
    %3510 = vmatpush1.bf16.msra.mxu0 %v3469
    %3511 = vmatprep.subr.bf16.mxu0 0
    %3512 = vmatpush1.bf16.msra.mxu0 %v3470
    %3513 = vmatprep.subr.bf16.mxu0 0
    %3514 = vmatpush1.bf16.msra.mxu0 %v3471
    %3515 = vmatprep.subr.bf16.mxu0 0
    %3516 = vmatpush1.bf16.msra.mxu0 %v3472
    %3517 = vmatprep.subr.bf16.mxu0 0
    %3518 = vmatpush1.bf16.msra.mxu0 %v3473
    %3519 = vmatprep.subr.bf16.mxu0 0
    %3520 = vmatpush1.bf16.msra.mxu0 %v3474
    %3521 = vmatprep.subr.bf16.mxu0 0
    %3522 = vmatpush1.bf16.msra.mxu0 %v3475
    %3523 = vmatprep.subr.bf16.mxu0 0
    %3524 = vmatpush1.bf16.msra.mxu0 %v3476
    %3525 = vmatprep.mubr.bf16.mxu0 %v3364
    %3526 = vmatmul.mubr.bf16.gmra.mrb[0].mxu0 %v3363
    %v3527 = vpop.f32.mrb[0].mxu0
    %v3528 = vadd.f32 0.0, %v3527
    %v3529 = vpop.f32.mrb[0].mxu0
    %v3530 = vpop.f32.mrb[0].mxu0
    %v3531 = vadd.f32 0.0, %v3530
    %v3532 = vpop.f32.mrb[0].mxu0
    %3533 = vdwg.mxu0
    %v3534 = vadd.f32 %v2401, %v3528
    %v3535 = vadd.f32 %v2404, %v3531
    %v3536 = vld [vmem:[#allocation6 + $0x18] sm:$0xff]
    %v3537 = vld [vmem:[#allocation6 + $0x38] sm:$0xff]
    %v3538 = vld [vmem:[#allocation6 + $0x58] sm:$0xff]
    %v3539 = vld [vmem:[#allocation6 + $0x78] sm:$0xff]
    %v3540 = vld [vmem:[#allocation6 + $0x98] sm:$0xff]
    %v3541 = vld [vmem:[#allocation6 + $0xb8] sm:$0xff]
    %v3542 = vld [vmem:[#allocation6 + $0xd8] sm:$0xff]
    %v3543 = vld [vmem:[#allocation6 + $0xf8] sm:$0xff]
    %v3544 = vld [vmem:[#allocation6 + $0x118] sm:$0xff]
    %v3545 = vld [vmem:[#allocation6 + $0x138] sm:$0xff]
    %v3546 = vld [vmem:[#allocation6 + $0x158] sm:$0xff]
    %v3547 = vld [vmem:[#allocation6 + $0x178] sm:$0xff]
    %v3548 = vld [vmem:[#allocation6 + $0x198] sm:$0xff]
    %v3549 = vld [vmem:[#allocation6 + $0x1b8] sm:$0xff]
    %v3550 = vld [vmem:[#allocation6 + $0x1d8] sm:$0xff]
    %v3551 = vld [vmem:[#allocation6 + $0x1f8] sm:$0xff]
    %v3552 = vld [vmem:[#allocation6 + $0x218] sm:$0xff]
    %v3553 = vld [vmem:[#allocation6 + $0x238] sm:$0xff]
    %v3554 = vld [vmem:[#allocation6 + $0x258] sm:$0xff]
    %v3555 = vld [vmem:[#allocation6 + $0x278] sm:$0xff]
    %v3556 = vld [vmem:[#allocation6 + $0x298] sm:$0xff]
    %v3557 = vld [vmem:[#allocation6 + $0x2b8] sm:$0xff]
    %v3558 = vld [vmem:[#allocation6 + $0x2d8] sm:$0xff]
    %v3559 = vld [vmem:[#allocation6 + $0x2f8] sm:$0xff]
    %v3560 = vld [vmem:[#allocation6 + $0x318] sm:$0xff]
    %v3561 = vld [vmem:[#allocation6 + $0x338] sm:$0xff]
    %v3562 = vld [vmem:[#allocation6 + $0x358] sm:$0xff]
    %v3563 = vld [vmem:[#allocation6 + $0x378] sm:$0xff]
    %v3564 = vld [vmem:[#allocation6 + $0x398] sm:$0xff]
    %v3565 = vld [vmem:[#allocation6 + $0x3b8] sm:$0xff]
    %v3566 = vld [vmem:[#allocation6 + $0x3d8] sm:$0xff]
    %v3567 = vld [vmem:[#allocation6 + $0x3f8] sm:$0xff]
    %v3568 = vld [vmem:[#allocation6 + $0x418] sm:$0xff]
    %v3569 = vld [vmem:[#allocation6 + $0x438] sm:$0xff]
    %v3570 = vld [vmem:[#allocation6 + $0x458] sm:$0xff]
    %v3571 = vld [vmem:[#allocation6 + $0x478] sm:$0xff]
    %v3572 = vld [vmem:[#allocation6 + $0x498] sm:$0xff]
    %v3573 = vld [vmem:[#allocation6 + $0x4b8] sm:$0xff]
    %v3574 = vld [vmem:[#allocation6 + $0x4d8] sm:$0xff]
    %v3575 = vld [vmem:[#allocation6 + $0x4f8] sm:$0xff]
    %v3576 = vld [vmem:[#allocation6 + $0x518] sm:$0xff]
    %v3577 = vld [vmem:[#allocation6 + $0x538] sm:$0xff]
    %v3578 = vld [vmem:[#allocation6 + $0x558] sm:$0xff]
    %v3579 = vld [vmem:[#allocation6 + $0x578] sm:$0xff]
    %v3580 = vld [vmem:[#allocation6 + $0x598] sm:$0xff]
    %v3581 = vld [vmem:[#allocation6 + $0x5b8] sm:$0xff]
    %v3582 = vld [vmem:[#allocation6 + $0x5d8] sm:$0xff]
    %v3583 = vld [vmem:[#allocation6 + $0x5f8] sm:$0xff]
    %v3584 = vld [vmem:[#allocation6 + $0x618] sm:$0xff]
    %v3585 = vld [vmem:[#allocation6 + $0x638] sm:$0xff]
    %v3586 = vld [vmem:[#allocation6 + $0x658] sm:$0xff]
    %v3587 = vld [vmem:[#allocation6 + $0x678] sm:$0xff]
    %v3588 = vld [vmem:[#allocation6 + $0x698] sm:$0xff]
    %v3589 = vld [vmem:[#allocation6 + $0x6b8] sm:$0xff]
    %v3590 = vld [vmem:[#allocation6 + $0x6d8] sm:$0xff]
    %v3591 = vld [vmem:[#allocation6 + $0x6f8] sm:$0xff]
    %v3592 = vld [vmem:[#allocation6 + $0x718] sm:$0xff]
    %v3593 = vld [vmem:[#allocation6 + $0x738] sm:$0xff]
    %v3594 = vld [vmem:[#allocation6 + $0x758] sm:$0xff]
    %v3595 = vld [vmem:[#allocation6 + $0x778] sm:$0xff]
    %v3596 = vld [vmem:[#allocation6 + $0x798] sm:$0xff]
    %v3597 = vld [vmem:[#allocation6 + $0x7b8] sm:$0xff]
    %v3598 = vld [vmem:[#allocation6 + $0x7d8] sm:$0xff]
    %v3599 = vld [vmem:[#allocation6 + $0x7f8] sm:$0xff]
    %v3600 = vld [vmem:[#allocation6 + $0x818] sm:$0xff]
    %v3601 = vld [vmem:[#allocation6 + $0x838] sm:$0xff]
    %v3602 = vld [vmem:[#allocation6 + $0x858] sm:$0xff]
    %v3603 = vld [vmem:[#allocation6 + $0x878] sm:$0xff]
    %v3604 = vld [vmem:[#allocation6 + $0x898] sm:$0xff]
    %v3605 = vld [vmem:[#allocation6 + $0x8b8] sm:$0xff]
    %v3606 = vld [vmem:[#allocation6 + $0x8d8] sm:$0xff]
    %v3607 = vld [vmem:[#allocation6 + $0x8f8] sm:$0xff]
    %v3608 = vld [vmem:[#allocation6 + $0x918] sm:$0xff]
    %v3609 = vld [vmem:[#allocation6 + $0x938] sm:$0xff]
    %v3610 = vld [vmem:[#allocation6 + $0x958] sm:$0xff]
    %v3611 = vld [vmem:[#allocation6 + $0x978] sm:$0xff]
    %v3612 = vld [vmem:[#allocation6 + $0x998] sm:$0xff]
    %v3613 = vld [vmem:[#allocation6 + $0x9b8] sm:$0xff]
    %v3614 = vld [vmem:[#allocation6 + $0x9d8] sm:$0xff]
    %v3615 = vld [vmem:[#allocation6 + $0x9f8] sm:$0xff]
    %v3616 = vld [vmem:[#allocation6 + $0xa18] sm:$0xff]
    %v3617 = vld [vmem:[#allocation6 + $0xa38] sm:$0xff]
    %v3618 = vld [vmem:[#allocation6 + $0xa58] sm:$0xff]
    %v3619 = vld [vmem:[#allocation6 + $0xa78] sm:$0xff]
    %v3620 = vld [vmem:[#allocation6 + $0xa98] sm:$0xff]
    %v3621 = vld [vmem:[#allocation6 + $0xab8] sm:$0xff]
    %v3622 = vld [vmem:[#allocation6 + $0xad8] sm:$0xff]
    %v3623 = vld [vmem:[#allocation6 + $0xaf8] sm:$0xff]
    %v3624 = vld [vmem:[#allocation6 + $0xb18] sm:$0xff]
    %v3625 = vld [vmem:[#allocation6 + $0xb38] sm:$0xff]
    %v3626 = vld [vmem:[#allocation6 + $0xb58] sm:$0xff]
    %v3627 = vld [vmem:[#allocation6 + $0xb78] sm:$0xff]
    %v3628 = vld [vmem:[#allocation6 + $0xb98] sm:$0xff]
    %v3629 = vld [vmem:[#allocation6 + $0xbb8] sm:$0xff]
    %v3630 = vld [vmem:[#allocation6 + $0xbd8] sm:$0xff]
    %v3631 = vld [vmem:[#allocation6 + $0xbf8] sm:$0xff]
    %v3632 = vld [vmem:[#allocation6 + $0xc18] sm:$0xff]
    %v3633 = vld [vmem:[#allocation6 + $0xc38] sm:$0xff]
    %v3634 = vld [vmem:[#allocation6 + $0xc58] sm:$0xff]
    %v3635 = vld [vmem:[#allocation6 + $0xc78] sm:$0xff]
    %v3636 = vld [vmem:[#allocation6 + $0xc98] sm:$0xff]
    %v3637 = vld [vmem:[#allocation6 + $0xcb8] sm:$0xff]
    %v3638 = vld [vmem:[#allocation6 + $0xcd8] sm:$0xff]
    %v3639 = vld [vmem:[#allocation6 + $0xcf8] sm:$0xff]
    %v3640 = vld [vmem:[#allocation6 + $0xd18] sm:$0xff]
    %v3641 = vld [vmem:[#allocation6 + $0xd38] sm:$0xff]
    %v3642 = vld [vmem:[#allocation6 + $0xd58] sm:$0xff]
    %v3643 = vld [vmem:[#allocation6 + $0xd78] sm:$0xff]
    %v3644 = vld [vmem:[#allocation6 + $0xd98] sm:$0xff]
    %v3645 = vld [vmem:[#allocation6 + $0xdb8] sm:$0xff]
    %v3646 = vld [vmem:[#allocation6 + $0xdd8] sm:$0xff]
    %v3647 = vld [vmem:[#allocation6 + $0xdf8] sm:$0xff]
    %v3648 = vld [vmem:[#allocation6 + $0xe18] sm:$0xff]
    %v3649 = vld [vmem:[#allocation6 + $0xe38] sm:$0xff]
    %v3650 = vld [vmem:[#allocation6 + $0xe58] sm:$0xff]
    %v3651 = vld [vmem:[#allocation6 + $0xe78] sm:$0xff]
    %v3652 = vld [vmem:[#allocation6 + $0xe98] sm:$0xff]
    %v3653 = vld [vmem:[#allocation6 + $0xeb8] sm:$0xff]
    %v3654 = vld [vmem:[#allocation6 + $0xed8] sm:$0xff]
    %v3655 = vld [vmem:[#allocation6 + $0xef8] sm:$0xff]
    %v3656 = vld [vmem:[#allocation6 + $0xf18] sm:$0xff]
    %v3657 = vld [vmem:[#allocation6 + $0xf38] sm:$0xff]
    %v3658 = vld [vmem:[#allocation6 + $0xf58] sm:$0xff]
    %v3659 = vld [vmem:[#allocation6 + $0xf78] sm:$0xff]
    %v3660 = vld [vmem:[#allocation6 + $0xf98] sm:$0xff]
    %v3661 = vld [vmem:[#allocation6 + $0xfb8] sm:$0xff]
    %v3662 = vld [vmem:[#allocation6 + $0xfd8] sm:$0xff]
    %v3663 = vld [vmem:[#allocation6 + $0xff8] sm:$0xff]
    %v3664 = vld [vmem:[#allocation8 + $0x6] sm:$0x3]
    %v3666 = vlaneseq
    %v3667 = vshrl.u32 %v3666, 7
    %v3668 = vsub.s32 0, %v3667
    %v3669 = vrot.slane %v3664, %v3668
    %v3670 = vlaneseq
    %v3671 = vshrl.u32 %v3670, 7
    %v3672 = vsub.s32 1, %v3671
    %v3673 = vrot.slane %v3664, %v3672
    %v3804 = vunpack.c.l.b16 %v3536
    %v3805 = vunpack.c.h.b16 %v3536
    %v3806 = vunpack.c.l.b16 %v3537
    %v3807 = vunpack.c.h.b16 %v3537
    %v3808 = vunpack.c.l.b16 %v3538
    %v3809 = vunpack.c.h.b16 %v3538
    %v3810 = vunpack.c.l.b16 %v3539
    %v3811 = vunpack.c.h.b16 %v3539
    %v3812 = vunpack.c.l.b16 %v3540
    %v3813 = vunpack.c.h.b16 %v3540
    %v3814 = vunpack.c.l.b16 %v3541
    %v3815 = vunpack.c.h.b16 %v3541
    %v3816 = vunpack.c.l.b16 %v3542
    %v3817 = vunpack.c.h.b16 %v3542
    %v3818 = vunpack.c.l.b16 %v3543
    %v3819 = vunpack.c.h.b16 %v3543
    %v3820 = vunpack.c.l.b16 %v3544
    %v3821 = vunpack.c.h.b16 %v3544
    %v3822 = vunpack.c.l.b16 %v3545
    %v3823 = vunpack.c.h.b16 %v3545
    %v3824 = vunpack.c.l.b16 %v3546
    %v3825 = vunpack.c.h.b16 %v3546
    %v3826 = vunpack.c.l.b16 %v3547
    %v3827 = vunpack.c.h.b16 %v3547
    %v3828 = vunpack.c.l.b16 %v3548
    %v3829 = vunpack.c.h.b16 %v3548
    %v3830 = vunpack.c.l.b16 %v3549
    %v3831 = vunpack.c.h.b16 %v3549
    %v3832 = vunpack.c.l.b16 %v3550
    %v3833 = vunpack.c.h.b16 %v3550
    %v3834 = vunpack.c.l.b16 %v3551
    %v3835 = vunpack.c.h.b16 %v3551
    %v3836 = vunpack.c.l.b16 %v3552
    %v3837 = vunpack.c.h.b16 %v3552
    %v3838 = vunpack.c.l.b16 %v3553
    %v3839 = vunpack.c.h.b16 %v3553
    %v3840 = vunpack.c.l.b16 %v3554
    %v3841 = vunpack.c.h.b16 %v3554
    %v3842 = vunpack.c.l.b16 %v3555
    %v3843 = vunpack.c.h.b16 %v3555
    %v3844 = vunpack.c.l.b16 %v3556
    %v3845 = vunpack.c.h.b16 %v3556
    %v3846 = vunpack.c.l.b16 %v3557
    %v3847 = vunpack.c.h.b16 %v3557
    %v3848 = vunpack.c.l.b16 %v3558
    %v3849 = vunpack.c.h.b16 %v3558
    %v3850 = vunpack.c.l.b16 %v3559
    %v3851 = vunpack.c.h.b16 %v3559
    %v3852 = vunpack.c.l.b16 %v3560
    %v3853 = vunpack.c.h.b16 %v3560
    %v3854 = vunpack.c.l.b16 %v3561
    %v3855 = vunpack.c.h.b16 %v3561
    %v3856 = vunpack.c.l.b16 %v3562
    %v3857 = vunpack.c.h.b16 %v3562
    %v3858 = vunpack.c.l.b16 %v3563
    %v3859 = vunpack.c.h.b16 %v3563
    %v3860 = vunpack.c.l.b16 %v3564
    %v3861 = vunpack.c.h.b16 %v3564
    %v3862 = vunpack.c.l.b16 %v3565
    %v3863 = vunpack.c.h.b16 %v3565
    %v3864 = vunpack.c.l.b16 %v3566
    %v3865 = vunpack.c.h.b16 %v3566
    %v3866 = vunpack.c.l.b16 %v3567
    %v3867 = vunpack.c.h.b16 %v3567
    %v3868 = vunpack.c.l.b16 %v3568
    %v3869 = vunpack.c.h.b16 %v3568
    %v3870 = vunpack.c.l.b16 %v3569
    %v3871 = vunpack.c.h.b16 %v3569
    %v3872 = vunpack.c.l.b16 %v3570
    %v3873 = vunpack.c.h.b16 %v3570
    %v3874 = vunpack.c.l.b16 %v3571
    %v3875 = vunpack.c.h.b16 %v3571
    %v3876 = vunpack.c.l.b16 %v3572
    %v3877 = vunpack.c.h.b16 %v3572
    %v3878 = vunpack.c.l.b16 %v3573
    %v3879 = vunpack.c.h.b16 %v3573
    %v3880 = vunpack.c.l.b16 %v3574
    %v3881 = vunpack.c.h.b16 %v3574
    %v3882 = vunpack.c.l.b16 %v3575
    %v3883 = vunpack.c.h.b16 %v3575
    %v3884 = vunpack.c.l.b16 %v3576
    %v3885 = vunpack.c.h.b16 %v3576
    %v3886 = vunpack.c.l.b16 %v3577
    %v3887 = vunpack.c.h.b16 %v3577
    %v3888 = vunpack.c.l.b16 %v3578
    %v3889 = vunpack.c.h.b16 %v3578
    %v3890 = vunpack.c.l.b16 %v3579
    %v3891 = vunpack.c.h.b16 %v3579
    %v3892 = vunpack.c.l.b16 %v3580
    %v3893 = vunpack.c.h.b16 %v3580
    %v3894 = vunpack.c.l.b16 %v3581
    %v3895 = vunpack.c.h.b16 %v3581
    %v3896 = vunpack.c.l.b16 %v3582
    %v3897 = vunpack.c.h.b16 %v3582
    %v3898 = vunpack.c.l.b16 %v3583
    %v3899 = vunpack.c.h.b16 %v3583
    %v3900 = vunpack.c.l.b16 %v3584
    %v3901 = vunpack.c.h.b16 %v3584
    %v3902 = vunpack.c.l.b16 %v3585
    %v3903 = vunpack.c.h.b16 %v3585
    %v3904 = vunpack.c.l.b16 %v3586
    %v3905 = vunpack.c.h.b16 %v3586
    %v3906 = vunpack.c.l.b16 %v3587
    %v3907 = vunpack.c.h.b16 %v3587
    %v3908 = vunpack.c.l.b16 %v3588
    %v3909 = vunpack.c.h.b16 %v3588
    %v3910 = vunpack.c.l.b16 %v3589
    %v3911 = vunpack.c.h.b16 %v3589
    %v3912 = vunpack.c.l.b16 %v3590
    %v3913 = vunpack.c.h.b16 %v3590
    %v3914 = vunpack.c.l.b16 %v3591
    %v3915 = vunpack.c.h.b16 %v3591
    %v3916 = vunpack.c.l.b16 %v3592
    %v3917 = vunpack.c.h.b16 %v3592
    %v3918 = vunpack.c.l.b16 %v3593
    %v3919 = vunpack.c.h.b16 %v3593
    %v3920 = vunpack.c.l.b16 %v3594
    %v3921 = vunpack.c.h.b16 %v3594
    %v3922 = vunpack.c.l.b16 %v3595
    %v3923 = vunpack.c.h.b16 %v3595
    %v3924 = vunpack.c.l.b16 %v3596
    %v3925 = vunpack.c.h.b16 %v3596
    %v3926 = vunpack.c.l.b16 %v3597
    %v3927 = vunpack.c.h.b16 %v3597
    %v3928 = vunpack.c.l.b16 %v3598
    %v3929 = vunpack.c.h.b16 %v3598
    %v3930 = vunpack.c.l.b16 %v3599
    %v3931 = vunpack.c.h.b16 %v3599
    %v3932 = vunpack.c.l.b16 %v3600
    %v3933 = vunpack.c.h.b16 %v3600
    %v3934 = vunpack.c.l.b16 %v3601
    %v3935 = vunpack.c.h.b16 %v3601
    %v3936 = vunpack.c.l.b16 %v3602
    %v3937 = vunpack.c.h.b16 %v3602
    %v3938 = vunpack.c.l.b16 %v3603
    %v3939 = vunpack.c.h.b16 %v3603
    %v3940 = vunpack.c.l.b16 %v3604
    %v3941 = vunpack.c.h.b16 %v3604
    %v3942 = vunpack.c.l.b16 %v3605
    %v3943 = vunpack.c.h.b16 %v3605
    %v3944 = vunpack.c.l.b16 %v3606
    %v3945 = vunpack.c.h.b16 %v3606
    %v3946 = vunpack.c.l.b16 %v3607
    %v3947 = vunpack.c.h.b16 %v3607
    %v3948 = vunpack.c.l.b16 %v3608
    %v3949 = vunpack.c.h.b16 %v3608
    %v3950 = vunpack.c.l.b16 %v3609
    %v3951 = vunpack.c.h.b16 %v3609
    %v3952 = vunpack.c.l.b16 %v3610
    %v3953 = vunpack.c.h.b16 %v3610
    %v3954 = vunpack.c.l.b16 %v3611
    %v3955 = vunpack.c.h.b16 %v3611
    %v3956 = vunpack.c.l.b16 %v3612
    %v3957 = vunpack.c.h.b16 %v3612
    %v3958 = vunpack.c.l.b16 %v3613
    %v3959 = vunpack.c.h.b16 %v3613
    %v3960 = vunpack.c.l.b16 %v3614
    %v3961 = vunpack.c.h.b16 %v3614
    %v3962 = vunpack.c.l.b16 %v3615
    %v3963 = vunpack.c.h.b16 %v3615
    %v3964 = vunpack.c.l.b16 %v3616
    %v3965 = vunpack.c.h.b16 %v3616
    %v3966 = vunpack.c.l.b16 %v3617
    %v3967 = vunpack.c.h.b16 %v3617
    %v3968 = vunpack.c.l.b16 %v3618
    %v3969 = vunpack.c.h.b16 %v3618
    %v3970 = vunpack.c.l.b16 %v3619
    %v3971 = vunpack.c.h.b16 %v3619
    %v3972 = vunpack.c.l.b16 %v3620
    %v3973 = vunpack.c.h.b16 %v3620
    %v3974 = vunpack.c.l.b16 %v3621
    %v3975 = vunpack.c.h.b16 %v3621
    %v3976 = vunpack.c.l.b16 %v3622
    %v3977 = vunpack.c.h.b16 %v3622
    %v3978 = vunpack.c.l.b16 %v3623
    %v3979 = vunpack.c.h.b16 %v3623
    %v3980 = vunpack.c.l.b16 %v3624
    %v3981 = vunpack.c.h.b16 %v3624
    %v3982 = vunpack.c.l.b16 %v3625
    %v3983 = vunpack.c.h.b16 %v3625
    %v3984 = vunpack.c.l.b16 %v3626
    %v3985 = vunpack.c.h.b16 %v3626
    %v3986 = vunpack.c.l.b16 %v3627
    %v3987 = vunpack.c.h.b16 %v3627
    %v3988 = vunpack.c.l.b16 %v3628
    %v3989 = vunpack.c.h.b16 %v3628
    %v3990 = vunpack.c.l.b16 %v3629
    %v3991 = vunpack.c.h.b16 %v3629
    %v3992 = vunpack.c.l.b16 %v3630
    %v3993 = vunpack.c.h.b16 %v3630
    %v3994 = vunpack.c.l.b16 %v3631
    %v3995 = vunpack.c.h.b16 %v3631
    %v3996 = vunpack.c.l.b16 %v3632
    %v3997 = vunpack.c.h.b16 %v3632
    %v3998 = vunpack.c.l.b16 %v3633
    %v3999 = vunpack.c.h.b16 %v3633
    %v4000 = vunpack.c.l.b16 %v3634
    %v4001 = vunpack.c.h.b16 %v3634
    %v4002 = vunpack.c.l.b16 %v3635
    %v4003 = vunpack.c.h.b16 %v3635
    %v4004 = vunpack.c.l.b16 %v3636
    %v4005 = vunpack.c.h.b16 %v3636
    %v4006 = vunpack.c.l.b16 %v3637
    %v4007 = vunpack.c.h.b16 %v3637
    %v4008 = vunpack.c.l.b16 %v3638
    %v4009 = vunpack.c.h.b16 %v3638
    %v4010 = vunpack.c.l.b16 %v3639
    %v4011 = vunpack.c.h.b16 %v3639
    %v4012 = vunpack.c.l.b16 %v3640
    %v4013 = vunpack.c.h.b16 %v3640
    %v4014 = vunpack.c.l.b16 %v3641
    %v4015 = vunpack.c.h.b16 %v3641
    %v4016 = vunpack.c.l.b16 %v3642
    %v4017 = vunpack.c.h.b16 %v3642
    %v4018 = vunpack.c.l.b16 %v3643
    %v4019 = vunpack.c.h.b16 %v3643
    %v4020 = vunpack.c.l.b16 %v3644
    %v4021 = vunpack.c.h.b16 %v3644
    %v4022 = vunpack.c.l.b16 %v3645
    %v4023 = vunpack.c.h.b16 %v3645
    %v4024 = vunpack.c.l.b16 %v3646
    %v4025 = vunpack.c.h.b16 %v3646
    %v4026 = vunpack.c.l.b16 %v3647
    %v4027 = vunpack.c.h.b16 %v3647
    %v4028 = vunpack.c.l.b16 %v3648
    %v4029 = vunpack.c.h.b16 %v3648
    %v4030 = vunpack.c.l.b16 %v3649
    %v4031 = vunpack.c.h.b16 %v3649
    %v4032 = vunpack.c.l.b16 %v3650
    %v4033 = vunpack.c.h.b16 %v3650
    %v4034 = vunpack.c.l.b16 %v3651
    %v4035 = vunpack.c.h.b16 %v3651
    %v4036 = vunpack.c.l.b16 %v3652
    %v4037 = vunpack.c.h.b16 %v3652
    %v4038 = vunpack.c.l.b16 %v3653
    %v4039 = vunpack.c.h.b16 %v3653
    %v4040 = vunpack.c.l.b16 %v3654
    %v4041 = vunpack.c.h.b16 %v3654
    %v4042 = vunpack.c.l.b16 %v3655
    %v4043 = vunpack.c.h.b16 %v3655
    %v4044 = vunpack.c.l.b16 %v3656
    %v4045 = vunpack.c.h.b16 %v3656
    %v4046 = vunpack.c.l.b16 %v3657
    %v4047 = vunpack.c.h.b16 %v3657
    %v4048 = vunpack.c.l.b16 %v3658
    %v4049 = vunpack.c.h.b16 %v3658
    %v4050 = vunpack.c.l.b16 %v3659
    %v4051 = vunpack.c.h.b16 %v3659
    %v4052 = vunpack.c.l.b16 %v3660
    %v4053 = vunpack.c.h.b16 %v3660
    %v4054 = vunpack.c.l.b16 %v3661
    %v4055 = vunpack.c.h.b16 %v3661
    %v4056 = vunpack.c.l.b16 %v3662
    %v4057 = vunpack.c.h.b16 %v3662
    %v4058 = vunpack.c.l.b16 %v3663
    %v4059 = vunpack.c.h.b16 %v3663
    %v4060 = vpack.c.b16 %v3806, %v3804
    %v4061 = vpack.c.b16 %v3807, %v3805
    %v4062 = vpack.c.b16 %v3810, %v3808
    %v4063 = vpack.c.b16 %v3811, %v3809
    %v4064 = vpack.c.b16 %v3814, %v3812
    %v4065 = vpack.c.b16 %v3815, %v3813
    %v4066 = vpack.c.b16 %v3818, %v3816
    %v4067 = vpack.c.b16 %v3819, %v3817
    %v4068 = vpack.c.b16 %v3822, %v3820
    %v4069 = vpack.c.b16 %v3823, %v3821
    %v4070 = vpack.c.b16 %v3826, %v3824
    %v4071 = vpack.c.b16 %v3827, %v3825
    %v4072 = vpack.c.b16 %v3830, %v3828
    %v4073 = vpack.c.b16 %v3831, %v3829
    %v4074 = vpack.c.b16 %v3834, %v3832
    %v4075 = vpack.c.b16 %v3835, %v3833
    %v4076 = vpack.c.b16 %v3838, %v3836
    %v4077 = vpack.c.b16 %v3839, %v3837
    %v4078 = vpack.c.b16 %v3842, %v3840
    %v4079 = vpack.c.b16 %v3843, %v3841
    %v4080 = vpack.c.b16 %v3846, %v3844
    %v4081 = vpack.c.b16 %v3847, %v3845
    %v4082 = vpack.c.b16 %v3850, %v3848
    %v4083 = vpack.c.b16 %v3851, %v3849
    %v4084 = vpack.c.b16 %v3854, %v3852
    %v4085 = vpack.c.b16 %v3855, %v3853
    %v4086 = vpack.c.b16 %v3858, %v3856
    %v4087 = vpack.c.b16 %v3859, %v3857
    %v4088 = vpack.c.b16 %v3862, %v3860
    %v4089 = vpack.c.b16 %v3863, %v3861
    %v4090 = vpack.c.b16 %v3866, %v3864
    %v4091 = vpack.c.b16 %v3867, %v3865
    %v4092 = vpack.c.b16 %v3870, %v3868
    %v4093 = vpack.c.b16 %v3871, %v3869
    %v4094 = vpack.c.b16 %v3874, %v3872
    %v4095 = vpack.c.b16 %v3875, %v3873
    %v4096 = vpack.c.b16 %v3878, %v3876
    %v4097 = vpack.c.b16 %v3879, %v3877
    %v4098 = vpack.c.b16 %v3882, %v3880
    %v4099 = vpack.c.b16 %v3883, %v3881
    %v4100 = vpack.c.b16 %v3886, %v3884
    %v4101 = vpack.c.b16 %v3887, %v3885
    %v4102 = vpack.c.b16 %v3890, %v3888
    %v4103 = vpack.c.b16 %v3891, %v3889
    %v4104 = vpack.c.b16 %v3894, %v3892
    %v4105 = vpack.c.b16 %v3895, %v3893
    %v4106 = vpack.c.b16 %v3898, %v3896
    %v4107 = vpack.c.b16 %v3899, %v3897
    %v4108 = vpack.c.b16 %v3902, %v3900
    %v4109 = vpack.c.b16 %v3903, %v3901
    %v4110 = vpack.c.b16 %v3906, %v3904
    %v4111 = vpack.c.b16 %v3907, %v3905
    %v4112 = vpack.c.b16 %v3910, %v3908
    %v4113 = vpack.c.b16 %v3911, %v3909
    %v4114 = vpack.c.b16 %v3914, %v3912
    %v4115 = vpack.c.b16 %v3915, %v3913
    %v4116 = vpack.c.b16 %v3918, %v3916
    %v4117 = vpack.c.b16 %v3919, %v3917
    %v4118 = vpack.c.b16 %v3922, %v3920
    %v4119 = vpack.c.b16 %v3923, %v3921
    %v4120 = vpack.c.b16 %v3926, %v3924
    %v4121 = vpack.c.b16 %v3927, %v3925
    %v4122 = vpack.c.b16 %v3930, %v3928
    %v4123 = vpack.c.b16 %v3931, %v3929
    %v4124 = vpack.c.b16 %v3934, %v3932
    %v4125 = vpack.c.b16 %v3935, %v3933
    %v4126 = vpack.c.b16 %v3938, %v3936
    %v4127 = vpack.c.b16 %v3939, %v3937
    %v4128 = vpack.c.b16 %v3942, %v3940
    %v4129 = vpack.c.b16 %v3943, %v3941
    %v4130 = vpack.c.b16 %v3946, %v3944
    %v4131 = vpack.c.b16 %v3947, %v3945
    %v4132 = vpack.c.b16 %v3950, %v3948
    %v4133 = vpack.c.b16 %v3951, %v3949
    %v4134 = vpack.c.b16 %v3954, %v3952
    %v4135 = vpack.c.b16 %v3955, %v3953
    %v4136 = vpack.c.b16 %v3958, %v3956
    %v4137 = vpack.c.b16 %v3959, %v3957
    %v4138 = vpack.c.b16 %v3962, %v3960
    %v4139 = vpack.c.b16 %v3963, %v3961
    %v4140 = vpack.c.b16 %v3966, %v3964
    %v4141 = vpack.c.b16 %v3967, %v3965
    %v4142 = vpack.c.b16 %v3970, %v3968
    %v4143 = vpack.c.b16 %v3971, %v3969
    %v4144 = vpack.c.b16 %v3974, %v3972
    %v4145 = vpack.c.b16 %v3975, %v3973
    %v4146 = vpack.c.b16 %v3978, %v3976
    %v4147 = vpack.c.b16 %v3979, %v3977
    %v4148 = vpack.c.b16 %v3982, %v3980
    %v4149 = vpack.c.b16 %v3983, %v3981
    %v4150 = vpack.c.b16 %v3986, %v3984
    %v4151 = vpack.c.b16 %v3987, %v3985
    %v4152 = vpack.c.b16 %v3990, %v3988
    %v4153 = vpack.c.b16 %v3991, %v3989
    %v4154 = vpack.c.b16 %v3994, %v3992
    %v4155 = vpack.c.b16 %v3995, %v3993
    %v4156 = vpack.c.b16 %v3998, %v3996
    %v4157 = vpack.c.b16 %v3999, %v3997
    %v4158 = vpack.c.b16 %v4002, %v4000
    %v4159 = vpack.c.b16 %v4003, %v4001
    %v4160 = vpack.c.b16 %v4006, %v4004
    %v4161 = vpack.c.b16 %v4007, %v4005
    %v4162 = vpack.c.b16 %v4010, %v4008
    %v4163 = vpack.c.b16 %v4011, %v4009
    %v4164 = vpack.c.b16 %v4014, %v4012
    %v4165 = vpack.c.b16 %v4015, %v4013
    %v4166 = vpack.c.b16 %v4018, %v4016
    %v4167 = vpack.c.b16 %v4019, %v4017
    %v4168 = vpack.c.b16 %v4022, %v4020
    %v4169 = vpack.c.b16 %v4023, %v4021
    %v4170 = vpack.c.b16 %v4026, %v4024
    %v4171 = vpack.c.b16 %v4027, %v4025
    %v4172 = vpack.c.b16 %v4030, %v4028
    %v4173 = vpack.c.b16 %v4031, %v4029
    %v4174 = vpack.c.b16 %v4034, %v4032
    %v4175 = vpack.c.b16 %v4035, %v4033
    %v4176 = vpack.c.b16 %v4038, %v4036
    %v4177 = vpack.c.b16 %v4039, %v4037
    %v4178 = vpack.c.b16 %v4042, %v4040
    %v4179 = vpack.c.b16 %v4043, %v4041
    %v4180 = vpack.c.b16 %v4046, %v4044
    %v4181 = vpack.c.b16 %v4047, %v4045
    %v4182 = vpack.c.b16 %v4050, %v4048
    %v4183 = vpack.c.b16 %v4051, %v4049
    %v4184 = vpack.c.b16 %v4054, %v4052
    %v4185 = vpack.c.b16 %v4055, %v4053
    %v4186 = vpack.c.b16 %v4058, %v4056
    %v4187 = vpack.c.b16 %v4059, %v4057
    %4316 = vmatprep.subr.bf16.mxu0 %v4061
    %4317 = vmatpush1.bf16.msra.mxu0 %v4060
    %4318 = vmatprep.subr.bf16.mxu0 %v4063
    %4319 = vmatpush1.bf16.msra.mxu0 %v4062
    %4320 = vmatprep.subr.bf16.mxu0 %v4065
    %4321 = vmatpush1.bf16.msra.mxu0 %v4064
    %4322 = vmatprep.subr.bf16.mxu0 %v4067
    %4323 = vmatpush1.bf16.msra.mxu0 %v4066
    %4324 = vmatprep.subr.bf16.mxu0 %v4069
    %4325 = vmatpush1.bf16.msra.mxu0 %v4068
    %4326 = vmatprep.subr.bf16.mxu0 %v4071
    %4327 = vmatpush1.bf16.msra.mxu0 %v4070
    %4328 = vmatprep.subr.bf16.mxu0 %v4073
    %4329 = vmatpush1.bf16.msra.mxu0 %v4072
    %4330 = vmatprep.subr.bf16.mxu0 %v4075
    %4331 = vmatpush1.bf16.msra.mxu0 %v4074
    %4332 = vmatprep.subr.bf16.mxu0 %v4077
    %4333 = vmatpush1.bf16.msra.mxu0 %v4076
    %4334 = vmatprep.subr.bf16.mxu0 %v4079
    %4335 = vmatpush1.bf16.msra.mxu0 %v4078
    %4336 = vmatprep.subr.bf16.mxu0 %v4081
    %4337 = vmatpush1.bf16.msra.mxu0 %v4080
    %4338 = vmatprep.subr.bf16.mxu0 %v4083
    %4339 = vmatpush1.bf16.msra.mxu0 %v4082
    %4340 = vmatprep.subr.bf16.mxu0 %v4085
    %4341 = vmatpush1.bf16.msra.mxu0 %v4084
    %4342 = vmatprep.subr.bf16.mxu0 %v4087
    %4343 = vmatpush1.bf16.msra.mxu0 %v4086
    %4344 = vmatprep.subr.bf16.mxu0 %v4089
    %4345 = vmatpush1.bf16.msra.mxu0 %v4088
    %4346 = vmatprep.subr.bf16.mxu0 %v4091
    %4347 = vmatpush1.bf16.msra.mxu0 %v4090
    %4348 = vmatprep.mubr.bf16.mxu0 %v278
    %4349 = vmatmul.mubr.bf16.gmra.mrb[0].mxu0 %v277
    %v4350 = vpop.f32.mrb[0].mxu0
    %v4351 = vadd.f32 %v3669, %v4350
    %v4352 = vpop.f32.mrb[0].mxu0
    %v4353 = vadd.f32 %v3673, %v4352
    %v4354 = vpop.f32.mrb[0].mxu0
    %v4355 = vadd.f32 %v3669, %v4354
    %v4356 = vpop.f32.mrb[0].mxu0
    %v4357 = vadd.f32 %v3673, %v4356
    %4358 = vdwg.mxu0
    %4359 = vmatprep.subr.bf16.mxu0 %v4093
    %4360 = vmatpush1.bf16.msra.mxu0 %v4092
    %4361 = vmatprep.subr.bf16.mxu0 %v4095
    %4362 = vmatpush1.bf16.msra.mxu0 %v4094
    %4363 = vmatprep.subr.bf16.mxu0 %v4097
    %4364 = vmatpush1.bf16.msra.mxu0 %v4096
    %4365 = vmatprep.subr.bf16.mxu0 %v4099
    %4366 = vmatpush1.bf16.msra.mxu0 %v4098
    %4367 = vmatprep.subr.bf16.mxu0 %v4101
    %4368 = vmatpush1.bf16.msra.mxu0 %v4100
    %4369 = vmatprep.subr.bf16.mxu0 %v4103
    %4370 = vmatpush1.bf16.msra.mxu0 %v4102
    %4371 = vmatprep.subr.bf16.mxu0 %v4105
    %4372 = vmatpush1.bf16.msra.mxu0 %v4104
    %4373 = vmatprep.subr.bf16.mxu0 %v4107
    %4374 = vmatpush1.bf16.msra.mxu0 %v4106
    %4375 = vmatprep.subr.bf16.mxu0 %v4109
    %4376 = vmatpush1.bf16.msra.mxu0 %v4108
    %4377 = vmatprep.subr.bf16.mxu0 %v4111
    %4378 = vmatpush1.bf16.msra.mxu0 %v4110
    %4379 = vmatprep.subr.bf16.mxu0 %v4113
    %4380 = vmatpush1.bf16.msra.mxu0 %v4112
    %4381 = vmatprep.subr.bf16.mxu0 %v4115
    %4382 = vmatpush1.bf16.msra.mxu0 %v4114
    %4383 = vmatprep.subr.bf16.mxu0 %v4117
    %4384 = vmatpush1.bf16.msra.mxu0 %v4116
    %4385 = vmatprep.subr.bf16.mxu0 %v4119
    %4386 = vmatpush1.bf16.msra.mxu0 %v4118
    %4387 = vmatprep.subr.bf16.mxu0 %v4121
    %4388 = vmatpush1.bf16.msra.mxu0 %v4120
    %4389 = vmatprep.subr.bf16.mxu0 %v4123
    %4390 = vmatpush1.bf16.msra.mxu0 %v4122
    %4391 = vmatprep.mubr.bf16.mxu0 %v280
    %4392 = vmatmul.mubr.bf16.gmra.mrb[0].mxu0 %v279
    %v4393 = vpop.f32.mrb[0].mxu0
    %v4394 = vadd.f32 %v4351, %v4393
    %v4395 = vpop.f32.mrb[0].mxu0
    %v4396 = vadd.f32 %v4353, %v4395
    %v4397 = vpop.f32.mrb[0].mxu0
    %v4398 = vadd.f32 %v4355, %v4397
    %v4399 = vpop.f32.mrb[0].mxu0
    %v4400 = vadd.f32 %v4357, %v4399
    %4401 = vdwg.mxu0
    %4402 = vmatprep.subr.bf16.mxu0 %v4125
    %4403 = vmatpush1.bf16.msra.mxu0 %v4124
    %4404 = vmatprep.subr.bf16.mxu0 %v4127
    %4405 = vmatpush1.bf16.msra.mxu0 %v4126
    %4406 = vmatprep.subr.bf16.mxu0 %v4129
    %4407 = vmatpush1.bf16.msra.mxu0 %v4128
    %4408 = vmatprep.subr.bf16.mxu0 %v4131
    %4409 = vmatpush1.bf16.msra.mxu0 %v4130
    %4410 = vmatprep.subr.bf16.mxu0 %v4133
    %4411 = vmatpush1.bf16.msra.mxu0 %v4132
    %4412 = vmatprep.subr.bf16.mxu0 %v4135
    %4413 = vmatpush1.bf16.msra.mxu0 %v4134
    %4414 = vmatprep.subr.bf16.mxu0 %v4137
    %4415 = vmatpush1.bf16.msra.mxu0 %v4136
    %4416 = vmatprep.subr.bf16.mxu0 %v4139
    %4417 = vmatpush1.bf16.msra.mxu0 %v4138
    %4418 = vmatprep.subr.bf16.mxu0 %v4141
    %4419 = vmatpush1.bf16.msra.mxu0 %v4140
    %4420 = vmatprep.subr.bf16.mxu0 %v4143
    %4421 = vmatpush1.bf16.msra.mxu0 %v4142
    %4422 = vmatprep.subr.bf16.mxu0 %v4145
    %4423 = vmatpush1.bf16.msra.mxu0 %v4144
    %4424 = vmatprep.subr.bf16.mxu0 %v4147
    %4425 = vmatpush1.bf16.msra.mxu0 %v4146
    %4426 = vmatprep.subr.bf16.mxu0 %v4149
    %4427 = vmatpush1.bf16.msra.mxu0 %v4148
    %4428 = vmatprep.subr.bf16.mxu0 %v4151
    %4429 = vmatpush1.bf16.msra.mxu0 %v4150
    %4430 = vmatprep.subr.bf16.mxu0 %v4153
    %4431 = vmatpush1.bf16.msra.mxu0 %v4152
    %4432 = vmatprep.subr.bf16.mxu0 %v4155
    %4433 = vmatpush1.bf16.msra.mxu0 %v4154
    %4434 = vmatprep.mubr.bf16.mxu0 %v282
    %4435 = vmatmul.mubr.bf16.gmra.mrb[0].mxu0 %v281
    %v4436 = vpop.f32.mrb[0].mxu0
    %v4437 = vadd.f32 %v4394, %v4436
    %v4438 = vpop.f32.mrb[0].mxu0
    %v4439 = vadd.f32 %v4396, %v4438
    %v4440 = vpop.f32.mrb[0].mxu0
    %v4441 = vadd.f32 %v4398, %v4440
    %v4442 = vpop.f32.mrb[0].mxu0
    %v4443 = vadd.f32 %v4400, %v4442
    %4444 = vdwg.mxu0
    %4445 = vmatprep.subr.bf16.mxu0 %v4157
    %4446 = vmatpush1.bf16.msra.mxu0 %v4156
    %4447 = vmatprep.subr.bf16.mxu0 %v4159
    %4448 = vmatpush1.bf16.msra.mxu0 %v4158
    %4449 = vmatprep.subr.bf16.mxu0 %v4161
    %4450 = vmatpush1.bf16.msra.mxu0 %v4160
    %4451 = vmatprep.subr.bf16.mxu0 %v4163
    %4452 = vmatpush1.bf16.msra.mxu0 %v4162
    %4453 = vmatprep.subr.bf16.mxu0 %v4165
    %4454 = vmatpush1.bf16.msra.mxu0 %v4164
    %4455 = vmatprep.subr.bf16.mxu0 %v4167
    %4456 = vmatpush1.bf16.msra.mxu0 %v4166
    %4457 = vmatprep.subr.bf16.mxu0 %v4169
    %4458 = vmatpush1.bf16.msra.mxu0 %v4168
    %4459 = vmatprep.subr.bf16.mxu0 %v4171
    %4460 = vmatpush1.bf16.msra.mxu0 %v4170
    %4461 = vmatprep.subr.bf16.mxu0 %v4173
    %4462 = vmatpush1.bf16.msra.mxu0 %v4172
    %4463 = vmatprep.subr.bf16.mxu0 %v4175
    %4464 = vmatpush1.bf16.msra.mxu0 %v4174
    %4465 = vmatprep.subr.bf16.mxu0 %v4177
    %4466 = vmatpush1.bf16.msra.mxu0 %v4176
    %4467 = vmatprep.subr.bf16.mxu0 %v4179
    %4468 = vmatpush1.bf16.msra.mxu0 %v4178
    %4469 = vmatprep.subr.bf16.mxu0 %v4181
    %4470 = vmatpush1.bf16.msra.mxu0 %v4180
    %4471 = vmatprep.subr.bf16.mxu0 %v4183
    %4472 = vmatpush1.bf16.msra.mxu0 %v4182
    %4473 = vmatprep.subr.bf16.mxu0 %v4185
    %4474 = vmatpush1.bf16.msra.mxu0 %v4184
    %4475 = vmatprep.subr.bf16.mxu0 %v4187
    %4476 = vmatpush1.bf16.msra.mxu0 %v4186
    %4477 = vmatprep.mubr.bf16.mxu0 %v284
    %4478 = vmatmul.mubr.bf16.gmra.mrb[0].mxu0 %v283
    %v4479 = vpop.f32.mrb[0].mxu0
    %v4480 = vadd.f32 %v4437, %v4479
    %v4481 = vpop.f32.mrb[0].mxu0
    %v4482 = vadd.f32 %v4439, %v4481
    %v4483 = vpop.f32.mrb[0].mxu0
    %v4484 = vadd.f32 %v4441, %v4483
    %v4485 = vpop.f32.mrb[0].mxu0
    %v4486 = vadd.f32 %v4443, %v4485
    %4487 = vdwg.mxu0
    %v4488 = vtanh.pop %v4480
    %v4489 = vtanh.pop %v4482
    %v4490 = vtanh.pop %v4484
    %v4491 = vtanh.pop %v4486
    %v4492 = vpack.c.bf16 %v4490, %v4488
    %v4493 = vpack.c.bf16 %v4491, %v4489
    %v4494 = vld [vmem:[#allocation9 + $0x180] sm:$0xf]
    %v4495 = vld [vmem:[#allocation9 + $0x184] sm:$0xf]
    %v4496 = vld [vmem:[#allocation9 + $0x188] sm:$0xf]
    %v4497 = vld [vmem:[#allocation9 + $0x18c] sm:$0xf]
    %v4498 = vld [vmem:[#allocation9 + $0x190] sm:$0xf]
    %v4499 = vld [vmem:[#allocation9 + $0x194] sm:$0xf]
    %v4500 = vld [vmem:[#allocation9 + $0x198] sm:$0xf]
    %v4501 = vld [vmem:[#allocation9 + $0x19c] sm:$0xf]
    %v4502 = vld [vmem:[#allocation9 + $0x1a0] sm:$0xf]
    %v4503 = vld [vmem:[#allocation9 + $0x1a4] sm:$0xf]
    %v4504 = vld [vmem:[#allocation9 + $0x1a8] sm:$0xf]
    %v4505 = vld [vmem:[#allocation9 + $0x1ac] sm:$0xf]
    %v4506 = vld [vmem:[#allocation9 + $0x1b0] sm:$0xf]
    %v4507 = vld [vmem:[#allocation9 + $0x1b4] sm:$0xf]
    %v4508 = vld [vmem:[#allocation9 + $0x1b8] sm:$0xf]
    %v4509 = vld [vmem:[#allocation9 + $0x1bc] sm:$0xf]
    %v4510 = vld [vmem:[#allocation9 + $0x1c0] sm:$0xf]
    %v4511 = vld [vmem:[#allocation9 + $0x1c4] sm:$0xf]
    %v4512 = vld [vmem:[#allocation9 + $0x1c8] sm:$0xf]
    %v4513 = vld [vmem:[#allocation9 + $0x1cc] sm:$0xf]
    %v4514 = vld [vmem:[#allocation9 + $0x1d0] sm:$0xf]
    %v4515 = vld [vmem:[#allocation9 + $0x1d4] sm:$0xf]
    %v4516 = vld [vmem:[#allocation9 + $0x1d8] sm:$0xf]
    %v4517 = vld [vmem:[#allocation9 + $0x1dc] sm:$0xf]
    %v4518 = vld [vmem:[#allocation9 + $0x1e0] sm:$0xf]
    %v4519 = vld [vmem:[#allocation9 + $0x1e4] sm:$0xf]
    %v4520 = vld [vmem:[#allocation9 + $0x1e8] sm:$0xf]
    %v4521 = vld [vmem:[#allocation9 + $0x1ec] sm:$0xf]
    %v4522 = vld [vmem:[#allocation9 + $0x1f0] sm:$0xf]
    %v4523 = vld [vmem:[#allocation9 + $0x1f4] sm:$0xf]
    %v4524 = vld [vmem:[#allocation9 + $0x1f8] sm:$0xf]
    %v4525 = vld [vmem:[#allocation9 + $0x1fc] sm:$0xf]
    %v4558 = vunpack.c.l.b16 %v4494
    %v4559 = vunpack.c.l.b16 %v4495
    %v4560 = vunpack.c.l.b16 %v4496
    %v4561 = vunpack.c.l.b16 %v4497
    %v4562 = vunpack.c.l.b16 %v4498
    %v4563 = vunpack.c.l.b16 %v4499
    %v4564 = vunpack.c.l.b16 %v4500
    %v4565 = vunpack.c.l.b16 %v4501
    %v4566 = vunpack.c.l.b16 %v4502
    %v4567 = vunpack.c.l.b16 %v4503
    %v4568 = vunpack.c.l.b16 %v4504
    %v4569 = vunpack.c.l.b16 %v4505
    %v4570 = vunpack.c.l.b16 %v4506
    %v4571 = vunpack.c.l.b16 %v4507
    %v4572 = vunpack.c.l.b16 %v4508
    %v4573 = vunpack.c.l.b16 %v4509
    %v4574 = vunpack.c.l.b16 %v4510
    %v4575 = vunpack.c.l.b16 %v4511
    %v4576 = vunpack.c.l.b16 %v4512
    %v4577 = vunpack.c.l.b16 %v4513
    %v4578 = vunpack.c.l.b16 %v4514
    %v4579 = vunpack.c.l.b16 %v4515
    %v4580 = vunpack.c.l.b16 %v4516
    %v4581 = vunpack.c.l.b16 %v4517
    %v4582 = vunpack.c.l.b16 %v4518
    %v4583 = vunpack.c.l.b16 %v4519
    %v4584 = vunpack.c.l.b16 %v4520
    %v4585 = vunpack.c.l.b16 %v4521
    %v4586 = vunpack.c.l.b16 %v4522
    %v4587 = vunpack.c.l.b16 %v4523
    %v4588 = vunpack.c.l.b16 %v4524
    %v4589 = vunpack.c.l.b16 %v4525
    %v4590 = vpack.c.b16 %v4559, %v4558
    %v4591 = vpack.c.b16 %v4561, %v4560
    %v4592 = vpack.c.b16 %v4563, %v4562
    %v4593 = vpack.c.b16 %v4565, %v4564
    %v4594 = vpack.c.b16 %v4567, %v4566
    %v4595 = vpack.c.b16 %v4569, %v4568
    %v4596 = vpack.c.b16 %v4571, %v4570
    %v4597 = vpack.c.b16 %v4573, %v4572
    %v4598 = vpack.c.b16 %v4575, %v4574
    %v4599 = vpack.c.b16 %v4577, %v4576
    %v4600 = vpack.c.b16 %v4579, %v4578
    %v4601 = vpack.c.b16 %v4581, %v4580
    %v4602 = vpack.c.b16 %v4583, %v4582
    %v4603 = vpack.c.b16 %v4585, %v4584
    %v4604 = vpack.c.b16 %v4587, %v4586
    %v4605 = vpack.c.b16 %v4589, %v4588
    %4622 = vmatprep.subr.bf16.mxu0 0
    %4623 = vmatpush1.bf16.msra.mxu0 %v4590
    %4624 = vmatprep.subr.bf16.mxu0 0
    %4625 = vmatpush1.bf16.msra.mxu0 %v4591
    %4626 = vmatprep.subr.bf16.mxu0 0
    %4627 = vmatpush1.bf16.msra.mxu0 %v4592
    %4628 = vmatprep.subr.bf16.mxu0 0
    %4629 = vmatpush1.bf16.msra.mxu0 %v4593
    %4630 = vmatprep.subr.bf16.mxu0 0
    %4631 = vmatpush1.bf16.msra.mxu0 %v4594
    %4632 = vmatprep.subr.bf16.mxu0 0
    %4633 = vmatpush1.bf16.msra.mxu0 %v4595
    %4634 = vmatprep.subr.bf16.mxu0 0
    %4635 = vmatpush1.bf16.msra.mxu0 %v4596
    %4636 = vmatprep.subr.bf16.mxu0 0
    %4637 = vmatpush1.bf16.msra.mxu0 %v4597
    %4638 = vmatprep.subr.bf16.mxu0 0
    %4639 = vmatpush1.bf16.msra.mxu0 %v4598
    %4640 = vmatprep.subr.bf16.mxu0 0
    %4641 = vmatpush1.bf16.msra.mxu0 %v4599
    %4642 = vmatprep.subr.bf16.mxu0 0
    %4643 = vmatpush1.bf16.msra.mxu0 %v4600
    %4644 = vmatprep.subr.bf16.mxu0 0
    %4645 = vmatpush1.bf16.msra.mxu0 %v4601
    %4646 = vmatprep.subr.bf16.mxu0 0
    %4647 = vmatpush1.bf16.msra.mxu0 %v4602
    %4648 = vmatprep.subr.bf16.mxu0 0
    %4649 = vmatpush1.bf16.msra.mxu0 %v4603
    %4650 = vmatprep.subr.bf16.mxu0 0
    %4651 = vmatpush1.bf16.msra.mxu0 %v4604
    %4652 = vmatprep.subr.bf16.mxu0 0
    %4653 = vmatpush1.bf16.msra.mxu0 %v4605
    %4654 = vmatprep.mubr.bf16.mxu0 %v4493
    %4655 = vmatmul.mubr.bf16.gmra.mrb[0].mxu0 %v4492
    %v4656 = vpop.f32.mrb[0].mxu0
    %v4657 = vadd.f32 0.0, %v4656
    %v4658 = vpop.f32.mrb[0].mxu0
    %v4659 = vpop.f32.mrb[0].mxu0
    %v4660 = vadd.f32 0.0, %v4659
    %v4661 = vpop.f32.mrb[0].mxu0
    %4662 = vdwg.mxu0
    %v4663 = vadd.f32 %v3534, %v4657
    %v4664 = vadd.f32 %v3535, %v4660
    %v4665 = vld [vmem:[#allocation11] sm:$0x1]
    %v4667 = vlaneseq
    %v4668 = vshrl.u32 %v4667, 7
    %v4669 = vsub.s32 0, %v4668
    %v4670 = vrot.slane %v4665, %v4669
    %v4672 = vadd.f32 %v4663, %v4670
    %v4673 = vadd.f32 %v4664, %v4670
    %v4674 = vmax.f32 %v4672, 0.0
    %v4675 = vmax.f32 %v4673, 0.0
    %v4676 = vld [vmem:[#allocation12] sm:$0x1]
    %v4678 = vlaneseq
    %v4679 = vshrl.u32 %v4678, 7
    %v4680 = vsub.s32 0, %v4679
    %v4681 = vrot.slane %v4676, %v4680
    %v4683 = vmul.f32 %v4674, %v4681
    %v4684 = vmul.f32 %v4675, %v4681
    %4685 = vadd.xlane.f32.xlu0 %v4683
    %v4686 = vpop.xlane.xlu0 %4685
    %4687 = vadd.xlane.f32.xlu0 %v4684
    %v4688 = vpop.xlane.xlu0 %4687
    %s4689 = sld [smem:[#allocation2]]
    %v4690 = vstv %s4689
    %v4691 = vadd.f32 %v4686, %v4690
    %v4692 = vadd.f32 %v4688, %v4690
    %v4693 = vsub.f32 0.0, %v4691
    %v4694 = vsub.f32 0.0, %v4692
    %v4695 = vmul.f32 %v4693, 1.442695
    %v4696 = vpow.pop %v4695
    %v4697 = vmul.f32 %v4694, 1.442695
    %v4698 = vpow.pop %v4697
    %v4699 = vadd.f32 %v4696, 1.0
    %v4700 = vadd.f32 %v4698, 1.0
    %v4701 = vrcp.pop %v4699
    %v4702 = vmul.f32 1.0, %v4701
    %v4703 = vrcp.pop %v4700
    %v4704 = vmul.f32 1.0, %v4703
    %vm4705 = vcmask 7168
    %4706 = vst.msk [vmem:[#allocation14] sm:$0xff] %vm4705, %v4702
    %4707 = vst.msk [vmem:[#allocation14 + $0x8] sm:$0xff] %vm4705, %v4704
    // Predicated region
    $region54: #{lm_gator_forward.1} parent=1 // pred_check
      _
    $region55: #{lm_gator_forward.1} parent=1 // pred_check_branch
      %4709 = sbr.rel (0) target = $region57
    $region56: #{lm_gator_forward.1} parent=1 // pred_region
      %s4711 = ssub.s32 256, 256
      %4712 = vsyncadd [#allocation5], %s4711
      %s4713 = sshll.u32 [#allocation14], 4
      %s4714 = int_to_ptr.vmem [resolvable:$true] %s4713
      %4719 = dma.vmem_to_hbm [thread:$0]  %s4714, 256, %s7, [#allocation5], 128, 128, 8
    $region57: #{lm_gator_forward.1} parent=1 // pred_fallthru
      _
    // Predicated region
    $region58: #{lm_gator_forward.1} parent=1 // pred_check
      _
    $region59: #{lm_gator_forward.1} parent=1 // pred_check_branch
      %4721 = sbr.rel (0) target = $region61
    $region60: #{lm_gator_forward.1} parent=1 // pred_region
      %4722 = dma.done [#allocation5], 256
    $region61: #{lm_gator_forward.1} parent=1 // pred_fallthru
      _
    %4723 = vsyncpa [#allocation4], 1
    %4724 = vsyncpa [#allocation7], 1
    %4725 = vsyncpa [#allocation10], 1
    %4726 = vsyncpa [#allocation13], 1
    %4727 = vsyncpa [#allocation5], 1

</llo_original>
